<compile_context>
chip_gen: v7x
topology: tpu7x:2x2x1
jax: 0.10.0
libtpu: 0.0.40
codegen_flags: <defaults>
</compile_context>

<pallas_src>
import functools
import math

import jax
import jax.numpy as jnp
from jax import lax
from jax.experimental import pallas as pl
from jax.experimental.pallas import tpu as pltpu

LN2 = math.log(2.0)
_LANE = 128      # lane width (last-dim tiling unit)
_SUBLANE = 8     # sublane width (second-minor tiling unit, f32)


def _ssp(x):
    """SchNet shifted softplus: softplus(x) - ln(2).  Note ssp(0) == 0."""
    return jax.nn.softplus(x) - LN2


def _act(x, cdt):
    """Shifted softplus in the compute dtype (bf16 EUP on v6e/v7x)."""
    if cdt == jnp.float32:
        return _ssp(x)
    return _ssp(x.astype(cdt))


def _round_up(v, m):
    return ((v + m - 1) // m) * m


def _vmem_limit_bytes():
    """Per-generation scoped-VMEM budget with headroom (v7x has only 64 MiB)."""
    try:
        cap = int(pltpu.get_tpu_info().vmem_capacity_bytes)
    except Exception:
        return 32 * 1024 * 1024
    return int(min(cap * 3 // 4, 96 * 1024 * 1024))


# ---------------------------------------------------------------------------
# Kernel 1: node-tiled lin1        x_i = x @ W1 + b1            grid = (ni,)
# ---------------------------------------------------------------------------
def _lin1_kernel(x_ref, w_ref, b_ref, xi_ref, *, cdt):
    x = x_ref[...].astype(cdt)
    xi = jnp.dot(x, w_ref[...], preferred_element_type=jnp.float32) + b_ref[...]
    xi_ref[...] = xi.astype(xi_ref.dtype)


# ---------------------------------------------------------------------------
# Kernel 2 (fused): filter MLP + one-hot scatter-add + lin2/update_net/residual
#   Flattened CSR work-item grid = (T,).  Scalar-prefetched per-work-item
#   metadata selects the (node block, edge block) for each step.
# ---------------------------------------------------------------------------
def _fused_edge_scatter_kernel(
        nb_ref, eb_ref, first_ref, last_ref, valid_ref,        # scalar prefetch
        row_ref, ea_ref, xi_ref, x_ref,                        # streamed inputs
        wm1_ref, bm1_ref, wm2_ref, bm2_ref,
        w2_ref, b2_ref, wu1_ref, bu1_ref, wu2_ref, bu2_ref, wu3_ref, bu3_ref,
        out_ref,                                               # output
        acc_ref,                                               # scratch
        *, cdt, node_tile, edge_tile):
    t = pl.program_id(0)

    @pl.when(first_ref[t] == 1)
    def _():
        acc_ref[...] = jnp.zeros_like(acc_ref)

    @pl.when(valid_ref[t] == 1)
    def _():
        # --- edge filter MLP: ew = ssp(ssp(ea @ Wm1 + bm1) @ Wm2 + bm2) ------
        ea = ea_ref[...].astype(cdt)
        h = jnp.dot(ea, wm1_ref[...], preferred_element_type=jnp.float32) + bm1_ref[...]
        h = _act(h, cdt)
        ew = jnp.dot(h.astype(cdt), wm2_ref[...],
                     preferred_element_type=jnp.float32) + bm2_ref[...]
        ew = _act(ew, cdt)
        # --- gathered source-node features * filter (never leaves VMEM) ------
        xj = (xi_ref[...].astype(jnp.float32)
              * ew.astype(jnp.float32)).astype(cdt)
        # --- (tn, te) one-hot block; rows outside this node tile (incl. the
        #     padded-edge sentinel) never match ------------------------------
        base = nb_ref[t] * node_tile
        row_local = row_ref[...] - base                       # (1, te) int32
        node_iota = lax.broadcasted_iota(jnp.int32, (node_tile, edge_tile), 0)
        onehot = (node_iota == row_local).astype(cdt)
        acc_ref[...] += jnp.dot(onehot, xj, preferred_element_type=jnp.float32)

    @pl.when(last_ref[t] == 1)
    def _():
        agg = acc_ref[...]
        v = jnp.dot(agg.astype(cdt), w2_ref[...],
                    preferred_element_type=jnp.float32) + b2_ref[...]
        v = _act(jnp.dot(v.astype(cdt), wu1_ref[...],
                         preferred_element_type=jnp.float32) + bu1_ref[...], cdt)
        v = _act(jnp.dot(v.astype(cdt), wu2_ref[...],
                         preferred_element_type=jnp.float32) + bu2_ref[...], cdt)
        v = jnp.dot(v.astype(cdt), wu3_ref[...],
                    preferred_element_type=jnp.float32) + bu3_ref[...]
        out_ref[...] = (x_ref[...].astype(jnp.float32) + v).astype(out_ref.dtype)


# ---------------------------------------------------------------------------
# Wrapper
# ---------------------------------------------------------------------------
def schnet_interaction(x, edge_index, edge_attr, params, *,
                       node_tile=256, edge_tile=2048,
                       compute_dtype=jnp.float32):
    N, H = x.shape
    E, G = edge_attr.shape
    F = params["w_lin1"].shape[1]
    cdt = compute_dtype
    itemsz = jnp.dtype(cdt).itemsize

    # ---- lane-dense feature padding and tile-aligned node/edge padding ------
    hp = _round_up(H, _LANE)
    gp = _round_up(G, _LANE)
    fp = _round_up(F, _LANE)

    tn = _round_up(min(node_tile, _round_up(N, _SUBLANE)), _SUBLANE)
    te = _round_up(min(edge_tile, _round_up(E, _LANE)), _LANE)
    n_pad = _round_up(N, tn)
    e_pad = _round_up(E, te)
    ni, ne = n_pad // tn, e_pad // te

    xp = jnp.pad(x, ((0, n_pad - N), (0, hp - H)))

    # ---- CSR-sort edges by destination so each node tile's edges form a
    #      contiguous run of edge tiles ---------------------------------------
    row = edge_index[0].astype(jnp.int32)
    col = edge_index[1].astype(jnp.int32)
    order = jnp.argsort(row)
    row_s, col_s, ea_s = row[order], col[order], edge_attr[order]

    sentinel = jnp.int32(n_pad)                    # padded edges scatter nowhere
    row_p = jnp.concatenate([row_s, jnp.full((e_pad - E,), sentinel, jnp.int32)])
    col_p = jnp.concatenate([col_s, jnp.zeros((e_pad - E,), jnp.int32)])
    eap = jnp.pad(ea_s, ((0, e_pad - E), (0, gp - G))).astype(cdt)

    # ---- per-node-tile edge ranges -> flattened work-item list --------------
    bounds = jnp.arange(ni, dtype=jnp.int32) * tn
    starts = jnp.searchsorted(row_p, bounds, side="left").astype(jnp.int32)
    ends = jnp.searchsorted(row_p, bounds + tn, side="left").astype(jnp.int32)
    first_tile = starts // te
    cnt = jnp.where(ends > starts, (ends - 1) // te - first_tile + 1, 0).astype(jnp.int32)
    w = jnp.maximum(cnt, 1)                        # >=1 work item per node tile
    offsets = jnp.concatenate(
        [jnp.zeros((1,), jnp.int32), jnp.cumsum(w, dtype=jnp.int32)])
    total = offsets[-1]

    T = ni + ne                                    # static upper bound on items
    t_idx = jnp.arange(T, dtype=jnp.int32)
    nb = jnp.clip(jnp.searchsorted(offsets, t_idx, side="right") - 1,
                  0, ni - 1).astype(jnp.int32)
    k = t_idx - offsets[nb]
    t_valid = t_idx < total
    eb = jnp.clip(first_tile[nb] + k, 0, ne - 1).astype(jnp.int32)
    first_f = (t_valid & (k == 0)).astype(jnp.int32)
    last_f = (t_valid & (k == w[nb] - 1)).astype(jnp.int32)
    acc_f = (t_valid & (k < cnt[nb])).astype(jnp.int32)

    # ---- pad weights / biases ------------------------------------------------
    def wpad(w_, r, c):   # weights go to compute dtype (bf16 feeds the MXU)
        return jnp.pad(w_, ((0, r - w_.shape[0]), (0, c - w_.shape[1]))).astype(cdt)

    def bpad(b, c):       # biases stay f32 (added after f32 accumulation)
        return jnp.pad(b, ((0, 0), (0, c - b.shape[1])))

    w_lin1, b_lin1 = wpad(params["w_lin1"], hp, fp), bpad(params["b_lin1"], fp)
    w_m1, b_m1 = wpad(params["w_m1"], gp, fp), bpad(params["b_m1"], fp)
    w_m2, b_m2 = wpad(params["w_m2"], fp, fp), bpad(params["b_m2"], fp)
    w_lin2, b_lin2 = wpad(params["w_lin2"], fp, hp), bpad(params["b_lin2"], hp)
    w_u1, b_u1 = wpad(params["w_u1"], hp, hp), bpad(params["b_u1"], hp)
    w_u2, b_u2 = wpad(params["w_u2"], hp, hp), bpad(params["b_u2"], hp)
    w_u3, b_u3 = wpad(params["w_u3"], hp, hp), bpad(params["b_u3"], hp)

    vmem_limit = _vmem_limit_bytes()
    cparams_par = pltpu.CompilerParams(
        dimension_semantics=("parallel",), vmem_limit_bytes=vmem_limit)
    cparams_arb = pltpu.CompilerParams(
        dimension_semantics=("arbitrary",), vmem_limit_bytes=vmem_limit)

    # ---- kernel 1: x_i = lin1(x), stored in compute dtype --------------------
    lin1_cost = pl.CostEstimate(
        flops=int(2 * n_pad * hp * fp),
        transcendentals=0,
        bytes_accessed=int(n_pad * hp * 4 + hp * fp * itemsz + n_pad * fp * itemsz))
    x_i = pl.pallas_call(
        functools.partial(_lin1_kernel, cdt=cdt),
        out_shape=jax.ShapeDtypeStruct((n_pad, fp), cdt),
        grid=(ni,),
        in_specs=[
            pl.BlockSpec((tn, hp), lambda i: (i, 0)),
            pl.BlockSpec((hp, fp), lambda i: (0, 0)),
            pl.BlockSpec((1, fp), lambda i: (0, 0)),
        ],
        out_specs=pl.BlockSpec((tn, fp), lambda i: (i, 0)),
        compiler_params=cparams_par,
        cost_estimate=lin1_cost,
    )(xp, w_lin1, b_lin1)

    # ---- x_i[col] row gather (XLA gather between the pallas_calls) -----------
    # TODO(synk): fuse this gather into the scatter kernel (VMEM-resident x_i).
    xi_col = jnp.take(x_i, col_p, axis=0)

    # ---- fused kernel: filter MLP + CSR one-hot scatter + lin2/update/residual
    row_p2 = row_p.reshape(1, e_pad)
    fused_cost = pl.CostEstimate(
        flops=int(2 * e_pad * (gp + fp) * fp
                  + 2 * T * tn * te * fp
                  + 2 * n_pad * (fp * hp + 3 * hp * hp)),
        transcendentals=int(4 * e_pad * fp + 4 * n_pad * hp),
        bytes_accessed=int(e_pad * (gp + fp) * itemsz + e_pad * 4
                           + n_pad * hp * 8
                           + (gp * fp + fp * fp + fp * hp + 3 * hp * hp) * itemsz))

    grid_spec = pltpu.PrefetchScalarGridSpec(
        num_scalar_prefetch=5,
        grid=(T,),
        in_specs=[
            pl.BlockSpec((1, te), lambda t, nb_r, eb_r, *_: (0, eb_r[t])),    # row ids
            pl.BlockSpec((te, gp), lambda t, nb_r, eb_r, *_: (eb_r[t], 0)),   # edge_attr
            pl.BlockSpec((te, fp), lambda t, nb_r, eb_r, *_: (eb_r[t], 0)),   # x_i[col]
            pl.BlockSpec((tn, hp), lambda t, nb_r, *_: (nb_r[t], 0)),         # x (residual)
            pl.BlockSpec((gp, fp), lambda t, *_: (0, 0)),                     # w_m1
            pl.BlockSpec((1, fp), lambda t, *_: (0, 0)),
            pl.BlockSpec((fp, fp), lambda t, *_: (0, 0)),                     # w_m2
            pl.BlockSpec((1, fp), lambda t, *_: (0, 0)),
            pl.BlockSpec((fp, hp), lambda t, *_: (0, 0)),                     # w_lin2
            pl.BlockSpec((1, hp), lambda t, *_: (0, 0)),
            pl.BlockSpec((hp, hp), lambda t, *_: (0, 0)),                     # w_u1
            pl.BlockSpec((1, hp), lambda t, *_: (0, 0)),
            pl.BlockSpec((hp, hp), lambda t, *_: (0, 0)),                     # w_u2
            pl.BlockSpec((1, hp), lambda t, *_: (0, 0)),
            pl.BlockSpec((hp, hp), lambda t, *_: (0, 0)),                     # w_u3
            pl.BlockSpec((1, hp), lambda t, *_: (0, 0)),
        ],
        out_specs=pl.BlockSpec((tn, hp), lambda t, nb_r, *_: (nb_r[t], 0)),
        scratch_shapes=[pltpu.VMEM((tn, fp), jnp.float32)],
    )

    out = pl.pallas_call(
        functools.partial(_fused_edge_scatter_kernel, cdt=cdt,
                          node_tile=tn, edge_tile=te),
        out_shape=jax.ShapeDtypeStruct((n_pad, hp), jnp.float32),
        grid_spec=grid_spec,
        compiler_params=cparams_arb,
        cost_estimate=fused_cost,
    )(nb, eb, first_f, last_f, acc_f,
      row_p2, eap, xi_col, xp,
      w_m1, b_m1, w_m2, b_m2,
      w_lin2, b_lin2, w_u1, b_u1, w_u2, b_u2, w_u3, b_u3)

    return out[:N, :H]


# ---------------------------------------------------------------------------
# Parameters / reference
# ---------------------------------------------------------------------------
def xavier_uniform(key, fan_in, fan_out):
    a = math.sqrt(6.0 / (fan_in + fan_out))
    # stored [in, out] so every layer is `x @ W + b`
    return jax.random.uniform(key, (fan_in, fan_out), jnp.float32, -a, a)


def make_params(key, hidden_channels, num_gaussians, num_filters):
    H, G, F = hidden_channels, num_gaussians, num_filters
    ks = jax.random.split(key, 7)
    zeros = lambda n: jnp.zeros((1, n), jnp.float32)
    return {
        # ContinuousFilterConv
        "w_lin1": xavier_uniform(ks[0], H, F), "b_lin1": zeros(F),
        "w_m1": xavier_uniform(ks[1], G, F), "b_m1": zeros(F),
        "w_m2": xavier_uniform(ks[2], F, F), "b_m2": zeros(F),
        "w_lin2": xavier_uniform(ks[3], F, H), "b_lin2": zeros(H),
        # update_net (interaction_num_dense=2 -> 2 hidden linears + output linear)
        "w_u1": xavier_uniform(ks[4], H, H), "b_u1": zeros(H),
        "w_u2": xavier_uniform(ks[5], H, H), "b_u2": zeros(H),
        "w_u3": xavier_uniform(ks[6], H, H), "b_u3": zeros(H),
    }


def reference(x, edge_index, edge_attr, params):
    """Pure-JAX reference matching the PyTorch forward semantics."""
    row, col = edge_index[0], edge_index[1]
    x_i = x @ params["w_lin1"] + params["b_lin1"]
    h = _ssp(edge_attr @ params["w_m1"] + params["b_m1"])
    ew = _ssp(h @ params["w_m2"] + params["b_m2"])
    x_j = x_i[col] * ew
    out = jax.ops.segment_sum(x_j, row, num_segments=x.shape[0])
    v = out @ params["w_lin2"] + params["b_lin2"]
    v = _ssp(v @ params["w_u1"] + params["b_u1"])
    v = _ssp(v @ params["w_u2"] + params["b_u2"])
    v = v @ params["w_u3"] + params["b_u3"]
    return x + v


if __name__ == "__main__":
    # Small shapes consistent with the module, chosen so both the node grid
    # (ni=3) and the edge-tile axis (ne=2) have multiple tiles and the CSR
    # work-item list exercises boundary / padding items.
    N = 24                   # number of nodes
    E = 200                  # number of edges
    hidden_channels = 32
    num_gaussians = 16
    num_filters = 32
    # cfconv_num_dense = 2, interaction_num_dense = 2 (hard-wired in structure)

    key = jax.random.PRNGKey(0)
    kx, kei, kea, kp = jax.random.split(key, 4)

    x = jax.random.normal(kx, (N, hidden_channels), jnp.float32)
    edge_index = jax.random.randint(kei, (2, E), 0, N, jnp.int32)
    edge_attr = jax.random.uniform(kea, (E, num_gaussians), jnp.float32)
    params = make_params(kp, hidden_channels, num_gaussians, num_filters)

    ref = reference(x, edge_index, edge_attr, params)

    # f32 compute path (module semantics up to fp association)
    run_f32 = jax.jit(functools.partial(schnet_interaction,
                                        node_tile=8, edge_tile=128))
    out = jax.block_until_ready(run_f32(x, edge_index, edge_attr, params))
    assert out.shape == (N, hidden_channels)
    assert jnp.allclose(out, ref, rtol=1e-4, atol=1e-4), "f32 mismatch vs reference"

    # bf16-MXU compute path (f32 accumulation), looser tolerance.
    run_bf16 = jax.jit(functools.partial(schnet_interaction,
                                         node_tile=8, edge_tile=128,
                                         compute_dtype=jnp.bfloat16))
    out_bf16 = jax.block_until_ready(run_bf16(x, edge_index, edge_attr, params))
    assert jnp.allclose(out_bf16, ref, rtol=5e-2, atol=5e-2), "bf16 mismatch vs reference"

    print("KERNEL_OK")
</pallas_src>

<mosaic_0001>
module attributes {stable_mosaic.version = 11 : i64} {
  func.func @_lin1_kernel(%arg0: i32, %arg1: memref<8x128xf32, #tpu.memory_space<vmem>>, %arg2: memref<128x128xf32, #tpu.memory_space<vmem>>, %arg3: memref<1x128xf32, #tpu.memory_space<vmem>>, %arg4: memref<8x128xf32, #tpu.memory_space<vmem>>) attributes {dimension_semantics = [#tpu.dimension_semantics<parallel>], iteration_bounds = array<i64: 3>, scalar_prefetch = 0 : i64, scratch_operands = 0 : i64, tpu.core_type = #tpu.core_type<tc>, window_params = [{transform_indices = @transform_0, window_bounds = array<i64: 8, 128>}, {pipeline_mode = #tpu.pipeline_mode<synchronous>, transform_indices = @transform_1, window_bounds = array<i64: 128, 128>}, {pipeline_mode = #tpu.pipeline_mode<synchronous>, transform_indices = @transform_2, window_bounds = array<i64: 1, 128>}, {transform_indices = @transform_3, window_bounds = array<i64: 8, 128>}]} {
    %c0 = arith.constant 0 : index
    %c0_0 = arith.constant 0 : index
    %0 = vector.load %arg1[%c0, %c0_0] : memref<8x128xf32, #tpu.memory_space<vmem>>, vector<8x128xf32>
    %c0_1 = arith.constant 0 : index
    %c0_2 = arith.constant 0 : index
    %1 = vector.load %arg2[%c0_1, %c0_2] : memref<128x128xf32, #tpu.memory_space<vmem>>, vector<128x128xf32>
    %cst = arith.constant dense<0.000000e+00> : vector<8x128xf32>
    %2 = tpu.matmul %0, %1, %cst {dimension_numbers = #tpu.dot_dimension_numbers<[1], [0], [0], [1], [0, 0, 1, 1], [], []>} : vector<8x128xf32>, vector<128x128xf32>, vector<8x128xf32> -> vector<8x128xf32>
    %c0_3 = arith.constant 0 : index
    %c0_4 = arith.constant 0 : index
    %3 = vector.load %arg3[%c0_3, %c0_4] : memref<1x128xf32, #tpu.memory_space<vmem>>, vector<1x128xf32>
    %4 = vector.broadcast %3 : vector<1x128xf32> to vector<8x128xf32>
    %5 = arith.addf %2, %4 : vector<8x128xf32>
    %c0_5 = arith.constant 0 : index
    %c0_6 = arith.constant 0 : index
    %6 = vector.load %arg4[%c0_5, %c0_6] : memref<8x128xf32, #tpu.memory_space<vmem>>, vector<8x128xf32>
    tpu.vector_store %arg4[%c0_5, %c0_6], %5 {strides = array<i32>} : memref<8x128xf32, #tpu.memory_space<vmem>>, vector<8x128xf32>,
    return
  }
  func.func @transform_0(%arg0: i32) -> (i32, i32) {
    %c0_i32 = arith.constant 0 : i32
    %c0_i32_0 = arith.constant 0 : i32
    return %arg0, %c0_i32 : i32, i32
  }
  func.func @transform_1(%arg0: i32) -> (i32, i32) {
    %c0_i32 = arith.constant 0 : i32
    %c0_i32_0 = arith.constant 0 : i32
    %c0_i32_1 = arith.constant 0 : i32
    return %c0_i32, %c0_i32_0 : i32, i32
  }
  func.func @transform_2(%arg0: i32) -> (i32, i32) {
    %c0_i32 = arith.constant 0 : i32
    %c0_i32_0 = arith.constant 0 : i32
    %c0_i32_1 = arith.constant 0 : i32
    return %c0_i32, %c0_i32_0 : i32, i32
  }
  func.func @transform_3(%arg0: i32) -> (i32, i32) {
    %c0_i32 = arith.constant 0 : i32
    %c0_i32_0 = arith.constant 0 : i32
    return %arg0, %c0_i32 : i32, i32
  }
}

module attributes {stable_mosaic.version = 11 : i64} {
  func.func @_fused_edge_scatter_kernel(%arg0: i32, %arg1: memref<5xi32, #tpu.memory_space<smem>>, %arg2: memref<5xi32, #tpu.memory_space<smem>>, %arg3: memref<5xi32, #tpu.memory_space<smem>>, %arg4: memref<5xi32, #tpu.memory_space<smem>>, %arg5: memref<5xi32, #tpu.memory_space<smem>>, %arg6: memref<1x128xi32, #tpu.memory_space<vmem>>, %arg7: memref<128x128xf32, #tpu.memory_space<vmem>>, %arg8: memref<128x128xf32, #tpu.memory_space<vmem>>, %arg9: memref<8x128xf32, #tpu.memory_space<vmem>>, %arg10: memref<128x128xf32, #tpu.memory_space<vmem>>, %arg11: memref<1x128xf32, #tpu.memory_space<vmem>>, %arg12: memref<128x128xf32, #tpu.memory_space<vmem>>, %arg13: memref<1x128xf32, #tpu.memory_space<vmem>>, %arg14: memref<128x128xf32, #tpu.memory_space<vmem>>, %arg15: memref<1x128xf32, #tpu.memory_space<vmem>>, %arg16: memref<128x128xf32, #tpu.memory_space<vmem>>, %arg17: memref<1x128xf32, #tpu.memory_space<vmem>>, %arg18: memref<128x128xf32, #tpu.memory_space<vmem>>, %arg19: memref<1x128xf32, #tpu.memory_space<vmem>>, %arg20: memref<128x128xf32, #tpu.memory_space<vmem>>, %arg21: memref<1x128xf32, #tpu.memory_space<vmem>>, %arg22: memref<8x128xf32, #tpu.memory_space<vmem>>, %arg23: memref<8x128xf32, #tpu.memory_space<vmem>>) attributes {dimension_semantics = [#tpu.dimension_semantics<arbitrary>], iteration_bounds = array<i64: 5>, scalar_prefetch = 5 : i64, scratch_operands = 1 : i64, tpu.core_type = #tpu.core_type<tc>, window_params = [{transform_indices = @transform_0, window_bounds = array<i64: 1, 128>}, {transform_indices = @transform_1, window_bounds = array<i64: 128, 128>}, {transform_indices = @transform_2, window_bounds = array<i64: 128, 128>}, {transform_indices = @transform_3, window_bounds = array<i64: 8, 128>}, {pipeline_mode = #tpu.pipeline_mode<synchronous>, transform_indices = @transform_4, window_bounds = array<i64: 128, 128>}, {pipeline_mode = #tpu.pipeline_mode<synchronous>, transform_indices = @transform_5, window_bounds = array<i64: 1, 128>}, {pipeline_mode = #tpu.pipeline_mode<synchronous>, transform_indices = @transform_6, window_bounds = array<i64: 128, 128>}, {pipeline_mode = #tpu.pipeline_mode<synchronous>, transform_indices = @transform_7, window_bounds = array<i64: 1, 128>}, {pipeline_mode = #tpu.pipeline_mode<synchronous>, transform_indices = @transform_8, window_bounds = array<i64: 128, 128>}, {pipeline_mode = #tpu.pipeline_mode<synchronous>, transform_indices = @transform_9, window_bounds = array<i64: 1, 128>}, {pipeline_mode = #tpu.pipeline_mode<synchronous>, transform_indices = @transform_10, window_bounds = array<i64: 128, 128>}, {pipeline_mode = #tpu.pipeline_mode<synchronous>, transform_indices = @transform_11, window_bounds = array<i64: 1, 128>}, {pipeline_mode = #tpu.pipeline_mode<synchronous>, transform_indices = @transform_12, window_bounds = array<i64: 128, 128>}, {pipeline_mode = #tpu.pipeline_mode<synchronous>, transform_indices = @transform_13, window_bounds = array<i64: 1, 128>}, {pipeline_mode = #tpu.pipeline_mode<synchronous>, transform_indices = @transform_14, window_bounds = array<i64: 128, 128>}, {pipeline_mode = #tpu.pipeline_mode<synchronous>, transform_indices = @transform_15, window_bounds = array<i64: 1, 128>}, {transform_indices = @transform_16, window_bounds = array<i64: 8, 128>}]} {
    %0 = arith.index_cast %arg0 : i32 to index
    %1 = memref.load %arg3[%0] : memref<5xi32, #tpu.memory_space<smem>>
    %c1_i32 = arith.constant 1 : i32
    %2 = arith.cmpi eq, %1, %c1_i32 : i32
    %3 = arith.extui %2 : i1 to i32
    %c0_i32 = arith.constant 0 : i32
    %4 = arith.cmpi ne, %3, %c0_i32 : i32
    scf.if %4 {
      %cst = arith.constant 0.000000e+00 : f32
      %15 = vector.broadcast %cst : f32 to vector<8x128xf32>
      %c0 = arith.constant 0 : index
      %c0_4 = arith.constant 0 : index
      %16 = vector.load %arg23[%c0, %c0_4] : memref<8x128xf32, #tpu.memory_space<vmem>>, vector<8x128xf32>
      tpu.vector_store %arg23[%c0, %c0_4], %15 {strides = array<i32>} : memref<8x128xf32, #tpu.memory_space<vmem>>, vector<8x128xf32>,
    } else {
    }
    %5 = arith.index_cast %arg0 : i32 to index
    %6 = memref.load %arg5[%5] : memref<5xi32, #tpu.memory_space<smem>>
    %c1_i32_0 = arith.constant 1 : i32
    %7 = arith.cmpi eq, %6, %c1_i32_0 : i32
    %8 = arith.extui %7 : i1 to i32
    %c0_i32_1 = arith.constant 0 : i32
    %9 = arith.cmpi ne, %8, %c0_i32_1 : i32
    scf.if %9 {
      %c0 = arith.constant 0 : index
      %c0_4 = arith.constant 0 : index
      %15 = vector.load %arg7[%c0, %c0_4] : memref<128x128xf32, #tpu.memory_space<vmem>>, vector<128x128xf32>
      %c0_5 = arith.constant 0 : index
      %c0_6 = arith.constant 0 : index
      %16 = vector.load %arg10[%c0_5, %c0_6] : memref<128x128xf32, #tpu.memory_space<vmem>>, vector<128x128xf32>
      %cst = arith.constant dense<0.000000e+00> : vector<128x128xf32>
      %17 = tpu.matmul %15, %16, %cst {dimension_numbers = #tpu.dot_dimension_numbers<[1], [0], [0], [1], [0, 0, 1, 1], [], []>} : vector<128x128xf32>, vector<128x128xf32>, vector<128x128xf32> -> vector<128x128xf32>
      %c0_7 = arith.constant 0 : index
      %c0_8 = arith.constant 0 : index
      %18 = vector.load %arg11[%c0_7, %c0_8] : memref<1x128xf32, #tpu.memory_space<vmem>>, vector<1x128xf32>
      %19 = vector.broadcast %18 : vector<1x128xf32> to vector<128x128xf32>
      %20 = arith.addf %17, %19 : vector<128x128xf32>
      %cst_9 = arith.constant 0.000000e+00 : f32
      %21 = vector.broadcast %cst_9 : f32 to vector<128x128xf32>
      %22 = arith.maximumf %20, %21 : vector<128x128xf32>
      %23 = vector.broadcast %cst_9 : f32 to vector<128x128xf32>
      %24 = arith.subf %20, %23 : vector<128x128xf32>
      %25 = arith.cmpf one, %24, %24 : vector<128x128xf32>
      %26 = vector.broadcast %cst_9 : f32 to vector<128x128xf32>
      %27 = arith.addf %20, %26 : vector<128x128xf32>
      %28 = math.absf %24 : vector<128x128xf32>
      %cst_10 = arith.constant 0.000000e+00 : f32
      %29 = vector.broadcast %cst_10 : f32 to vector<128x128xf32>
      %30 = arith.subf %29, %28 : vector<128x128xf32>
      %31 = math.exp %30 : vector<128x128xf32>
      %32 = math.log1p %31 : vector<128x128xf32>
      %33 = arith.addf %22, %32 : vector<128x128xf32>
      %34 = arith.select %25, %27, %33 : vector<128x128xi1>, vector<128x128xf32>
      %cst_11 = arith.constant 0.693147182 : f32
      %35 = vector.broadcast %cst_11 : f32 to vector<128x128xf32>
      %36 = arith.subf %34, %35 : vector<128x128xf32>
      %c0_12 = arith.constant 0 : index
      %c0_13 = arith.constant 0 : index
      %37 = vector.load %arg12[%c0_12, %c0_13] : memref<128x128xf32, #tpu.memory_space<vmem>>, vector<128x128xf32>
      %cst_14 = arith.constant dense<0.000000e+00> : vector<128x128xf32>
      %38 = tpu.matmul %36, %37, %cst_14 {dimension_numbers = #tpu.dot_dimension_numbers<[1], [0], [0], [1], [0, 0, 1, 1], [], []>} : vector<128x128xf32>, vector<128x128xf32>, vector<128x128xf32> -> vector<128x128xf32>
      %c0_15 = arith.constant 0 : index
      %c0_16 = arith.constant 0 : index
      %39 = vector.load %arg13[%c0_15, %c0_16] : memref<1x128xf32, #tpu.memory_space<vmem>>, vector<1x128xf32>
      %40 = vector.broadcast %39 : vector<1x128xf32> to vector<128x128xf32>
      %41 = arith.addf %38, %40 : vector<128x128xf32>
      %cst_17 = arith.constant 0.000000e+00 : f32
      %42 = vector.broadcast %cst_17 : f32 to vector<128x128xf32>
      %43 = arith.maximumf %41, %42 : vector<128x128xf32>
      %44 = vector.broadcast %cst_17 : f32 to vector<128x128xf32>
      %45 = arith.subf %41, %44 : vector<128x128xf32>
      %46 = arith.cmpf one, %45, %45 : vector<128x128xf32>
      %47 = vector.broadcast %cst_17 : f32 to vector<128x128xf32>
      %48 = arith.addf %41, %47 : vector<128x128xf32>
      %49 = math.absf %45 : vector<128x128xf32>
      %cst_18 = arith.constant 0.000000e+00 : f32
      %50 = vector.broadcast %cst_18 : f32 to vector<128x128xf32>
      %51 = arith.subf %50, %49 : vector<128x128xf32>
      %52 = math.exp %51 : vector<128x128xf32>
      %53 = math.log1p %52 : vector<128x128xf32>
      %54 = arith.addf %43, %53 : vector<128x128xf32>
      %55 = arith.select %46, %48, %54 : vector<128x128xi1>, vector<128x128xf32>
      %cst_19 = arith.constant 0.693147182 : f32
      %56 = vector.broadcast %cst_19 : f32 to vector<128x128xf32>
      %57 = arith.subf %55, %56 : vector<128x128xf32>
      %c0_20 = arith.constant 0 : index
      %c0_21 = arith.constant 0 : index
      %58 = vector.load %arg8[%c0_20, %c0_21] : memref<128x128xf32, #tpu.memory_space<vmem>>, vector<128x128xf32>
      %59 = arith.mulf %58, %57 : vector<128x128xf32>
      %60 = arith.index_cast %arg0 : i32 to index
      %61 = memref.load %arg1[%60] : memref<5xi32, #tpu.memory_space<smem>>
      %c8_i32 = arith.constant 8 : i32
      %62 = arith.muli %61, %c8_i32 : i32
      %c0_22 = arith.constant 0 : index
      %c0_23 = arith.constant 0 : index
      %63 = vector.load %arg6[%c0_22, %c0_23] : memref<1x128xi32, #tpu.memory_space<vmem>>, vector<1x128xi32>
      %64 = vector.broadcast %62 : i32 to vector<1x128xi32>
      %65 = arith.subi %63, %64 : vector<1x128xi32>
      %66 = tpu.iota {dimensions = array<i32: 0>} : vector<8x128xi32>
      %67 = vector.broadcast %65 : vector<1x128xi32> to vector<8x128xi32>
      %68 = arith.cmpi eq, %66, %67 : vector<8x128xi32>
      %69 = arith.extui %68 : vector<8x128xi1> to vector<8x128xi32>
      %70 = arith.sitofp %69 : vector<8x128xi32> to vector<8x128xf32>
      %c0_24 = arith.constant 0 : index
      %c0_25 = arith.constant 0 : index
      %71 = vector.load %arg23[%c0_24, %c0_25] : memref<8x128xf32, #tpu.memory_space<vmem>>, vector<8x128xf32>
      %cst_26 = arith.constant dense<0.000000e+00> : vector<8x128xf32>
      %72 = tpu.matmul %70, %59, %cst_26 {dimension_numbers = #tpu.dot_dimension_numbers<[1], [0], [0], [1], [0, 0, 1, 1], [], []>} : vector<8x128xf32>, vector<128x128xf32>, vector<8x128xf32> -> vector<8x128xf32>
      %73 = arith.addf %71, %72 : vector<8x128xf32>
      %c0_27 = arith.constant 0 : index
      %c0_28 = arith.constant 0 : index
      %74 = vector.load %arg23[%c0_27, %c0_28] : memref<8x128xf32, #tpu.memory_space<vmem>>, vector<8x128xf32>
      tpu.vector_store %arg23[%c0_27, %c0_28], %73 {strides = array<i32>} : memref<8x128xf32, #tpu.memory_space<vmem>>, vector<8x128xf32>,
    } else {
    }
    %10 = arith.index_cast %arg0 : i32 to index
    %11 = memref.load %arg4[%10] : memref<5xi32, #tpu.memory_space<smem>>
    %c1_i32_2 = arith.constant 1 : i32
    %12 = arith.cmpi eq, %11, %c1_i32_2 : i32
    %13 = arith.extui %12 : i1 to i32
    %c0_i32_3 = arith.constant 0 : i32
    %14 = arith.cmpi ne, %13, %c0_i32_3 : i32
    scf.if %14 {
      %c0 = arith.constant 0 : index
      %c0_4 = arith.constant 0 : index
      %15 = vector.load %arg23[%c0, %c0_4] : memref<8x128xf32, #tpu.memory_space<vmem>>, vector<8x128xf32>
      %c0_5 = arith.constant 0 : index
      %c0_6 = arith.constant 0 : index
      %16 = vector.load %arg14[%c0_5, %c0_6] : memref<128x128xf32, #tpu.memory_space<vmem>>, vector<128x128xf32>
      %cst = arith.constant dense<0.000000e+00> : vector<8x128xf32>
      %17 = tpu.matmul %15, %16, %cst {dimension_numbers = #tpu.dot_dimension_numbers<[1], [0], [0], [1], [0, 0, 1, 1], [], []>} : vector<8x128xf32>, vector<128x128xf32>, vector<8x128xf32> -> vector<8x128xf32>
      %c0_7 = arith.constant 0 : index
      %c0_8 = arith.constant 0 : index
      %18 = vector.load %arg15[%c0_7, %c0_8] : memref<1x128xf32, #tpu.memory_space<vmem>>, vector<1x128xf32>
      %19 = vector.broadcast %18 : vector<1x128xf32> to vector<8x128xf32>
      %20 = arith.addf %17, %19 : vector<8x128xf32>
      %c0_9 = arith.constant 0 : index
      %c0_10 = arith.constant 0 : index
      %21 = vector.load %arg16[%c0_9, %c0_10] : memref<128x128xf32, #tpu.memory_space<vmem>>, vector<128x128xf32>
      %cst_11 = arith.constant dense<0.000000e+00> : vector<8x128xf32>
      %22 = tpu.matmul %20, %21, %cst_11 {dimension_numbers = #tpu.dot_dimension_numbers<[1], [0], [0], [1], [0, 0, 1, 1], [], []>} : vector<8x128xf32>, vector<128x128xf32>, vector<8x128xf32> -> vector<8x128xf32>
      %c0_12 = arith.constant 0 : index
      %c0_13 = arith.constant 0 : index
      %23 = vector.load %arg17[%c0_12, %c0_13] : memref<1x128xf32, #tpu.memory_space<vmem>>, vector<1x128xf32>
      %24 = vector.broadcast %23 : vector<1x128xf32> to vector<8x128xf32>
      %25 = arith.addf %22, %24 : vector<8x128xf32>
      %cst_14 = arith.constant 0.000000e+00 : f32
      %26 = vector.broadcast %cst_14 : f32 to vector<8x128xf32>
      %27 = arith.maximumf %25, %26 : vector<8x128xf32>
      %28 = vector.broadcast %cst_14 : f32 to vector<8x128xf32>
      %29 = arith.subf %25, %28 : vector<8x128xf32>
      %30 = arith.cmpf one, %29, %29 : vector<8x128xf32>
      %31 = vector.broadcast %cst_14 : f32 to vector<8x128xf32>
      %32 = arith.addf %25, %31 : vector<8x128xf32>
      %33 = math.absf %29 : vector<8x128xf32>
      %cst_15 = arith.constant 0.000000e+00 : f32
      %34 = vector.broadcast %cst_15 : f32 to vector<8x128xf32>
      %35 = arith.subf %34, %33 : vector<8x128xf32>
      %36 = math.exp %35 : vector<8x128xf32>
      %37 = math.log1p %36 : vector<8x128xf32>
      %38 = arith.addf %27, %37 : vector<8x128xf32>
      %39 = arith.select %30, %32, %38 : vector<8x128xi1>, vector<8x128xf32>
      %cst_16 = arith.constant 0.693147182 : f32
      %40 = vector.broadcast %cst_16 : f32 to vector<8x128xf32>
      %41 = arith.subf %39, %40 : vector<8x128xf32>
      %c0_17 = arith.constant 0 : index
      %c0_18 = arith.constant 0 : index
      %42 = vector.load %arg18[%c0_17, %c0_18] : memref<128x128xf32, #tpu.memory_space<vmem>>, vector<128x128xf32>
      %cst_19 = arith.constant dense<0.000000e+00> : vector<8x128xf32>
      %43 = tpu.matmul %41, %42, %cst_19 {dimension_numbers = #tpu.dot_dimension_numbers<[1], [0], [0], [1], [0, 0, 1, 1], [], []>} : vector<8x128xf32>, vector<128x128xf32>, vector<8x128xf32> -> vector<8x128xf32>
      %c0_20 = arith.constant 0 : index
      %c0_21 = arith.constant 0 : index
      %44 = vector.load %arg19[%c0_20, %c0_21] : memref<1x128xf32, #tpu.memory_space<vmem>>, vector<1x128xf32>
      %45 = vector.broadcast %44 : vector<1x128xf32> to vector<8x128xf32>
      %46 = arith.addf %43, %45 : vector<8x128xf32>
      %cst_22 = arith.constant 0.000000e+00 : f32
      %47 = vector.broadcast %cst_22 : f32 to vector<8x128xf32>
      %48 = arith.maximumf %46, %47 : vector<8x128xf32>
      %49 = vector.broadcast %cst_22 : f32 to vector<8x128xf32>
      %50 = arith.subf %46, %49 : vector<8x128xf32>
      %51 = arith.cmpf one, %50, %50 : vector<8x128xf32>
      %52 = vector.broadcast %cst_22 : f32 to vector<8x128xf32>
      %53 = arith.addf %46, %52 : vector<8x128xf32>
      %54 = math.absf %50 : vector<8x128xf32>
      %cst_23 = arith.constant 0.000000e+00 : f32
      %55 = vector.broadcast %cst_23 : f32 to vector<8x128xf32>
      %56 = arith.subf %55, %54 : vector<8x128xf32>
      %57 = math.exp %56 : vector<8x128xf32>
      %58 = math.log1p %57 : vector<8x128xf32>
      %59 = arith.addf %48, %58 : vector<8x128xf32>
      %60 = arith.select %51, %53, %59 : vector<8x128xi1>, vector<8x128xf32>
      %cst_24 = arith.constant 0.693147182 : f32
      %61 = vector.broadcast %cst_24 : f32 to vector<8x128xf32>
      %62 = arith.subf %60, %61 : vector<8x128xf32>
      %c0_25 = arith.constant 0 : index
      %c0_26 = arith.constant 0 : index
      %63 = vector.load %arg20[%c0_25, %c0_26] : memref<128x128xf32, #tpu.memory_space<vmem>>, vector<128x128xf32>
      %cst_27 = arith.constant dense<0.000000e+00> : vector<8x128xf32>
      %64 = tpu.matmul %62, %63, %cst_27 {dimension_numbers = #tpu.dot_dimension_numbers<[1], [0], [0], [1], [0, 0, 1, 1], [], []>} : vector<8x128xf32>, vector<128x128xf32>, vector<8x128xf32> -> vector<8x128xf32>
      %c0_28 = arith.constant 0 : index
      %c0_29 = arith.constant 0 : index
      %65 = vector.load %arg21[%c0_28, %c0_29] : memref<1x128xf32, #tpu.memory_space<vmem>>, vector<1x128xf32>
      %66 = vector.broadcast %65 : vector<1x128xf32> to vector<8x128xf32>
      %67 = arith.addf %64, %66 : vector<8x128xf32>
      %c0_30 = arith.constant 0 : index
      %c0_31 = arith.constant 0 : index
      %68 = vector.load %arg9[%c0_30, %c0_31] : memref<8x128xf32, #tpu.memory_space<vmem>>, vector<8x128xf32>
      %69 = arith.addf %68, %67 : vector<8x128xf32>
      %c0_32 = arith.constant 0 : index
      %c0_33 = arith.constant 0 : index
      %70 = vector.load %arg22[%c0_32, %c0_33] : memref<8x128xf32, #tpu.memory_space<vmem>>, vector<8x128xf32>
      tpu.vector_store %arg22[%c0_32, %c0_33], %69 {strides = array<i32>} : memref<8x128xf32, #tpu.memory_space<vmem>>, vector<8x128xf32>,
    } else {
    }
    return
  }
  func.func @transform_0(%arg0: i32, %arg1: memref<5xi32, #tpu.memory_space<smem>>, %arg2: memref<5xi32, #tpu.memory_space<smem>>, %arg3: memref<5xi32, #tpu.memory_space<smem>>, %arg4: memref<5xi32, #tpu.memory_space<smem>>, %arg5: memref<5xi32, #tpu.memory_space<smem>>) -> (i32, i32) {
    %0 = arith.index_cast %arg0 : i32 to index
    %1 = memref.load %arg2[%0] : memref<5xi32, #tpu.memory_space<smem>>
    %c0_i32 = arith.constant 0 : i32
    %c0_i32_0 = arith.constant 0 : i32
    return %c0_i32, %1 : i32, i32
  }
  func.func @transform_1(%arg0: i32, %arg1: memref<5xi32, #tpu.memory_space<smem>>, %arg2: memref<5xi32, #tpu.memory_space<smem>>, %arg3: memref<5xi32, #tpu.memory_space<smem>>, %arg4: memref<5xi32, #tpu.memory_space<smem>>, %arg5: memref<5xi32, #tpu.memory_space<smem>>) -> (i32, i32) {
    %0 = arith.index_cast %arg0 : i32 to index
    %1 = memref.load %arg2[%0] : memref<5xi32, #tpu.memory_space<smem>>
    %c0_i32 = arith.constant 0 : i32
    %c0_i32_0 = arith.constant 0 : i32
    return %1, %c0_i32 : i32, i32
  }
  func.func @transform_2(%arg0: i32, %arg1: memref<5xi32, #tpu.memory_space<smem>>, %arg2: memref<5xi32, #tpu.memory_space<smem>>, %arg3: memref<5xi32, #tpu.memory_space<smem>>, %arg4: memref<5xi32, #tpu.memory_space<smem>>, %arg5: memref<5xi32, #tpu.memory_space<smem>>) -> (i32, i32) {
    %0 = arith.index_cast %arg0 : i32 to index
    %1 = memref.load %arg2[%0] : memref<5xi32, #tpu.memory_space<smem>>
    %c0_i32 = arith.constant 0 : i32
    %c0_i32_0 = arith.constant 0 : i32
    return %1, %c0_i32 : i32, i32
  }
  func.func @transform_3(%arg0: i32, %arg1: memref<5xi32, #tpu.memory_space<smem>>, %arg2: memref<5xi32, #tpu.memory_space<smem>>, %arg3: memref<5xi32, #tpu.memory_space<smem>>, %arg4: memref<5xi32, #tpu.memory_space<smem>>, %arg5: memref<5xi32, #tpu.memory_space<smem>>) -> (i32, i32) {
    %0 = arith.index_cast %arg0 : i32 to index
    %1 = memref.load %arg1[%0] : memref<5xi32, #tpu.memory_space<smem>>
    %c0_i32 = arith.constant 0 : i32
    %c0_i32_0 = arith.constant 0 : i32
    return %1, %c0_i32 : i32, i32
  }
  func.func @transform_4(%arg0: i32, %arg1: memref<5xi32, #tpu.memory_space<smem>>, %arg2: memref<5xi32, #tpu.memory_space<smem>>, %arg3: memref<5xi32, #tpu.memory_space<smem>>, %arg4: memref<5xi32, #tpu.memory_space<smem>>, %arg5: memref<5xi32, #tpu.memory_space<smem>>) -> (i32, i32) {
    %c0_i32 = arith.constant 0 : i32
    %c0_i32_0 = arith.constant 0 : i32
    %c0_i32_1 = arith.constant 0 : i32
    return %c0_i32, %c0_i32_0 : i32, i32
  }
  func.func @transform_5(%arg0: i32, %arg1: memref<5xi32, #tpu.memory_space<smem>>, %arg2: memref<5xi32, #tpu.memory_space<smem>>, %arg3: memref<5xi32, #tpu.memory_space<smem>>, %arg4: memref<5xi32, #tpu.memory_space<smem>>, %arg5: memref<5xi32, #tpu.memory_space<smem>>) -> (i32, i32) {
    %c0_i32 = arith.constant 0 : i32
    %c0_i32_0 = arith.constant 0 : i32
    %c0_i32_1 = arith.constant 0 : i32
    return %c0_i32, %c0_i32_0 : i32, i32
  }
  func.func @transform_6(%arg0: i32, %arg1: memref<5xi32, #tpu.memory_space<smem>>, %arg2: memref<5xi32, #tpu.memory_space<smem>>, %arg3: memref<5xi32, #tpu.memory_space<smem>>, %arg4: memref<5xi32, #tpu.memory_space<smem>>, %arg5: memref<5xi32, #tpu.memory_space<smem>>) -> (i32, i32) {
    %c0_i32 = arith.constant 0 : i32
    %c0_i32_0 = arith.constant 0 : i32
    %c0_i32_1 = arith.constant 0 : i32
    return %c0_i32, %c0_i32_0 : i32, i32
  }
  func.func @transform_7(%arg0: i32, %arg1: memref<5xi32, #tpu.memory_space<smem>>, %arg2: memref<5xi32, #tpu.memory_space<smem>>, %arg3: memref<5xi32, #tpu.memory_space<smem>>, %arg4: memref<5xi32, #tpu.memory_space<smem>>, %arg5: memref<5xi32, #tpu.memory_space<smem>>) -> (i32, i32) {
    %c0_i32 = arith.constant 0 : i32
    %c0_i32_0 = arith.constant 0 : i32
    %c0_i32_1 = arith.constant 0 : i32
    return %c0_i32, %c0_i32_0 : i32, i32
  }
  func.func @transform_8(%arg0: i32, %arg1: memref<5xi32, #tpu.memory_space<smem>>, %arg2: memref<5xi32, #tpu.memory_space<smem>>, %arg3: memref<5xi32, #tpu.memory_space<smem>>, %arg4: memref<5xi32, #tpu.memory_space<smem>>, %arg5: memref<5xi32, #tpu.memory_space<smem>>) -> (i32, i32) {
    %c0_i32 = arith.constant 0 : i32
    %c0_i32_0 = arith.constant 0 : i32
    %c0_i32_1 = arith.constant 0 : i32
    return %c0_i32, %c0_i32_0 : i32, i32
  }
  func.func @transform_9(%arg0: i32, %arg1: memref<5xi32, #tpu.memory_space<smem>>, %arg2: memref<5xi32, #tpu.memory_space<smem>>, %arg3: memref<5xi32, #tpu.memory_space<smem>>, %arg4: memref<5xi32, #tpu.memory_space<smem>>, %arg5: memref<5xi32, #tpu.memory_space<smem>>) -> (i32, i32) {
    %c0_i32 = arith.constant 0 : i32
    %c0_i32_0 = arith.constant 0 : i32
    %c0_i32_1 = arith.constant 0 : i32
    return %c0_i32, %c0_i32_0 : i32, i32
  }
  func.func @transform_10(%arg0: i32, %arg1: memref<5xi32, #tpu.memory_space<smem>>, %arg2: memref<5xi32, #tpu.memory_space<smem>>, %arg3: memref<5xi32, #tpu.memory_space<smem>>, %arg4: memref<5xi32, #tpu.memory_space<smem>>, %arg5: memref<5xi32, #tpu.memory_space<smem>>) -> (i32, i32) {
    %c0_i32 = arith.constant 0 : i32
    %c0_i32_0 = arith.constant 0 : i32
    %c0_i32_1 = arith.constant 0 : i32
    return %c0_i32, %c0_i32_0 : i32, i32
  }
  func.func @transform_11(%arg0: i32, %arg1: memref<5xi32, #tpu.memory_space<smem>>, %arg2: memref<5xi32, #tpu.memory_space<smem>>, %arg3: memref<5xi32, #tpu.memory_space<smem>>, %arg4: memref<5xi32, #tpu.memory_space<smem>>, %arg5: memref<5xi32, #tpu.memory_space<smem>>) -> (i32, i32) {
    %c0_i32 = arith.constant 0 : i32
    %c0_i32_0 = arith.constant 0 : i32
    %c0_i32_1 = arith.constant 0 : i32
    return %c0_i32, %c0_i32_0 : i32, i32
  }
  func.func @transform_12(%arg0: i32, %arg1: memref<5xi32, #tpu.memory_space<smem>>, %arg2: memref<5xi32, #tpu.memory_space<smem>>, %arg3: memref<5xi32, #tpu.memory_space<smem>>, %arg4: memref<5xi32, #tpu.memory_space<smem>>, %arg5: memref<5xi32, #tpu.memory_space<smem>>) -> (i32, i32) {
    %c0_i32 = arith.constant 0 : i32
    %c0_i32_0 = arith.constant 0 : i32
    %c0_i32_1 = arith.constant 0 : i32
    return %c0_i32, %c0_i32_0 : i32, i32
  }
  func.func @transform_13(%arg0: i32, %arg1: memref<5xi32, #tpu.memory_space<smem>>, %arg2: memref<5xi32, #tpu.memory_space<smem>>, %arg3: memref<5xi32, #tpu.memory_space<smem>>, %arg4: memref<5xi32, #tpu.memory_space<smem>>, %arg5: memref<5xi32, #tpu.memory_space<smem>>) -> (i32, i32) {
    %c0_i32 = arith.constant 0 : i32
    %c0_i32_0 = arith.constant 0 : i32
    %c0_i32_1 = arith.constant 0 : i32
    return %c0_i32, %c0_i32_0 : i32, i32
  }
  func.func @transform_14(%arg0: i32, %arg1: memref<5xi32, #tpu.memory_space<smem>>, %arg2: memref<5xi32, #tpu.memory_space<smem>>, %arg3: memref<5xi32, #tpu.memory_space<smem>>, %arg4: memref<5xi32, #tpu.memory_space<smem>>, %arg5: memref<5xi32, #tpu.memory_space<smem>>) -> (i32, i32) {
    %c0_i32 = arith.constant 0 : i32
    %c0_i32_0 = arith.constant 0 : i32
    %c0_i32_1 = arith.constant 0 : i32
    return %c0_i32, %c0_i32_0 : i32, i32
  }
  func.func @transform_15(%arg0: i32, %arg1: memref<5xi32, #tpu.memory_space<smem>>, %arg2: memref<5xi32, #tpu.memory_space<smem>>, %arg3: memref<5xi32, #tpu.memory_space<smem>>, %arg4: memref<5xi32, #tpu.memory_space<smem>>, %arg5: memref<5xi32, #tpu.memory_space<smem>>) -> (i32, i32) {
    %c0_i32 = arith.constant 0 : i32
    %c0_i32_0 = arith.constant 0 : i32
    %c0_i32_1 = arith.constant 0 : i32
    return %c0_i32, %c0_i32_0 : i32, i32
  }
  func.func @transform_16(%arg0: i32, %arg1: memref<5xi32, #tpu.memory_space<smem>>, %arg2: memref<5xi32, #tpu.memory_space<smem>>, %arg3: memref<5xi32, #tpu.memory_space<smem>>, %arg4: memref<5xi32, #tpu.memory_space<smem>>, %arg5: memref<5xi32, #tpu.memory_space<smem>>) -> (i32, i32) {
    %0 = arith.index_cast %arg0 : i32 to index
    %1 = memref.load %arg1[%0] : memref<5xi32, #tpu.memory_space<smem>>
    %c0_i32 = arith.constant 0 : i32
    %c0_i32_0 = arith.constant 0 : i32
    return %1, %c0_i32 : i32, i32
  }
}

</mosaic_0001>

<llo_original>
// kernel: custom-call
$region0: #{custom-call}
  %s0 = inlined_call_operand.vmem [shape: u32[3], index: 0, kind: output, shape index: {}]

// kernel: custom-call.4
$region0: #{custom-call.4}
  %s0 = inlined_call_operand.vmem [shape: u32[5], index: 0, kind: output, shape index: {}]

// kernel: schnet_interaction.2
$region0: #{schnet_interaction.2}
  #allocation0 [shape = 'u32[]', space=smem, size = 0x4, offset = 0x4, fixed_abs, tag = 'smem constant byte address 0x4 - core index']
  #allocation1 [shape = 'u32[144,128]{1,0:T(1,128)}', space=vmem, size = 0x12000, scoped, tag = 'internal scratch']
  %s0 = inlined_call_operand.vmem [shape: f32[24,128], index: 0, kind: input, shape index: {}]
  %s1 = inlined_call_operand.vmem [shape: f32[128,128], index: 1, kind: input, shape index: {}]
  %s2 = inlined_call_operand.vmem [shape: f32[1,128], index: 2, kind: input, shape index: {}]
  %s3 = inlined_call_operand.vmem [shape: f32[24,128], index: 3, kind: output, shape index: {}]
  %s4 = sld [smem:[#allocation0]]
  $region45: #{schnet_interaction.2} parent=0
    _
  %s6 = ssub.s32 1, %s4
  %s7 = scalar_select 0, %s6, %s4
  loop: start=0, step=1, limit=5
  $region2: #{schnet_interaction.2} parent=0 // loop_pre_header
    _
  $region3: #{schnet_interaction.2} parent=0 // loop_header
    %s9 = sphi 0, %s13
    %p10 = scmp.ge.s32.totalorder %s9, 5
    %s19 = sphi 0, %s21
    %s22 = sphi 0, %s19
    %s23 = sphi 0, %s22
    %s39 = sphi 0, %s23
    %s43 = sphi 0, %s43
    %s45 = sphi 0, %s43
    %s46 = sphi 0, %s45
    %s60 = sphi 0, %s46
    %s64 = sphi 0, %s64
    %s66 = sphi 0, %s64
    %s67 = sphi 0, %s66
    %s81 = sphi 0, %s67
    %s87 = sphi 0, %s89
    %s90 = sphi 0, %s87
    %s91 = sphi 0, %s90
    %s107 = sphi 0, %s91
  $region4: #{schnet_interaction.2} parent=0 // loop_header_branch
    %12 = sbr.rel (%p10) target = $region8
  $region5: #{schnet_interaction.2} parent=0 // loop_body
    %s14 = ssub.s32 %s9, 1
    %s15 = ssub.s32 %s9, 2
    %s16 = sadd.s32 %s9, 1
    %s17 = ssub.s32 %s9, %s16
    %p18 = scmp.eq.s32.totalorder %s17, 0
    %s20 = sadd.s32 %s19, 1
    %s21 = scalar_select %p18, %s19, %s20
    %p24 = pneg %p18
    %p25 = scmp.eq.s32.totalorder %s9, 2
    %p26 = por %p24, %p25
    %p27 = scmp.ne.s32.totalorder %s19, %s22
    %p28 = scmp.eq.s32.totalorder %s9, 0
    %p29 = por %p27, %p28
    %p30 = scmp.ne.s32.totalorder %s19, %s22
    %p31 = scmp.eq.s32.totalorder %s14, 2
    %p32 = por %p30, %p31
    %p33 = scmp.ne.s32.totalorder %s22, %s23
    %p34 = scmp.eq.s32.totalorder %s14, 0
    %p35 = por %p33, %p34
    %p36 = scmp.ne.s32.totalorder %s22, %s23
    %p37 = scmp.eq.s32.totalorder %s15, 2
    %p38 = por %p36, %p37
    %p40 = scmp.ne.s32.totalorder %s23, %s39
    %p41 = scmp.eq.s32.totalorder %s15, 0
    %p42 = por %p40, %p41
    %s44 = sadd.s32 %s43, 1
    %p47 = scmp.eq.s32.totalorder %s9, 2
    %p48 = scmp.ne.s32.totalorder %s43, %s45
    %p49 = scmp.eq.s32.totalorder %s9, 0
    %p50 = por %p48, %p49
    %p51 = scmp.ne.s32.totalorder %s43, %s45
    %p52 = scmp.eq.s32.totalorder %s14, 2
    %p53 = por %p51, %p52
    %p54 = scmp.ne.s32.totalorder %s45, %s46
    %p55 = scmp.eq.s32.totalorder %s14, 0
    %p56 = por %p54, %p55
    %p57 = scmp.ne.s32.totalorder %s45, %s46
    %p58 = scmp.eq.s32.totalorder %s15, 2
    %p59 = por %p57, %p58
    %p61 = scmp.ne.s32.totalorder %s46, %s60
    %p62 = scmp.eq.s32.totalorder %s15, 0
    %p63 = por %p61, %p62
    %s65 = sadd.s32 %s64, 1
    %p68 = scmp.eq.s32.totalorder %s9, 2
    %p69 = scmp.ne.s32.totalorder %s64, %s66
    %p70 = scmp.eq.s32.totalorder %s9, 0
    %p71 = por %p69, %p70
    %p72 = scmp.ne.s32.totalorder %s64, %s66
    %p73 = scmp.eq.s32.totalorder %s14, 2
    %p74 = por %p72, %p73
    %p75 = scmp.ne.s32.totalorder %s66, %s67
    %p76 = scmp.eq.s32.totalorder %s14, 0
    %p77 = por %p75, %p76
    %p78 = scmp.ne.s32.totalorder %s66, %s67
    %p79 = scmp.eq.s32.totalorder %s15, 2
    %p80 = por %p78, %p79
    %p82 = scmp.ne.s32.totalorder %s67, %s81
    %p83 = scmp.eq.s32.totalorder %s15, 0
    %p84 = por %p82, %p83
    %s85 = ssub.s32 %s9, %s16
    %p86 = scmp.eq.s32.totalorder %s85, 0
    %s88 = sadd.s32 %s87, 1
    %s89 = scalar_select %p86, %s87, %s88
    %p92 = pneg %p86
    %p93 = scmp.eq.s32.totalorder %s9, 2
    %p94 = por %p92, %p93
    %p95 = scmp.ne.s32.totalorder %s87, %s90
    %p96 = scmp.eq.s32.totalorder %s9, 0
    %p97 = por %p95, %p96
    %p98 = scmp.ne.s32.totalorder %s87, %s90
    %p99 = scmp.eq.s32.totalorder %s14, 2
    %p100 = por %p98, %p99
    %p101 = scmp.ne.s32.totalorder %s90, %s91
    %p102 = scmp.eq.s32.totalorder %s14, 0
    %p103 = por %p101, %p102
    %p104 = scmp.ne.s32.totalorder %s90, %s91
    %p105 = scmp.eq.s32.totalorder %s15, 2
    %p106 = por %p104, %p105
    %p108 = scmp.ne.s32.totalorder %s91, %s107
    %p109 = scmp.eq.s32.totalorder %s15, 0
    %p110 = por %p108, %p109
    %p111 = scmp.le.s32.totalorder 1, %s9
    %p112 = scmp.lt.s32.totalorder %s9, 4
    %p113 = pnand %p111, %p112
    %p114 = pneg %p113
    // Predicated region
    $region9: #{schnet_interaction.2} parent=5 // pred_check
      _
    $region10: #{schnet_interaction.2} parent=5 // pred_check_branch
      %116 = sbr.rel (%p113) target = $region12
    $region11: #{schnet_interaction.2} parent=5 // pred_region
      %s117 = ssub.s32 %s9, 1
      // Predicated region
      $region13: #{schnet_interaction.2} parent=11 // pred_check
        %p118 = pneg %p56
      $region14: #{schnet_interaction.2} parent=11 // pred_check_branch
        %120 = sbr.rel (%p118) target = $region16
      $region15: #{schnet_interaction.2} parent=11 // pred_region
        _
      $region16: #{schnet_interaction.2} parent=11 // pred_fallthru
        _
      // Predicated region
      $region17: #{schnet_interaction.2} parent=11 // pred_check
        %p121 = pneg %p77
      $region18: #{schnet_interaction.2} parent=11 // pred_check_branch
        %123 = sbr.rel (%p121) target = $region20
      $region19: #{schnet_interaction.2} parent=11 // pred_region
        _
      $region20: #{schnet_interaction.2} parent=11 // pred_fallthru
        _
    $region12: #{schnet_interaction.2} parent=5 // pred_fallthru
      _
    %p124 = scmp.lt.s32.totalorder %s9, 3
    // Predicated region
    $region21: #{schnet_interaction.2} parent=5 // pred_check
      %p125 = pneg %p124
    $region22: #{schnet_interaction.2} parent=5 // pred_check_branch
      %127 = sbr.rel (%p125) target = $region24
    $region23: #{schnet_interaction.2} parent=5 // pred_region
      // Predicated region
      $region25: #{schnet_interaction.2} parent=23 // pred_check
        %p128 = pneg %p29
      $region26: #{schnet_interaction.2} parent=23 // pred_check_branch
        %130 = sbr.rel (%p128) target = $region28
      $region27: #{schnet_interaction.2} parent=23 // pred_region
        %p131 = scmp.lt.s32.totalorder %s9, 2
        %s132 = scalar_select %p131, %s9, 2
        %s133 = smul.addr %s132, 8
        %s134 = scalar_lea.vmem %s0, %s133
      $region28: #{schnet_interaction.2} parent=23 // pred_fallthru
        _
    $region24: #{schnet_interaction.2} parent=5 // pred_fallthru
      _
    %p135 = scmp.le.s32.totalorder 1, %s9
    %p136 = scmp.lt.s32.totalorder %s9, 4
    %p137 = pnand %p135, %p136
    %p138 = pneg %p137
    // Predicated region
    $region29: #{schnet_interaction.2} parent=5 // pred_check
      _
    $region30: #{schnet_interaction.2} parent=5 // pred_check_branch
      %140 = sbr.rel (%p137) target = $region32
    $region31: #{schnet_interaction.2} parent=5 // pred_region
      %s141 = ssub.s32 %s9, 1
      %p142 = scmp.lt.s32.totalorder %s14, 2
      %s143 = scalar_select %p142, %s14, 2
      %s144 = smul.addr %s143, 8
      %s145 = scalar_lea.vmem %s0, %s144
      %p146 = pneg %p35
      %p147 = pneg %p32
      %p148 = pneg %p56
      %p149 = pneg %p53
      %p150 = pneg %p77
      %p151 = pneg %p74
      %p152 = pneg %p103
      %p153 = pneg %p100
      %p154 = scmp.lt.s32.totalorder %s14, 2
      %s155 = scalar_select %p154, %s14, 2
      %s156 = smul.addr %s155, 8
      %s157 = scalar_lea.vmem %s3, %s156
      %p158 = scmp.lt.s32.totalorder %s14, 2
      %s159 = scalar_select %p158, %s14, 2
      %s160 = smul.addr %s159, 8
      %s161 = scalar_lea.vmem %s0, %s160
      %p162 = scmp.lt.s32.totalorder %s14, 2
      %s163 = scalar_select %p162, %s14, 2
      %s164 = smul.addr %s163, 8
      %s165 = scalar_lea.vmem %s3, %s164
      %v166 = vld [vmem:[%s161] sm:$0xff]
      %v167 = vld [vmem:[%s1] sm:$0xff]
      %v168 = vld [vmem:[%s1 + $0x8] sm:$0xff]
      %v169 = vld [vmem:[%s1 + $0x10] sm:$0xff]
      %v170 = vld [vmem:[%s1 + $0x18] sm:$0xff]
      %v171 = vld [vmem:[%s1 + $0x20] sm:$0xff]
      %v172 = vld [vmem:[%s1 + $0x28] sm:$0xff]
      %v173 = vld [vmem:[%s1 + $0x30] sm:$0xff]
      %v174 = vld [vmem:[%s1 + $0x38] sm:$0xff]
      %v175 = vld [vmem:[%s1 + $0x40] sm:$0xff]
      %v176 = vld [vmem:[%s1 + $0x48] sm:$0xff]
      %v177 = vld [vmem:[%s1 + $0x50] sm:$0xff]
      %v178 = vld [vmem:[%s1 + $0x58] sm:$0xff]
      %v179 = vld [vmem:[%s1 + $0x60] sm:$0xff]
      %v180 = vld [vmem:[%s1 + $0x68] sm:$0xff]
      %v181 = vld [vmem:[%s1 + $0x70] sm:$0xff]
      %v182 = vld [vmem:[%s1 + $0x78] sm:$0xff]
      %v183 = vld [vmem:[%s2] sm:$0x1]
      %v185 = vlaneseq
      %v186 = vshrl.u32 %v185, 7
      %v187 = vsub.s32 0, %v186
      %v188 = vrot.slane %v183, %v187
      %190 = vmatprep.subr.mxu0 0.0
      %191 = vmatpush1.msra.mxu0 %v167
      %192 = vmatprep.subr.mxu0 0.0
      %193 = vmatpush1.msra.mxu0 %v168
      %194 = vmatprep.subr.mxu0 0.0
      %195 = vmatpush1.msra.mxu0 %v169
      %196 = vmatprep.subr.mxu0 0.0
      %197 = vmatpush1.msra.mxu0 %v170
      %198 = vmatprep.subr.mxu0 0.0
      %199 = vmatpush1.msra.mxu0 %v171
      %200 = vmatprep.subr.mxu0 0.0
      %201 = vmatpush1.msra.mxu0 %v172
      %202 = vmatprep.subr.mxu0 0.0
      %203 = vmatpush1.msra.mxu0 %v173
      %204 = vmatprep.subr.mxu0 0.0
      %205 = vmatpush1.msra.mxu0 %v174
      %206 = vmatprep.subr.mxu0 0.0
      %207 = vmatpush1.msra.mxu0 %v175
      %208 = vmatprep.subr.mxu0 0.0
      %209 = vmatpush1.msra.mxu0 %v176
      %210 = vmatprep.subr.mxu0 0.0
      %211 = vmatpush1.msra.mxu0 %v177
      %212 = vmatprep.subr.mxu0 0.0
      %213 = vmatpush1.msra.mxu0 %v178
      %214 = vmatprep.subr.mxu0 0.0
      %215 = vmatpush1.msra.mxu0 %v179
      %216 = vmatprep.subr.mxu0 0.0
      %217 = vmatpush1.msra.mxu0 %v180
      %218 = vmatprep.subr.mxu0 0.0
      %219 = vmatpush1.msra.mxu0 %v181
      %220 = vmatprep.subr.mxu0 0.0
      %221 = vmatpush1.msra.mxu0 %v182
      %222 = vmatprep.subr.mxu0 0.0
      %223 = vmatpush1.msra.mxu0 0.0
      %224 = vmatprep.subr.mxu0 0.0
      %225 = vmatpush1.msra.mxu0 0.0
      %226 = vmatprep.subr.mxu0 0.0
      %227 = vmatpush1.msra.mxu0 0.0
      %228 = vmatprep.subr.mxu0 0.0
      %229 = vmatpush1.msra.mxu0 0.0
      %230 = vmatprep.subr.mxu0 0.0
      %231 = vmatpush1.msra.mxu0 0.0
      %232 = vmatprep.subr.mxu0 0.0
      %233 = vmatpush1.msra.mxu0 0.0
      %234 = vmatprep.subr.mxu0 0.0
      %235 = vmatpush1.msra.mxu0 0.0
      %236 = vmatprep.subr.mxu0 0.0
      %237 = vmatpush1.msra.mxu0 0.0
      %238 = vmatprep.subr.mxu0 0.0
      %239 = vmatpush1.msra.mxu0 0.0
      %240 = vmatprep.subr.mxu0 0.0
      %241 = vmatpush1.msra.mxu0 0.0
      %242 = vmatprep.subr.mxu0 0.0
      %243 = vmatpush1.msra.mxu0 0.0
      %244 = vmatprep.subr.mxu0 0.0
      %245 = vmatpush1.msra.mxu0 0.0
      %246 = vmatprep.subr.mxu0 0.0
      %247 = vmatpush1.msra.mxu0 0.0
      %248 = vmatprep.subr.mxu0 0.0
      %249 = vmatpush1.msra.mxu0 0.0
      %250 = vmatprep.subr.mxu0 0.0
      %251 = vmatpush1.msra.mxu0 0.0
      %252 = vmatprep.subr.mxu0 0.0
      %253 = vmatpush1.msra.mxu0 0.0
      %254 = vmatprep.mubr.f32.mxu0 0.0
      %255 = vmatmul.mubr.f32.gmra.mrb[0].mxu0 %v166
      %v256 = vpop.f32.mrb[0].mxu0
      %v257 = vadd.f32 %v188, %v256
      %v258 = vpop.f32.mrb[0].mxu0
      %259 = vdwg.mxu0
      %260 = vst [vmem:[%s165] sm:$0xff] %v257
      %p261 = scmp.lt.s32.totalorder %s14, 2
      %s262 = scalar_select %p261, %s14, 2
      %s263 = smul.addr %s262, 8
      %s264 = scalar_lea.vmem %s3, %s263
      // Predicated region
      $region33: #{schnet_interaction.2} parent=31 // pred_check
        %p265 = pneg %p100
      $region34: #{schnet_interaction.2} parent=31 // pred_check_branch
        %267 = sbr.rel (%p265) target = $region36
      $region35: #{schnet_interaction.2} parent=31 // pred_region
        _
      $region36: #{schnet_interaction.2} parent=31 // pred_fallthru
        _
    $region32: #{schnet_interaction.2} parent=5 // pred_fallthru
      _
    %p268 = scmp.le.s32.totalorder 2, %s9
    // Predicated region
    $region37: #{schnet_interaction.2} parent=5 // pred_check
      %p269 = pneg %p268
    $region38: #{schnet_interaction.2} parent=5 // pred_check_branch
      %271 = sbr.rel (%p269) target = $region40
    $region39: #{schnet_interaction.2} parent=5 // pred_region
      %s272 = ssub.s32 %s9, 2
      // Predicated region
      $region41: #{schnet_interaction.2} parent=39 // pred_check
        %p273 = pneg %p106
      $region42: #{schnet_interaction.2} parent=39 // pred_check_branch
        %275 = sbr.rel (%p273) target = $region44
      $region43: #{schnet_interaction.2} parent=39 // pred_region
        %p276 = scmp.lt.s32.totalorder %s15, 2
        %s277 = scalar_select %p276, %s15, 2
        %s278 = smul.addr %s277, 8
        %s279 = scalar_lea.vmem %s3, %s278
      $region44: #{schnet_interaction.2} parent=39 // pred_fallthru
        _
    $region40: #{schnet_interaction.2} parent=5 // pred_fallthru
      _
  $region6: #{schnet_interaction.2} parent=0 // loop_footer
    %s13 = sadd.s32 1, %s9
  $region7: #{schnet_interaction.2} parent=0 // loop_footer_branch
    %8 = sbr.rel target = $region3
  $region8: #{schnet_interaction.2} parent=0 // loop_exit
    _

// kernel: schnet_interaction.3
$region0: #{schnet_interaction.3}
  #allocation0 [shape = 'u32[]', space=smem, size = 0x4, offset = 0x4, fixed_abs, tag = 'smem constant byte address 0x4 - core index']
  #allocation1 [shape = 'u32[144,128]{1,0:T(1,128)}', space=vmem, size = 0x12000, scoped, tag = 'internal scratch']
  #allocation2 [shape = 'f32[8,128]{1,0:T(8,128)}', space=vmem, size = 0x1000, scoped, tag = 'scratch operand']
  #allocation3 [shape = 's32[1]{0}', space=sflag, size = 0x4, scoped, tag = 'scoped memory for schnet_interaction.3']
  #allocation4 [shape = 'u8[512]{0}', space=smem, size = 0x200, scoped, tag = 'prefetched SMEM operand 0']
  #allocation5 [shape = 'u8[512]{0}', space=smem, size = 0x200, scoped, tag = 'prefetched SMEM operand 1']
  #allocation6 [shape = 'u8[512]{0}', space=smem, size = 0x200, scoped, tag = 'prefetched SMEM operand 2']
  #allocation7 [shape = 'u8[512]{0}', space=smem, size = 0x200, scoped, tag = 'prefetched SMEM operand 3']
  #allocation8 [shape = 'u8[512]{0}', space=smem, size = 0x200, scoped, tag = 'prefetched SMEM operand 4']
  %s0 = inlined_call_operand.vmem [shape: s32[5], index: 0, kind: input, shape index: {}]
  %s1 = inlined_call_operand.vmem [shape: s32[5], index: 1, kind: input, shape index: {}]
  %s2 = inlined_call_operand.vmem [shape: s32[5], index: 2, kind: input, shape index: {}]
  %s3 = inlined_call_operand.vmem [shape: s32[5], index: 3, kind: input, shape index: {}]
  %s4 = inlined_call_operand.vmem [shape: s32[5], index: 4, kind: input, shape index: {}]
  %s5 = inlined_call_operand.vmem [shape: s32[1,256], index: 5, kind: input, shape index: {}]
  %s6 = inlined_call_operand.vmem [shape: f32[256,128], index: 6, kind: input, shape index: {}]
  %s7 = inlined_call_operand.vmem [shape: f32[256,128], index: 7, kind: input, shape index: {}]
  %s8 = inlined_call_operand.vmem [shape: f32[24,128], index: 8, kind: input, shape index: {}]
  %s9 = inlined_call_operand.vmem [shape: f32[128,128], index: 9, kind: input, shape index: {}]
  %s10 = inlined_call_operand.vmem [shape: f32[1,128], index: 10, kind: input, shape index: {}]
  %s11 = inlined_call_operand.vmem [shape: f32[128,128], index: 11, kind: input, shape index: {}]
  %s12 = inlined_call_operand.vmem [shape: f32[1,128], index: 12, kind: input, shape index: {}]
  %s13 = inlined_call_operand.vmem [shape: f32[128,128], index: 13, kind: input, shape index: {}]
  %s14 = inlined_call_operand.vmem [shape: f32[1,128], index: 14, kind: input, shape index: {}]
  %s15 = inlined_call_operand.vmem [shape: f32[128,128], index: 15, kind: input, shape index: {}]
  %s16 = inlined_call_operand.vmem [shape: f32[1,128], index: 16, kind: input, shape index: {}]
  %s17 = inlined_call_operand.vmem [shape: f32[128,128], index: 17, kind: input, shape index: {}]
  %s18 = inlined_call_operand.vmem [shape: f32[1,128], index: 18, kind: input, shape index: {}]
  %s19 = inlined_call_operand.vmem [shape: f32[128,128], index: 19, kind: input, shape index: {}]
  %s20 = inlined_call_operand.vmem [shape: f32[1,128], index: 20, kind: input, shape index: {}]
  %s21 = inlined_call_operand.hbm [shape: f32[24,128], index: 21, kind: output, shape index: {}]
  %s22 = sld [smem:[#allocation0]]
  $region109: #{schnet_interaction.3} parent=0
    _
  %s24 = ssub.s32 1, %s22
  %s25 = scalar_select 0, %s24, %s22
  %s26 = sshll.u32 %s0, 4
  %s27 = int_to_ptr.vmem [resolvable:$true] %s26
  %29 = dma.vmem_to_smem %s27, 16, [#allocation4], [#allocation3]
  %s30 = sshll.u32 %s1, 4
  %s31 = int_to_ptr.vmem [resolvable:$true] %s30
  %33 = dma.vmem_to_smem %s31, 16, [#allocation5], [#allocation3]
  %s34 = sshll.u32 %s2, 4
  %s35 = int_to_ptr.vmem [resolvable:$true] %s34
  %37 = dma.vmem_to_smem %s35, 16, [#allocation6], [#allocation3]
  %s38 = sshll.u32 %s3, 4
  %s39 = int_to_ptr.vmem [resolvable:$true] %s38
  %41 = dma.vmem_to_smem %s39, 16, [#allocation7], [#allocation3]
  %s42 = sshll.u32 %s4, 4
  %s43 = int_to_ptr.vmem [resolvable:$true] %s42
  %45 = dma.vmem_to_smem %s43, 16, [#allocation8], [#allocation3]
  %46 = dma.done [#allocation3], 80
  %47 = sfence
  $region1: #{schnet_interaction.3} parent=0
    #allocation9 [shape = 'u8[8192]{0}', space=vmem, size = 0x2000, scoped, tag = 'output window, operand 0']
    #allocation10 [shape = 's32[2]{0}', space=sflag, size = 0x8, scoped, tag = 'scoped memory for schnet_interaction.3']
    %48 = vsyncpa [#allocation10], 0
    %s49 = scalar_lea.sflag [#allocation10], 1
    %50 = vsyncpa %s49, 0
    loop: start=0, step=1, limit=7
    $region2: #{schnet_interaction.3} parent=1 // loop_pre_header
      _
    $region3: #{schnet_interaction.3} parent=1 // loop_header
      %s52 = sphi 0, %s56
      %p53 = scmp.ge.s32.totalorder %s52, 7
      %s64 = sphi 0, %s66
      %s67 = sphi 0, %s64
      %s68 = sphi 0, %s67
      %s84 = sphi 0, %s68
      %s92 = sphi 0, %s94
      %s95 = sphi 0, %s92
      %s96 = sphi 0, %s95
      %s112 = sphi 0, %s96
      %s120 = sphi 0, %s122
      %s123 = sphi 0, %s120
      %s124 = sphi 0, %s123
      %s140 = sphi 0, %s124
      %s148 = sphi 0, %s150
      %s151 = sphi 0, %s148
      %s152 = sphi 0, %s151
      %s168 = sphi 0, %s152
      %s172 = sphi 0, %s172
      %s174 = sphi 0, %s172
      %s175 = sphi 0, %s174
      %s189 = sphi 0, %s175
      %s193 = sphi 0, %s193
      %s195 = sphi 0, %s193
      %s196 = sphi 0, %s195
      %s210 = sphi 0, %s196
      %s214 = sphi 0, %s214
      %s216 = sphi 0, %s214
      %s217 = sphi 0, %s216
      %s231 = sphi 0, %s217
      %s235 = sphi 0, %s235
      %s237 = sphi 0, %s235
      %s238 = sphi 0, %s237
      %s252 = sphi 0, %s238
      %s256 = sphi 0, %s256
      %s258 = sphi 0, %s256
      %s259 = sphi 0, %s258
      %s273 = sphi 0, %s259
      %s277 = sphi 0, %s277
      %s279 = sphi 0, %s277
      %s280 = sphi 0, %s279
      %s294 = sphi 0, %s280
      %s298 = sphi 0, %s298
      %s300 = sphi 0, %s298
      %s301 = sphi 0, %s300
      %s315 = sphi 0, %s301
      %s319 = sphi 0, %s319
      %s321 = sphi 0, %s319
      %s322 = sphi 0, %s321
      %s336 = sphi 0, %s322
      %s340 = sphi 0, %s340
      %s342 = sphi 0, %s340
      %s343 = sphi 0, %s342
      %s357 = sphi 0, %s343
      %s361 = sphi 0, %s361
      %s363 = sphi 0, %s361
      %s364 = sphi 0, %s363
      %s378 = sphi 0, %s364
      %s382 = sphi 0, %s382
      %s384 = sphi 0, %s382
      %s385 = sphi 0, %s384
      %s399 = sphi 0, %s385
      %s403 = sphi 0, %s403
      %s405 = sphi 0, %s403
      %s406 = sphi 0, %s405
      %s420 = sphi 0, %s406
      %s428 = sphi 0, %s430
      %s431 = sphi 0, %s428
      %s432 = sphi 0, %s431
      %s448 = sphi 0, %s432
    $region4: #{schnet_interaction.3} parent=1 // loop_header_branch
      %55 = sbr.rel (%p53) target = $region8
    $region5: #{schnet_interaction.3} parent=1 // loop_body
      %s57 = ssub.s32 %s52, 1
      %s58 = ssub.s32 %s52, 2
      %s59 = sadd.s32 %s52, 1
      %s60 = sld [smem:[#allocation5 + %s52]]
      %s61 = sld [smem:[#allocation5 + %s59]]
      %s62 = ssub.s32 %s60, %s61
      %p63 = scmp.eq.s32.totalorder %s62, 0
      %s65 = sadd.s32 %s64, 1
      %s66 = scalar_select %p63, %s64, %s65
      %p69 = pneg %p63
      %p70 = scmp.eq.s32.totalorder %s52, 4
      %p71 = por %p69, %p70
      %p72 = scmp.ne.s32.totalorder %s64, %s67
      %p73 = scmp.eq.s32.totalorder %s52, 0
      %p74 = por %p72, %p73
      %p75 = scmp.ne.s32.totalorder %s64, %s67
      %p76 = scmp.eq.s32.totalorder %s57, 4
      %p77 = por %p75, %p76
      %p78 = scmp.ne.s32.totalorder %s67, %s68
      %p79 = scmp.eq.s32.totalorder %s57, 0
      %p80 = por %p78, %p79
      %p81 = scmp.ne.s32.totalorder %s67, %s68
      %p82 = scmp.eq.s32.totalorder %s58, 4
      %p83 = por %p81, %p82
      %p85 = scmp.ne.s32.totalorder %s68, %s84
      %p86 = scmp.eq.s32.totalorder %s58, 0
      %p87 = por %p85, %p86
      %s88 = sld [smem:[#allocation5 + %s52]]
      %s89 = sld [smem:[#allocation5 + %s59]]
      %s90 = ssub.s32 %s88, %s89
      %p91 = scmp.eq.s32.totalorder %s90, 0
      %s93 = sadd.s32 %s92, 1
      %s94 = scalar_select %p91, %s92, %s93
      %p97 = pneg %p91
      %p98 = scmp.eq.s32.totalorder %s52, 4
      %p99 = por %p97, %p98
      %p100 = scmp.ne.s32.totalorder %s92, %s95
      %p101 = scmp.eq.s32.totalorder %s52, 0
      %p102 = por %p100, %p101
      %p103 = scmp.ne.s32.totalorder %s92, %s95
      %p104 = scmp.eq.s32.totalorder %s57, 4
      %p105 = por %p103, %p104
      %p106 = scmp.ne.s32.totalorder %s95, %s96
      %p107 = scmp.eq.s32.totalorder %s57, 0
      %p108 = por %p106, %p107
      %p109 = scmp.ne.s32.totalorder %s95, %s96
      %p110 = scmp.eq.s32.totalorder %s58, 4
      %p111 = por %p109, %p110
      %p113 = scmp.ne.s32.totalorder %s96, %s112
      %p114 = scmp.eq.s32.totalorder %s58, 0
      %p115 = por %p113, %p114
      %s116 = sld [smem:[#allocation5 + %s52]]
      %s117 = sld [smem:[#allocation5 + %s59]]
      %s118 = ssub.s32 %s116, %s117
      %p119 = scmp.eq.s32.totalorder %s118, 0
      %s121 = sadd.s32 %s120, 1
      %s122 = scalar_select %p119, %s120, %s121
      %p125 = pneg %p119
      %p126 = scmp.eq.s32.totalorder %s52, 4
      %p127 = por %p125, %p126
      %p128 = scmp.ne.s32.totalorder %s120, %s123
      %p129 = scmp.eq.s32.totalorder %s52, 0
      %p130 = por %p128, %p129
      %p131 = scmp.ne.s32.totalorder %s120, %s123
      %p132 = scmp.eq.s32.totalorder %s57, 4
      %p133 = por %p131, %p132
      %p134 = scmp.ne.s32.totalorder %s123, %s124
      %p135 = scmp.eq.s32.totalorder %s57, 0
      %p136 = por %p134, %p135
      %p137 = scmp.ne.s32.totalorder %s123, %s124
      %p138 = scmp.eq.s32.totalorder %s58, 4
      %p139 = por %p137, %p138
      %p141 = scmp.ne.s32.totalorder %s124, %s140
      %p142 = scmp.eq.s32.totalorder %s58, 0
      %p143 = por %p141, %p142
      %s144 = sld [smem:[#allocation4 + %s52]]
      %s145 = sld [smem:[#allocation4 + %s59]]
      %s146 = ssub.s32 %s144, %s145
      %p147 = scmp.eq.s32.totalorder %s146, 0
      %s149 = sadd.s32 %s148, 1
      %s150 = scalar_select %p147, %s148, %s149
      %p153 = pneg %p147
      %p154 = scmp.eq.s32.totalorder %s52, 4
      %p155 = por %p153, %p154
      %p156 = scmp.ne.s32.totalorder %s148, %s151
      %p157 = scmp.eq.s32.totalorder %s52, 0
      %p158 = por %p156, %p157
      %p159 = scmp.ne.s32.totalorder %s148, %s151
      %p160 = scmp.eq.s32.totalorder %s57, 4
      %p161 = por %p159, %p160
      %p162 = scmp.ne.s32.totalorder %s151, %s152
      %p163 = scmp.eq.s32.totalorder %s57, 0
      %p164 = por %p162, %p163
      %p165 = scmp.ne.s32.totalorder %s151, %s152
      %p166 = scmp.eq.s32.totalorder %s58, 4
      %p167 = por %p165, %p166
      %p169 = scmp.ne.s32.totalorder %s152, %s168
      %p170 = scmp.eq.s32.totalorder %s58, 0
      %p171 = por %p169, %p170
      %s173 = sadd.s32 %s172, 1
      %p176 = scmp.eq.s32.totalorder %s52, 4
      %p177 = scmp.ne.s32.totalorder %s172, %s174
      %p178 = scmp.eq.s32.totalorder %s52, 0
      %p179 = por %p177, %p178
      %p180 = scmp.ne.s32.totalorder %s172, %s174
      %p181 = scmp.eq.s32.totalorder %s57, 4
      %p182 = por %p180, %p181
      %p183 = scmp.ne.s32.totalorder %s174, %s175
      %p184 = scmp.eq.s32.totalorder %s57, 0
      %p185 = por %p183, %p184
      %p186 = scmp.ne.s32.totalorder %s174, %s175
      %p187 = scmp.eq.s32.totalorder %s58, 4
      %p188 = por %p186, %p187
      %p190 = scmp.ne.s32.totalorder %s175, %s189
      %p191 = scmp.eq.s32.totalorder %s58, 0
      %p192 = por %p190, %p191
      %s194 = sadd.s32 %s193, 1
      %p197 = scmp.eq.s32.totalorder %s52, 4
      %p198 = scmp.ne.s32.totalorder %s193, %s195
      %p199 = scmp.eq.s32.totalorder %s52, 0
      %p200 = por %p198, %p199
      %p201 = scmp.ne.s32.totalorder %s193, %s195
      %p202 = scmp.eq.s32.totalorder %s57, 4
      %p203 = por %p201, %p202
      %p204 = scmp.ne.s32.totalorder %s195, %s196
      %p205 = scmp.eq.s32.totalorder %s57, 0
      %p206 = por %p204, %p205
      %p207 = scmp.ne.s32.totalorder %s195, %s196
      %p208 = scmp.eq.s32.totalorder %s58, 4
      %p209 = por %p207, %p208
      %p211 = scmp.ne.s32.totalorder %s196, %s210
      %p212 = scmp.eq.s32.totalorder %s58, 0
      %p213 = por %p211, %p212
      %s215 = sadd.s32 %s214, 1
      %p218 = scmp.eq.s32.totalorder %s52, 4
      %p219 = scmp.ne.s32.totalorder %s214, %s216
      %p220 = scmp.eq.s32.totalorder %s52, 0
      %p221 = por %p219, %p220
      %p222 = scmp.ne.s32.totalorder %s214, %s216
      %p223 = scmp.eq.s32.totalorder %s57, 4
      %p224 = por %p222, %p223
      %p225 = scmp.ne.s32.totalorder %s216, %s217
      %p226 = scmp.eq.s32.totalorder %s57, 0
      %p227 = por %p225, %p226
      %p228 = scmp.ne.s32.totalorder %s216, %s217
      %p229 = scmp.eq.s32.totalorder %s58, 4
      %p230 = por %p228, %p229
      %p232 = scmp.ne.s32.totalorder %s217, %s231
      %p233 = scmp.eq.s32.totalorder %s58, 0
      %p234 = por %p232, %p233
      %s236 = sadd.s32 %s235, 1
      %p239 = scmp.eq.s32.totalorder %s52, 4
      %p240 = scmp.ne.s32.totalorder %s235, %s237
      %p241 = scmp.eq.s32.totalorder %s52, 0
      %p242 = por %p240, %p241
      %p243 = scmp.ne.s32.totalorder %s235, %s237
      %p244 = scmp.eq.s32.totalorder %s57, 4
      %p245 = por %p243, %p244
      %p246 = scmp.ne.s32.totalorder %s237, %s238
      %p247 = scmp.eq.s32.totalorder %s57, 0
      %p248 = por %p246, %p247
      %p249 = scmp.ne.s32.totalorder %s237, %s238
      %p250 = scmp.eq.s32.totalorder %s58, 4
      %p251 = por %p249, %p250
      %p253 = scmp.ne.s32.totalorder %s238, %s252
      %p254 = scmp.eq.s32.totalorder %s58, 0
      %p255 = por %p253, %p254
      %s257 = sadd.s32 %s256, 1
      %p260 = scmp.eq.s32.totalorder %s52, 4
      %p261 = scmp.ne.s32.totalorder %s256, %s258
      %p262 = scmp.eq.s32.totalorder %s52, 0
      %p263 = por %p261, %p262
      %p264 = scmp.ne.s32.totalorder %s256, %s258
      %p265 = scmp.eq.s32.totalorder %s57, 4
      %p266 = por %p264, %p265
      %p267 = scmp.ne.s32.totalorder %s258, %s259
      %p268 = scmp.eq.s32.totalorder %s57, 0
      %p269 = por %p267, %p268
      %p270 = scmp.ne.s32.totalorder %s258, %s259
      %p271 = scmp.eq.s32.totalorder %s58, 4
      %p272 = por %p270, %p271
      %p274 = scmp.ne.s32.totalorder %s259, %s273
      %p275 = scmp.eq.s32.totalorder %s58, 0
      %p276 = por %p274, %p275
      %s278 = sadd.s32 %s277, 1
      %p281 = scmp.eq.s32.totalorder %s52, 4
      %p282 = scmp.ne.s32.totalorder %s277, %s279
      %p283 = scmp.eq.s32.totalorder %s52, 0
      %p284 = por %p282, %p283
      %p285 = scmp.ne.s32.totalorder %s277, %s279
      %p286 = scmp.eq.s32.totalorder %s57, 4
      %p287 = por %p285, %p286
      %p288 = scmp.ne.s32.totalorder %s279, %s280
      %p289 = scmp.eq.s32.totalorder %s57, 0
      %p290 = por %p288, %p289
      %p291 = scmp.ne.s32.totalorder %s279, %s280
      %p292 = scmp.eq.s32.totalorder %s58, 4
      %p293 = por %p291, %p292
      %p295 = scmp.ne.s32.totalorder %s280, %s294
      %p296 = scmp.eq.s32.totalorder %s58, 0
      %p297 = por %p295, %p296
      %s299 = sadd.s32 %s298, 1
      %p302 = scmp.eq.s32.totalorder %s52, 4
      %p303 = scmp.ne.s32.totalorder %s298, %s300
      %p304 = scmp.eq.s32.totalorder %s52, 0
      %p305 = por %p303, %p304
      %p306 = scmp.ne.s32.totalorder %s298, %s300
      %p307 = scmp.eq.s32.totalorder %s57, 4
      %p308 = por %p306, %p307
      %p309 = scmp.ne.s32.totalorder %s300, %s301
      %p310 = scmp.eq.s32.totalorder %s57, 0
      %p311 = por %p309, %p310
      %p312 = scmp.ne.s32.totalorder %s300, %s301
      %p313 = scmp.eq.s32.totalorder %s58, 4
      %p314 = por %p312, %p313
      %p316 = scmp.ne.s32.totalorder %s301, %s315
      %p317 = scmp.eq.s32.totalorder %s58, 0
      %p318 = por %p316, %p317
      %s320 = sadd.s32 %s319, 1
      %p323 = scmp.eq.s32.totalorder %s52, 4
      %p324 = scmp.ne.s32.totalorder %s319, %s321
      %p325 = scmp.eq.s32.totalorder %s52, 0
      %p326 = por %p324, %p325
      %p327 = scmp.ne.s32.totalorder %s319, %s321
      %p328 = scmp.eq.s32.totalorder %s57, 4
      %p329 = por %p327, %p328
      %p330 = scmp.ne.s32.totalorder %s321, %s322
      %p331 = scmp.eq.s32.totalorder %s57, 0
      %p332 = por %p330, %p331
      %p333 = scmp.ne.s32.totalorder %s321, %s322
      %p334 = scmp.eq.s32.totalorder %s58, 4
      %p335 = por %p333, %p334
      %p337 = scmp.ne.s32.totalorder %s322, %s336
      %p338 = scmp.eq.s32.totalorder %s58, 0
      %p339 = por %p337, %p338
      %s341 = sadd.s32 %s340, 1
      %p344 = scmp.eq.s32.totalorder %s52, 4
      %p345 = scmp.ne.s32.totalorder %s340, %s342
      %p346 = scmp.eq.s32.totalorder %s52, 0
      %p347 = por %p345, %p346
      %p348 = scmp.ne.s32.totalorder %s340, %s342
      %p349 = scmp.eq.s32.totalorder %s57, 4
      %p350 = por %p348, %p349
      %p351 = scmp.ne.s32.totalorder %s342, %s343
      %p352 = scmp.eq.s32.totalorder %s57, 0
      %p353 = por %p351, %p352
      %p354 = scmp.ne.s32.totalorder %s342, %s343
      %p355 = scmp.eq.s32.totalorder %s58, 4
      %p356 = por %p354, %p355
      %p358 = scmp.ne.s32.totalorder %s343, %s357
      %p359 = scmp.eq.s32.totalorder %s58, 0
      %p360 = por %p358, %p359
      %s362 = sadd.s32 %s361, 1
      %p365 = scmp.eq.s32.totalorder %s52, 4
      %p366 = scmp.ne.s32.totalorder %s361, %s363
      %p367 = scmp.eq.s32.totalorder %s52, 0
      %p368 = por %p366, %p367
      %p369 = scmp.ne.s32.totalorder %s361, %s363
      %p370 = scmp.eq.s32.totalorder %s57, 4
      %p371 = por %p369, %p370
      %p372 = scmp.ne.s32.totalorder %s363, %s364
      %p373 = scmp.eq.s32.totalorder %s57, 0
      %p374 = por %p372, %p373
      %p375 = scmp.ne.s32.totalorder %s363, %s364
      %p376 = scmp.eq.s32.totalorder %s58, 4
      %p377 = por %p375, %p376
      %p379 = scmp.ne.s32.totalorder %s364, %s378
      %p380 = scmp.eq.s32.totalorder %s58, 0
      %p381 = por %p379, %p380
      %s383 = sadd.s32 %s382, 1
      %p386 = scmp.eq.s32.totalorder %s52, 4
      %p387 = scmp.ne.s32.totalorder %s382, %s384
      %p388 = scmp.eq.s32.totalorder %s52, 0
      %p389 = por %p387, %p388
      %p390 = scmp.ne.s32.totalorder %s382, %s384
      %p391 = scmp.eq.s32.totalorder %s57, 4
      %p392 = por %p390, %p391
      %p393 = scmp.ne.s32.totalorder %s384, %s385
      %p394 = scmp.eq.s32.totalorder %s57, 0
      %p395 = por %p393, %p394
      %p396 = scmp.ne.s32.totalorder %s384, %s385
      %p397 = scmp.eq.s32.totalorder %s58, 4
      %p398 = por %p396, %p397
      %p400 = scmp.ne.s32.totalorder %s385, %s399
      %p401 = scmp.eq.s32.totalorder %s58, 0
      %p402 = por %p400, %p401
      %s404 = sadd.s32 %s403, 1
      %p407 = scmp.eq.s32.totalorder %s52, 4
      %p408 = scmp.ne.s32.totalorder %s403, %s405
      %p409 = scmp.eq.s32.totalorder %s52, 0
      %p410 = por %p408, %p409
      %p411 = scmp.ne.s32.totalorder %s403, %s405
      %p412 = scmp.eq.s32.totalorder %s57, 4
      %p413 = por %p411, %p412
      %p414 = scmp.ne.s32.totalorder %s405, %s406
      %p415 = scmp.eq.s32.totalorder %s57, 0
      %p416 = por %p414, %p415
      %p417 = scmp.ne.s32.totalorder %s405, %s406
      %p418 = scmp.eq.s32.totalorder %s58, 4
      %p419 = por %p417, %p418
      %p421 = scmp.ne.s32.totalorder %s406, %s420
      %p422 = scmp.eq.s32.totalorder %s58, 0
      %p423 = por %p421, %p422
      %s424 = sld [smem:[#allocation4 + %s52]]
      %s425 = sld [smem:[#allocation4 + %s59]]
      %s426 = ssub.s32 %s424, %s425
      %p427 = scmp.eq.s32.totalorder %s426, 0
      %s429 = sadd.s32 %s428, 1
      %s430 = scalar_select %p427, %s428, %s429
      %p433 = pneg %p427
      %p434 = scmp.eq.s32.totalorder %s52, 4
      %p435 = por %p433, %p434
      %p436 = scmp.ne.s32.totalorder %s428, %s431
      %p437 = scmp.eq.s32.totalorder %s52, 0
      %p438 = por %p436, %p437
      %p439 = scmp.ne.s32.totalorder %s428, %s431
      %p440 = scmp.eq.s32.totalorder %s57, 4
      %p441 = por %p439, %p440
      %p442 = scmp.ne.s32.totalorder %s431, %s432
      %p443 = scmp.eq.s32.totalorder %s57, 0
      %p444 = por %p442, %p443
      %p445 = scmp.ne.s32.totalorder %s431, %s432
      %p446 = scmp.eq.s32.totalorder %s58, 4
      %p447 = por %p445, %p446
      %p449 = scmp.ne.s32.totalorder %s432, %s448
      %p450 = scmp.eq.s32.totalorder %s58, 0
      %p451 = por %p449, %p450
      %p452 = scmp.le.s32.totalorder 1, %s52
      %p453 = scmp.lt.s32.totalorder %s52, 6
      %p454 = pnand %p452, %p453
      %p455 = pneg %p454
      // Predicated region
      $region9: #{schnet_interaction.3} parent=5 // pred_check
        _
      $region10: #{schnet_interaction.3} parent=5 // pred_check_branch
        %457 = sbr.rel (%p454) target = $region12
      $region11: #{schnet_interaction.3} parent=5 // pred_region
        %s458 = ssub.s32 %s52, 1
        // Predicated region
        $region13: #{schnet_interaction.3} parent=11 // pred_check
          %p459 = pneg %p185
        $region14: #{schnet_interaction.3} parent=11 // pred_check_branch
          %461 = sbr.rel (%p459) target = $region16
        $region15: #{schnet_interaction.3} parent=11 // pred_region
          _
        $region16: #{schnet_interaction.3} parent=11 // pred_fallthru
          _
        // Predicated region
        $region17: #{schnet_interaction.3} parent=11 // pred_check
          %p462 = pneg %p206
        $region18: #{schnet_interaction.3} parent=11 // pred_check_branch
          %464 = sbr.rel (%p462) target = $region20
        $region19: #{schnet_interaction.3} parent=11 // pred_region
          _
        $region20: #{schnet_interaction.3} parent=11 // pred_fallthru
          _
        // Predicated region
        $region21: #{schnet_interaction.3} parent=11 // pred_check
          %p465 = pneg %p227
        $region22: #{schnet_interaction.3} parent=11 // pred_check_branch
          %467 = sbr.rel (%p465) target = $region24
        $region23: #{schnet_interaction.3} parent=11 // pred_region
          _
        $region24: #{schnet_interaction.3} parent=11 // pred_fallthru
          _
        // Predicated region
        $region25: #{schnet_interaction.3} parent=11 // pred_check
          %p468 = pneg %p248
        $region26: #{schnet_interaction.3} parent=11 // pred_check_branch
          %470 = sbr.rel (%p468) target = $region28
        $region27: #{schnet_interaction.3} parent=11 // pred_region
          _
        $region28: #{schnet_interaction.3} parent=11 // pred_fallthru
          _
        // Predicated region
        $region29: #{schnet_interaction.3} parent=11 // pred_check
          %p471 = pneg %p269
        $region30: #{schnet_interaction.3} parent=11 // pred_check_branch
          %473 = sbr.rel (%p471) target = $region32
        $region31: #{schnet_interaction.3} parent=11 // pred_region
          _
        $region32: #{schnet_interaction.3} parent=11 // pred_fallthru
          _
        // Predicated region
        $region33: #{schnet_interaction.3} parent=11 // pred_check
          %p474 = pneg %p290
        $region34: #{schnet_interaction.3} parent=11 // pred_check_branch
          %476 = sbr.rel (%p474) target = $region36
        $region35: #{schnet_interaction.3} parent=11 // pred_region
          _
        $region36: #{schnet_interaction.3} parent=11 // pred_fallthru
          _
        // Predicated region
        $region37: #{schnet_interaction.3} parent=11 // pred_check
          %p477 = pneg %p311
        $region38: #{schnet_interaction.3} parent=11 // pred_check_branch
          %479 = sbr.rel (%p477) target = $region40
        $region39: #{schnet_interaction.3} parent=11 // pred_region
          _
        $region40: #{schnet_interaction.3} parent=11 // pred_fallthru
          _
        // Predicated region
        $region41: #{schnet_interaction.3} parent=11 // pred_check
          %p480 = pneg %p332
        $region42: #{schnet_interaction.3} parent=11 // pred_check_branch
          %482 = sbr.rel (%p480) target = $region44
        $region43: #{schnet_interaction.3} parent=11 // pred_region
          _
        $region44: #{schnet_interaction.3} parent=11 // pred_fallthru
          _
        // Predicated region
        $region45: #{schnet_interaction.3} parent=11 // pred_check
          %p483 = pneg %p353
        $region46: #{schnet_interaction.3} parent=11 // pred_check_branch
          %485 = sbr.rel (%p483) target = $region48
        $region47: #{schnet_interaction.3} parent=11 // pred_region
          _
        $region48: #{schnet_interaction.3} parent=11 // pred_fallthru
          _
        // Predicated region
        $region49: #{schnet_interaction.3} parent=11 // pred_check
          %p486 = pneg %p374
        $region50: #{schnet_interaction.3} parent=11 // pred_check_branch
          %488 = sbr.rel (%p486) target = $region52
        $region51: #{schnet_interaction.3} parent=11 // pred_region
          _
        $region52: #{schnet_interaction.3} parent=11 // pred_fallthru
          _
        // Predicated region
        $region53: #{schnet_interaction.3} parent=11 // pred_check
          %p489 = pneg %p395
        $region54: #{schnet_interaction.3} parent=11 // pred_check_branch
          %491 = sbr.rel (%p489) target = $region56
        $region55: #{schnet_interaction.3} parent=11 // pred_region
          _
        $region56: #{schnet_interaction.3} parent=11 // pred_fallthru
          _
        // Predicated region
        $region57: #{schnet_interaction.3} parent=11 // pred_check
          %p492 = pneg %p416
        $region58: #{schnet_interaction.3} parent=11 // pred_check_branch
          %494 = sbr.rel (%p492) target = $region60
        $region59: #{schnet_interaction.3} parent=11 // pred_region
          _
        $region60: #{schnet_interaction.3} parent=11 // pred_fallthru
          _
      $region12: #{schnet_interaction.3} parent=5 // pred_fallthru
        _
      %p495 = scmp.lt.s32.totalorder %s52, 5
      // Predicated region
      $region61: #{schnet_interaction.3} parent=5 // pred_check
        %p496 = pneg %p495
      $region62: #{schnet_interaction.3} parent=5 // pred_check_branch
        %498 = sbr.rel (%p496) target = $region64
      $region63: #{schnet_interaction.3} parent=5 // pred_region
        // Predicated region
        $region65: #{schnet_interaction.3} parent=63 // pred_check
          %p499 = pneg %p74
        $region66: #{schnet_interaction.3} parent=63 // pred_check_branch
          %501 = sbr.rel (%p499) target = $region68
        $region67: #{schnet_interaction.3} parent=63 // pred_region
          %s502 = sld [smem:[#allocation5 + %s52]]
          %p503 = scmp.lt.s32.totalorder %s502, 1
          %s504 = scalar_select %p503, %s502, 1
          %s505 = scalar_lea.vmem %s5, %s504
          %s506 = sld [smem:[#allocation5 + %s52]]
        $region68: #{schnet_interaction.3} parent=63 // pred_fallthru
          _
        // Predicated region
        $region69: #{schnet_interaction.3} parent=63 // pred_check
          %p507 = pneg %p102
        $region70: #{schnet_interaction.3} parent=63 // pred_check_branch
          %509 = sbr.rel (%p507) target = $region72
        $region71: #{schnet_interaction.3} parent=63 // pred_region
          %s510 = sld [smem:[#allocation5 + %s52]]
          %s511 = smul.u32 16, %s510
          %p512 = scmp.lt.s32.totalorder %s511, 31
          %s513 = scalar_select %p512, %s511, 31
          %s514 = smul.addr %s513, 8
          %s515 = scalar_lea.vmem %s6, %s514
          %s516 = sld [smem:[#allocation5 + %s52]]
          %s517 = smul.u32 16, %s516
        $region72: #{schnet_interaction.3} parent=63 // pred_fallthru
          _
        // Predicated region
        $region73: #{schnet_interaction.3} parent=63 // pred_check
          %p518 = pneg %p130
        $region74: #{schnet_interaction.3} parent=63 // pred_check_branch
          %520 = sbr.rel (%p518) target = $region76
        $region75: #{schnet_interaction.3} parent=63 // pred_region
          %s521 = sld [smem:[#allocation5 + %s52]]
          %s522 = smul.u32 16, %s521
          %p523 = scmp.lt.s32.totalorder %s522, 31
          %s524 = scalar_select %p523, %s522, 31
          %s525 = smul.addr %s524, 8
          %s526 = scalar_lea.vmem %s7, %s525
          %s527 = sld [smem:[#allocation5 + %s52]]
          %s528 = smul.u32 16, %s527
        $region76: #{schnet_interaction.3} parent=63 // pred_fallthru
          _
        // Predicated region
        $region77: #{schnet_interaction.3} parent=63 // pred_check
          %p529 = pneg %p158
        $region78: #{schnet_interaction.3} parent=63 // pred_check_branch
          %531 = sbr.rel (%p529) target = $region80
        $region79: #{schnet_interaction.3} parent=63 // pred_region
          %s532 = sld [smem:[#allocation4 + %s52]]
          %p533 = scmp.lt.s32.totalorder %s532, 2
          %s534 = scalar_select %p533, %s532, 2
          %s535 = smul.addr %s534, 8
          %s536 = scalar_lea.vmem %s8, %s535
          %s537 = sld [smem:[#allocation4 + %s52]]
        $region80: #{schnet_interaction.3} parent=63 // pred_fallthru
          _
      $region64: #{schnet_interaction.3} parent=5 // pred_fallthru
        _
      %p538 = scmp.le.s32.totalorder 1, %s52
      %p539 = scmp.lt.s32.totalorder %s52, 6
      %p540 = pnand %p538, %p539
      %p541 = pneg %p540
      // Predicated region
      $region81: #{schnet_interaction.3} parent=5 // pred_check
        _
      $region82: #{schnet_interaction.3} parent=5 // pred_check_branch
        %543 = sbr.rel (%p540) target = $region84
      $region83: #{schnet_interaction.3} parent=5 // pred_region
        %s544 = ssub.s32 %s52, 1
        %s545 = sld [smem:[#allocation5 + %s57]]
        %p546 = scmp.lt.s32.totalorder %s545, 1
        %s547 = scalar_select %p546, %s545, 1
        %s548 = scalar_lea.vmem %s5, %s547
        %p549 = pneg %p80
        %p550 = pneg %p77
        %s551 = sld [smem:[#allocation5 + %s57]]
        %s552 = smul.u32 16, %s551
        %p553 = scmp.lt.s32.totalorder %s552, 31
        %s554 = scalar_select %p553, %s552, 31
        %s555 = smul.addr %s554, 8
        %s556 = scalar_lea.vmem %s6, %s555
        %p557 = pneg %p108
        %p558 = pneg %p105
        %s559 = sld [smem:[#allocation5 + %s57]]
        %s560 = smul.u32 16, %s559
        %p561 = scmp.lt.s32.totalorder %s560, 31
        %s562 = scalar_select %p561, %s560, 31
        %s563 = smul.addr %s562, 8
        %s564 = scalar_lea.vmem %s7, %s563
        %p565 = pneg %p136
        %p566 = pneg %p133
        %s567 = sld [smem:[#allocation4 + %s57]]
        %p568 = scmp.lt.s32.totalorder %s567, 2
        %s569 = scalar_select %p568, %s567, 2
        %s570 = smul.addr %s569, 8
        %s571 = scalar_lea.vmem %s8, %s570
        %p572 = pneg %p164
        %p573 = pneg %p161
        %p574 = pneg %p185
        %p575 = pneg %p182
        %p576 = pneg %p206
        %p577 = pneg %p203
        %p578 = pneg %p227
        %p579 = pneg %p224
        %p580 = pneg %p248
        %p581 = pneg %p245
        %p582 = pneg %p269
        %p583 = pneg %p266
        %p584 = pneg %p290
        %p585 = pneg %p287
        %p586 = pneg %p311
        %p587 = pneg %p308
        %p588 = pneg %p332
        %p589 = pneg %p329
        %p590 = pneg %p353
        %p591 = pneg %p350
        %p592 = pneg %p374
        %p593 = pneg %p371
        %p594 = pneg %p395
        %p595 = pneg %p392
        %p596 = pneg %p416
        %p597 = pneg %p413
        %p598 = pneg %p444
        %p599 = pneg %p441
        %s600 = sand.u32 %s431, 1
        %s601 = scalar_lea.sflag [#allocation10], %s600
        %s602 = sand.u32 %s431, 1
        %s603 = smul.addr %s602, 8
        %s604 = scalar_lea.vmem [#allocation9], %s603
        %s605 = sld [smem:[#allocation5 + %s57]]
        %p606 = scmp.lt.s32.totalorder %s605, 1
        %s607 = scalar_select %p606, %s605, 1
        %s608 = scalar_lea.vmem %s5, %s607
        %s609 = sld [smem:[#allocation5 + %s57]]
        %s610 = sld [smem:[#allocation5 + %s57]]
        %s611 = smul.u32 16, %s610
        %p612 = scmp.lt.s32.totalorder %s611, 31
        %s613 = scalar_select %p612, %s611, 31
        %s614 = smul.addr %s613, 8
        %s615 = scalar_lea.vmem %s6, %s614
        %s616 = sld [smem:[#allocation5 + %s57]]
        %s617 = smul.u32 16, %s616
        %s618 = sld [smem:[#allocation5 + %s57]]
        %s619 = smul.u32 16, %s618
        %p620 = scmp.lt.s32.totalorder %s619, 31
        %s621 = scalar_select %p620, %s619, 31
        %s622 = smul.addr %s621, 8
        %s623 = scalar_lea.vmem %s7, %s622
        %s624 = sld [smem:[#allocation5 + %s57]]
        %s625 = smul.u32 16, %s624
        %s626 = sld [smem:[#allocation4 + %s57]]
        %p627 = scmp.lt.s32.totalorder %s626, 2
        %s628 = scalar_select %p627, %s626, 2
        %s629 = smul.addr %s628, 8
        %s630 = scalar_lea.vmem %s8, %s629
        %s631 = sld [smem:[#allocation4 + %s57]]
        %s632 = sld [smem:[#allocation4 + %s57]]
        %s633 = sld [smem:[#allocation6 + %s57]]
        %p634 = scmp.eq.s32.totalorder %s633, 1
        // Predicated region
        $region85: #{schnet_interaction.3} parent=83 // pred_check
          %p635 = pneg %p634
        $region86: #{schnet_interaction.3} parent=83 // pred_check_branch
          %637 = sbr.rel (%p635) target = $region88
        $region87: #{schnet_interaction.3} parent=83 // pred_region
          %638 = vst [vmem:[#allocation2] sm:$0xff] 0.0
        $region88: #{schnet_interaction.3} parent=83 // pred_fallthru
          _
        %s639 = sld [smem:[#allocation8 + %s57]]
        %p640 = scmp.eq.s32.totalorder %s639, 1
        // Predicated region
        $region89: #{schnet_interaction.3} parent=83 // pred_check
          %p641 = pneg %p640
        $region90: #{schnet_interaction.3} parent=83 // pred_check_branch
          %643 = sbr.rel (%p641) target = $region92
        $region91: #{schnet_interaction.3} parent=83 // pred_region
          %v644 = vld [vmem:[%s615] sm:$0xff]
          %v645 = vld [vmem:[%s615 + $0x8] sm:$0xff]
          %v646 = vld [vmem:[%s615 + $0x10] sm:$0xff]
          %v647 = vld [vmem:[%s615 + $0x18] sm:$0xff]
          %v648 = vld [vmem:[%s615 + $0x20] sm:$0xff]
          %v649 = vld [vmem:[%s615 + $0x28] sm:$0xff]
          %v650 = vld [vmem:[%s615 + $0x30] sm:$0xff]
          %v651 = vld [vmem:[%s615 + $0x38] sm:$0xff]
          %v652 = vld [vmem:[%s615 + $0x40] sm:$0xff]
          %v653 = vld [vmem:[%s615 + $0x48] sm:$0xff]
          %v654 = vld [vmem:[%s615 + $0x50] sm:$0xff]
          %v655 = vld [vmem:[%s615 + $0x58] sm:$0xff]
          %v656 = vld [vmem:[%s615 + $0x60] sm:$0xff]
          %v657 = vld [vmem:[%s615 + $0x68] sm:$0xff]
          %v658 = vld [vmem:[%s615 + $0x70] sm:$0xff]
          %v659 = vld [vmem:[%s615 + $0x78] sm:$0xff]
          %v660 = vld [vmem:[%s9] sm:$0xff]
          %v661 = vld [vmem:[%s9 + $0x8] sm:$0xff]
          %v662 = vld [vmem:[%s9 + $0x10] sm:$0xff]
          %v663 = vld [vmem:[%s9 + $0x18] sm:$0xff]
          %v664 = vld [vmem:[%s9 + $0x20] sm:$0xff]
          %v665 = vld [vmem:[%s9 + $0x28] sm:$0xff]
          %v666 = vld [vmem:[%s9 + $0x30] sm:$0xff]
          %v667 = vld [vmem:[%s9 + $0x38] sm:$0xff]
          %v668 = vld [vmem:[%s9 + $0x40] sm:$0xff]
          %v669 = vld [vmem:[%s9 + $0x48] sm:$0xff]
          %v670 = vld [vmem:[%s9 + $0x50] sm:$0xff]
          %v671 = vld [vmem:[%s9 + $0x58] sm:$0xff]
          %v672 = vld [vmem:[%s9 + $0x60] sm:$0xff]
          %v673 = vld [vmem:[%s9 + $0x68] sm:$0xff]
          %v674 = vld [vmem:[%s9 + $0x70] sm:$0xff]
          %v675 = vld [vmem:[%s9 + $0x78] sm:$0xff]
          %v676 = vld [vmem:[%s10] sm:$0x1]
          %v678 = vlaneseq
          %v679 = vshrl.u32 %v678, 7
          %v680 = vsub.s32 0, %v679
          %v681 = vrot.slane %v676, %v680
          %683 = vmatprep.subr.mxu0 0.0
          %684 = vmatpush1.msra.mxu0 %v660
          %685 = vmatprep.subr.mxu0 0.0
          %686 = vmatpush1.msra.mxu0 %v661
          %687 = vmatprep.subr.mxu0 0.0
          %688 = vmatpush1.msra.mxu0 %v662
          %689 = vmatprep.subr.mxu0 0.0
          %690 = vmatpush1.msra.mxu0 %v663
          %691 = vmatprep.subr.mxu0 0.0
          %692 = vmatpush1.msra.mxu0 %v664
          %693 = vmatprep.subr.mxu0 0.0
          %694 = vmatpush1.msra.mxu0 %v665
          %695 = vmatprep.subr.mxu0 0.0
          %696 = vmatpush1.msra.mxu0 %v666
          %697 = vmatprep.subr.mxu0 0.0
          %698 = vmatpush1.msra.mxu0 %v667
          %699 = vmatprep.subr.mxu0 0.0
          %700 = vmatpush1.msra.mxu0 %v668
          %701 = vmatprep.subr.mxu0 0.0
          %702 = vmatpush1.msra.mxu0 %v669
          %703 = vmatprep.subr.mxu0 0.0
          %704 = vmatpush1.msra.mxu0 %v670
          %705 = vmatprep.subr.mxu0 0.0
          %706 = vmatpush1.msra.mxu0 %v671
          %707 = vmatprep.subr.mxu0 0.0
          %708 = vmatpush1.msra.mxu0 %v672
          %709 = vmatprep.subr.mxu0 0.0
          %710 = vmatpush1.msra.mxu0 %v673
          %711 = vmatprep.subr.mxu0 0.0
          %712 = vmatpush1.msra.mxu0 %v674
          %713 = vmatprep.subr.mxu0 0.0
          %714 = vmatpush1.msra.mxu0 %v675
          %715 = vmatprep.subr.mxu0 0.0
          %716 = vmatpush1.msra.mxu0 0.0
          %717 = vmatprep.subr.mxu0 0.0
          %718 = vmatpush1.msra.mxu0 0.0
          %719 = vmatprep.subr.mxu0 0.0
          %720 = vmatpush1.msra.mxu0 0.0
          %721 = vmatprep.subr.mxu0 0.0
          %722 = vmatpush1.msra.mxu0 0.0
          %723 = vmatprep.subr.mxu0 0.0
          %724 = vmatpush1.msra.mxu0 0.0
          %725 = vmatprep.subr.mxu0 0.0
          %726 = vmatpush1.msra.mxu0 0.0
          %727 = vmatprep.subr.mxu0 0.0
          %728 = vmatpush1.msra.mxu0 0.0
          %729 = vmatprep.subr.mxu0 0.0
          %730 = vmatpush1.msra.mxu0 0.0
          %731 = vmatprep.subr.mxu0 0.0
          %732 = vmatpush1.msra.mxu0 0.0
          %733 = vmatprep.subr.mxu0 0.0
          %734 = vmatpush1.msra.mxu0 0.0
          %735 = vmatprep.subr.mxu0 0.0
          %736 = vmatpush1.msra.mxu0 0.0
          %737 = vmatprep.subr.mxu0 0.0
          %738 = vmatpush1.msra.mxu0 0.0
          %739 = vmatprep.subr.mxu0 0.0
          %740 = vmatpush1.msra.mxu0 0.0
          %741 = vmatprep.subr.mxu0 0.0
          %742 = vmatpush1.msra.mxu0 0.0
          %743 = vmatprep.subr.mxu0 0.0
          %744 = vmatpush1.msra.mxu0 0.0
          %745 = vmatprep.subr.mxu0 0.0
          %746 = vmatpush1.msra.mxu0 0.0
          %747 = vmatprep.mubr.f32.mxu0 0.0
          %748 = vmatmul.mubr.f32.gmra.mrb[0].mxu0 %v644
          %v749 = vpop.f32.mrb[0].mxu0
          %v750 = vadd.f32 %v681, %v749
          %v751 = vpop.f32.mrb[0].mxu0
          %752 = vmatprep.mubr.f32.mxu0 0.0
          %753 = vmatmul.mubr.f32.gmra.mrb[0].mxu0 %v645
          %v754 = vpop.f32.mrb[0].mxu0
          %v755 = vadd.f32 %v681, %v754
          %v756 = vpop.f32.mrb[0].mxu0
          %757 = vmatprep.mubr.f32.mxu0 0.0
          %758 = vmatmul.mubr.f32.gmra.mrb[0].mxu0 %v646
          %v759 = vpop.f32.mrb[0].mxu0
          %v760 = vadd.f32 %v681, %v759
          %v761 = vpop.f32.mrb[0].mxu0
          %762 = vmatprep.mubr.f32.mxu0 0.0
          %763 = vmatmul.mubr.f32.gmra.mrb[0].mxu0 %v647
          %v764 = vpop.f32.mrb[0].mxu0
          %v765 = vadd.f32 %v681, %v764
          %v766 = vpop.f32.mrb[0].mxu0
          %767 = vmatprep.mubr.f32.mxu0 0.0
          %768 = vmatmul.mubr.f32.gmra.mrb[0].mxu0 %v648
          %v769 = vpop.f32.mrb[0].mxu0
          %v770 = vadd.f32 %v681, %v769
          %v771 = vpop.f32.mrb[0].mxu0
          %772 = vmatprep.mubr.f32.mxu0 0.0
          %773 = vmatmul.mubr.f32.gmra.mrb[0].mxu0 %v649
          %v774 = vpop.f32.mrb[0].mxu0
          %v775 = vadd.f32 %v681, %v774
          %v776 = vpop.f32.mrb[0].mxu0
          %777 = vmatprep.mubr.f32.mxu0 0.0
          %778 = vmatmul.mubr.f32.gmra.mrb[0].mxu0 %v650
          %v779 = vpop.f32.mrb[0].mxu0
          %v780 = vadd.f32 %v681, %v779
          %v781 = vpop.f32.mrb[0].mxu0
          %782 = vmatprep.mubr.f32.mxu0 0.0
          %783 = vmatmul.mubr.f32.gmra.mrb[0].mxu0 %v651
          %v784 = vpop.f32.mrb[0].mxu0
          %v785 = vadd.f32 %v681, %v784
          %v786 = vpop.f32.mrb[0].mxu0
          %787 = vmatprep.mubr.f32.mxu0 0.0
          %788 = vmatmul.mubr.f32.gmra.mrb[0].mxu0 %v652
          %v789 = vpop.f32.mrb[0].mxu0
          %v790 = vadd.f32 %v681, %v789
          %v791 = vpop.f32.mrb[0].mxu0
          %792 = vmatprep.mubr.f32.mxu0 0.0
          %793 = vmatmul.mubr.f32.gmra.mrb[0].mxu0 %v653
          %v794 = vpop.f32.mrb[0].mxu0
          %v795 = vadd.f32 %v681, %v794
          %v796 = vpop.f32.mrb[0].mxu0
          %797 = vmatprep.mubr.f32.mxu0 0.0
          %798 = vmatmul.mubr.f32.gmra.mrb[0].mxu0 %v654
          %v799 = vpop.f32.mrb[0].mxu0
          %v800 = vadd.f32 %v681, %v799
          %v801 = vpop.f32.mrb[0].mxu0
          %802 = vmatprep.mubr.f32.mxu0 0.0
          %803 = vmatmul.mubr.f32.gmra.mrb[0].mxu0 %v655
          %v804 = vpop.f32.mrb[0].mxu0
          %v805 = vadd.f32 %v681, %v804
          %v806 = vpop.f32.mrb[0].mxu0
          %807 = vmatprep.mubr.f32.mxu0 0.0
          %808 = vmatmul.mubr.f32.gmra.mrb[0].mxu0 %v656
          %v809 = vpop.f32.mrb[0].mxu0
          %v810 = vadd.f32 %v681, %v809
          %v811 = vpop.f32.mrb[0].mxu0
          %812 = vmatprep.mubr.f32.mxu0 0.0
          %813 = vmatmul.mubr.f32.gmra.mrb[0].mxu0 %v657
          %v814 = vpop.f32.mrb[0].mxu0
          %v815 = vadd.f32 %v681, %v814
          %v816 = vpop.f32.mrb[0].mxu0
          %817 = vmatprep.mubr.f32.mxu0 0.0
          %818 = vmatmul.mubr.f32.gmra.mrb[0].mxu0 %v658
          %v819 = vpop.f32.mrb[0].mxu0
          %v820 = vadd.f32 %v681, %v819
          %v821 = vpop.f32.mrb[0].mxu0
          %822 = vmatprep.mubr.f32.mxu0 0.0
          %823 = vmatmul.mubr.f32.gmra.mrb[0].mxu0 %v659
          %v824 = vpop.f32.mrb[0].mxu0
          %v825 = vadd.f32 %v681, %v824
          %v826 = vpop.f32.mrb[0].mxu0
          %827 = vdwg.mxu0
          %v828 = vmax.f32 %v750, 0.0
          %v829 = vmax.f32 %v755, 0.0
          %v830 = vmax.f32 %v760, 0.0
          %v831 = vmax.f32 %v765, 0.0
          %v832 = vmax.f32 %v770, 0.0
          %v833 = vmax.f32 %v775, 0.0
          %v834 = vmax.f32 %v780, 0.0
          %v835 = vmax.f32 %v785, 0.0
          %v836 = vmax.f32 %v790, 0.0
          %v837 = vmax.f32 %v795, 0.0
          %v838 = vmax.f32 %v800, 0.0
          %v839 = vmax.f32 %v805, 0.0
          %v840 = vmax.f32 %v810, 0.0
          %v841 = vmax.f32 %v815, 0.0
          %v842 = vmax.f32 %v820, 0.0
          %v843 = vmax.f32 %v825, 0.0
          %vm844 = vcmp.ne.f32.partialorder %v750, %v750
          %vm845 = vcmp.ne.f32.partialorder %v755, %v755
          %vm846 = vcmp.ne.f32.partialorder %v760, %v760
          %vm847 = vcmp.ne.f32.partialorder %v765, %v765
          %vm848 = vcmp.ne.f32.partialorder %v770, %v770
          %vm849 = vcmp.ne.f32.partialorder %v775, %v775
          %vm850 = vcmp.ne.f32.partialorder %v780, %v780
          %vm851 = vcmp.ne.f32.partialorder %v785, %v785
          %vm852 = vcmp.ne.f32.partialorder %v790, %v790
          %vm853 = vcmp.ne.f32.partialorder %v795, %v795
          %vm854 = vcmp.ne.f32.partialorder %v800, %v800
          %vm855 = vcmp.ne.f32.partialorder %v805, %v805
          %vm856 = vcmp.ne.f32.partialorder %v810, %v810
          %vm857 = vcmp.ne.f32.partialorder %v815, %v815
          %vm858 = vcmp.ne.f32.partialorder %v820, %v820
          %vm859 = vcmp.ne.f32.partialorder %v825, %v825
          %v860 = vadd.f32 %v750, 0.0
          %v861 = vadd.f32 %v755, 0.0
          %v862 = vadd.f32 %v760, 0.0
          %v863 = vadd.f32 %v765, 0.0
          %v864 = vadd.f32 %v770, 0.0
          %v865 = vadd.f32 %v775, 0.0
          %v866 = vadd.f32 %v780, 0.0
          %v867 = vadd.f32 %v785, 0.0
          %v868 = vadd.f32 %v790, 0.0
          %v869 = vadd.f32 %v795, 0.0
          %v870 = vadd.f32 %v800, 0.0
          %v871 = vadd.f32 %v805, 0.0
          %v872 = vadd.f32 %v810, 0.0
          %v873 = vadd.f32 %v815, 0.0
          %v874 = vadd.f32 %v820, 0.0
          %v875 = vadd.f32 %v825, 0.0
          %v876 = vand.u32 2147483647, %v750
          %v877 = vand.u32 2147483647, %v755
          %v878 = vand.u32 2147483647, %v760
          %v879 = vand.u32 2147483647, %v765
          %v880 = vand.u32 2147483647, %v770
          %v881 = vand.u32 2147483647, %v775
          %v882 = vand.u32 2147483647, %v780
          %v883 = vand.u32 2147483647, %v785
          %v884 = vand.u32 2147483647, %v790
          %v885 = vand.u32 2147483647, %v795
          %v886 = vand.u32 2147483647, %v800
          %v887 = vand.u32 2147483647, %v805
          %v888 = vand.u32 2147483647, %v810
          %v889 = vand.u32 2147483647, %v815
          %v890 = vand.u32 2147483647, %v820
          %v891 = vand.u32 2147483647, %v825
          %v892 = vsub.f32 0.0, %v876
          %v893 = vsub.f32 0.0, %v877
          %v894 = vsub.f32 0.0, %v878
          %v895 = vsub.f32 0.0, %v879
          %v896 = vsub.f32 0.0, %v880
          %v897 = vsub.f32 0.0, %v881
          %v898 = vsub.f32 0.0, %v882
          %v899 = vsub.f32 0.0, %v883
          %v900 = vsub.f32 0.0, %v884
          %v901 = vsub.f32 0.0, %v885
          %v902 = vsub.f32 0.0, %v886
          %v903 = vsub.f32 0.0, %v887
          %v904 = vsub.f32 0.0, %v888
          %v905 = vsub.f32 0.0, %v889
          %v906 = vsub.f32 0.0, %v890
          %v907 = vsub.f32 0.0, %v891
          %v908 = vmul.f32 %v892, 1.442695
          %v909 = vpow.pop %v908
          %v910 = vmul.f32 %v893, 1.442695
          %v911 = vpow.pop %v910
          %v912 = vmul.f32 %v894, 1.442695
          %v913 = vpow.pop %v912
          %v914 = vmul.f32 %v895, 1.442695
          %v915 = vpow.pop %v914
          %v916 = vmul.f32 %v896, 1.442695
          %v917 = vpow.pop %v916
          %v918 = vmul.f32 %v897, 1.442695
          %v919 = vpow.pop %v918
          %v920 = vmul.f32 %v898, 1.442695
          %v921 = vpow.pop %v920
          %v922 = vmul.f32 %v899, 1.442695
          %v923 = vpow.pop %v922
          %v924 = vmul.f32 %v900, 1.442695
          %v925 = vpow.pop %v924
          %v926 = vmul.f32 %v901, 1.442695
          %v927 = vpow.pop %v926
          %v928 = vmul.f32 %v902, 1.442695
          %v929 = vpow.pop %v928
          %v930 = vmul.f32 %v903, 1.442695
          %v931 = vpow.pop %v930
          %v932 = vmul.f32 %v904, 1.442695
          %v933 = vpow.pop %v932
          %v934 = vmul.f32 %v905, 1.442695
          %v935 = vpow.pop %v934
          %v936 = vmul.f32 %v906, 1.442695
          %v937 = vpow.pop %v936
          %v938 = vmul.f32 %v907, 1.442695
          %v939 = vpow.pop %v938
          %v940 = vadd.f32 %v909, 1.0
          %v941 = vlog2.pop %v940
          %v942 = vmul.f32 %v941, 0.6931472
          %v943 = vmul.f32 -0.5, %v909
          %v944 = vadd.f32 %v943, 1.0
          %v945 = vmul.f32 %v944, %v909
          %v946 = vand.u32 2147483647, %v909
          %vm947 = vcmp.lt.f32.partialorder %v946, 0.0004427343
          %v948 = vsel %vm947, %v945, %v942
          %v949 = vadd.f32 %v911, 1.0
          %v950 = vlog2.pop %v949
          %v951 = vmul.f32 %v950, 0.6931472
          %v952 = vmul.f32 -0.5, %v911
          %v953 = vadd.f32 %v952, 1.0
          %v954 = vmul.f32 %v953, %v911
          %v955 = vand.u32 2147483647, %v911
          %vm956 = vcmp.lt.f32.partialorder %v955, 0.0004427343
          %v957 = vsel %vm956, %v954, %v951
          %v958 = vadd.f32 %v913, 1.0
          %v959 = vlog2.pop %v958
          %v960 = vmul.f32 %v959, 0.6931472
          %v961 = vmul.f32 -0.5, %v913
          %v962 = vadd.f32 %v961, 1.0
          %v963 = vmul.f32 %v962, %v913
          %v964 = vand.u32 2147483647, %v913
          %vm965 = vcmp.lt.f32.partialorder %v964, 0.0004427343
          %v966 = vsel %vm965, %v963, %v960
          %v967 = vadd.f32 %v915, 1.0
          %v968 = vlog2.pop %v967
          %v969 = vmul.f32 %v968, 0.6931472
          %v970 = vmul.f32 -0.5, %v915
          %v971 = vadd.f32 %v970, 1.0
          %v972 = vmul.f32 %v971, %v915
          %v973 = vand.u32 2147483647, %v915
          %vm974 = vcmp.lt.f32.partialorder %v973, 0.0004427343
          %v975 = vsel %vm974, %v972, %v969
          %v976 = vadd.f32 %v917, 1.0
          %v977 = vlog2.pop %v976
          %v978 = vmul.f32 %v977, 0.6931472
          %v979 = vmul.f32 -0.5, %v917
          %v980 = vadd.f32 %v979, 1.0
          %v981 = vmul.f32 %v980, %v917
          %v982 = vand.u32 2147483647, %v917
          %vm983 = vcmp.lt.f32.partialorder %v982, 0.0004427343
          %v984 = vsel %vm983, %v981, %v978
          %v985 = vadd.f32 %v919, 1.0
          %v986 = vlog2.pop %v985
          %v987 = vmul.f32 %v986, 0.6931472
          %v988 = vmul.f32 -0.5, %v919
          %v989 = vadd.f32 %v988, 1.0
          %v990 = vmul.f32 %v989, %v919
          %v991 = vand.u32 2147483647, %v919
          %vm992 = vcmp.lt.f32.partialorder %v991, 0.0004427343
          %v993 = vsel %vm992, %v990, %v987
          %v994 = vadd.f32 %v921, 1.0
          %v995 = vlog2.pop %v994
          %v996 = vmul.f32 %v995, 0.6931472
          %v997 = vmul.f32 -0.5, %v921
          %v998 = vadd.f32 %v997, 1.0
          %v999 = vmul.f32 %v998, %v921
          %v1000 = vand.u32 2147483647, %v921
          %vm1001 = vcmp.lt.f32.partialorder %v1000, 0.0004427343
          %v1002 = vsel %vm1001, %v999, %v996
          %v1003 = vadd.f32 %v923, 1.0
          %v1004 = vlog2.pop %v1003
          %v1005 = vmul.f32 %v1004, 0.6931472
          %v1006 = vmul.f32 -0.5, %v923
          %v1007 = vadd.f32 %v1006, 1.0
          %v1008 = vmul.f32 %v1007, %v923
          %v1009 = vand.u32 2147483647, %v923
          %vm1010 = vcmp.lt.f32.partialorder %v1009, 0.0004427343
          %v1011 = vsel %vm1010, %v1008, %v1005
          %v1012 = vadd.f32 %v925, 1.0
          %v1013 = vlog2.pop %v1012
          %v1014 = vmul.f32 %v1013, 0.6931472
          %v1015 = vmul.f32 -0.5, %v925
          %v1016 = vadd.f32 %v1015, 1.0
          %v1017 = vmul.f32 %v1016, %v925
          %v1018 = vand.u32 2147483647, %v925
          %vm1019 = vcmp.lt.f32.partialorder %v1018, 0.0004427343
          %v1020 = vsel %vm1019, %v1017, %v1014
          %v1021 = vadd.f32 %v927, 1.0
          %v1022 = vlog2.pop %v1021
          %v1023 = vmul.f32 %v1022, 0.6931472
          %v1024 = vmul.f32 -0.5, %v927
          %v1025 = vadd.f32 %v1024, 1.0
          %v1026 = vmul.f32 %v1025, %v927
          %v1027 = vand.u32 2147483647, %v927
          %vm1028 = vcmp.lt.f32.partialorder %v1027, 0.0004427343
          %v1029 = vsel %vm1028, %v1026, %v1023
          %v1030 = vadd.f32 %v929, 1.0
          %v1031 = vlog2.pop %v1030
          %v1032 = vmul.f32 %v1031, 0.6931472
          %v1033 = vmul.f32 -0.5, %v929
          %v1034 = vadd.f32 %v1033, 1.0
          %v1035 = vmul.f32 %v1034, %v929
          %v1036 = vand.u32 2147483647, %v929
          %vm1037 = vcmp.lt.f32.partialorder %v1036, 0.0004427343
          %v1038 = vsel %vm1037, %v1035, %v1032
          %v1039 = vadd.f32 %v931, 1.0
          %v1040 = vlog2.pop %v1039
          %v1041 = vmul.f32 %v1040, 0.6931472
          %v1042 = vmul.f32 -0.5, %v931
          %v1043 = vadd.f32 %v1042, 1.0
          %v1044 = vmul.f32 %v1043, %v931
          %v1045 = vand.u32 2147483647, %v931
          %vm1046 = vcmp.lt.f32.partialorder %v1045, 0.0004427343
          %v1047 = vsel %vm1046, %v1044, %v1041
          %v1048 = vadd.f32 %v933, 1.0
          %v1049 = vlog2.pop %v1048
          %v1050 = vmul.f32 %v1049, 0.6931472
          %v1051 = vmul.f32 -0.5, %v933
          %v1052 = vadd.f32 %v1051, 1.0
          %v1053 = vmul.f32 %v1052, %v933
          %v1054 = vand.u32 2147483647, %v933
          %vm1055 = vcmp.lt.f32.partialorder %v1054, 0.0004427343
          %v1056 = vsel %vm1055, %v1053, %v1050
          %v1057 = vadd.f32 %v935, 1.0
          %v1058 = vlog2.pop %v1057
          %v1059 = vmul.f32 %v1058, 0.6931472
          %v1060 = vmul.f32 -0.5, %v935
          %v1061 = vadd.f32 %v1060, 1.0
          %v1062 = vmul.f32 %v1061, %v935
          %v1063 = vand.u32 2147483647, %v935
          %vm1064 = vcmp.lt.f32.partialorder %v1063, 0.0004427343
          %v1065 = vsel %vm1064, %v1062, %v1059
          %v1066 = vadd.f32 %v937, 1.0
          %v1067 = vlog2.pop %v1066
          %v1068 = vmul.f32 %v1067, 0.6931472
          %v1069 = vmul.f32 -0.5, %v937
          %v1070 = vadd.f32 %v1069, 1.0
          %v1071 = vmul.f32 %v1070, %v937
          %v1072 = vand.u32 2147483647, %v937
          %vm1073 = vcmp.lt.f32.partialorder %v1072, 0.0004427343
          %v1074 = vsel %vm1073, %v1071, %v1068
          %v1075 = vadd.f32 %v939, 1.0
          %v1076 = vlog2.pop %v1075
          %v1077 = vmul.f32 %v1076, 0.6931472
          %v1078 = vmul.f32 -0.5, %v939
          %v1079 = vadd.f32 %v1078, 1.0
          %v1080 = vmul.f32 %v1079, %v939
          %v1081 = vand.u32 2147483647, %v939
          %vm1082 = vcmp.lt.f32.partialorder %v1081, 0.0004427343
          %v1083 = vsel %vm1082, %v1080, %v1077
          %v1084 = vadd.f32 %v828, %v948
          %v1085 = vadd.f32 %v829, %v957
          %v1086 = vadd.f32 %v830, %v966
          %v1087 = vadd.f32 %v831, %v975
          %v1088 = vadd.f32 %v832, %v984
          %v1089 = vadd.f32 %v833, %v993
          %v1090 = vadd.f32 %v834, %v1002
          %v1091 = vadd.f32 %v835, %v1011
          %v1092 = vadd.f32 %v836, %v1020
          %v1093 = vadd.f32 %v837, %v1029
          %v1094 = vadd.f32 %v838, %v1038
          %v1095 = vadd.f32 %v839, %v1047
          %v1096 = vadd.f32 %v840, %v1056
          %v1097 = vadd.f32 %v841, %v1065
          %v1098 = vadd.f32 %v842, %v1074
          %v1099 = vadd.f32 %v843, %v1083
          %v1100 = vsel %vm844, %v860, %v1084
          %v1101 = vsel %vm845, %v861, %v1085
          %v1102 = vsel %vm846, %v862, %v1086
          %v1103 = vsel %vm847, %v863, %v1087
          %v1104 = vsel %vm848, %v864, %v1088
          %v1105 = vsel %vm849, %v865, %v1089
          %v1106 = vsel %vm850, %v866, %v1090
          %v1107 = vsel %vm851, %v867, %v1091
          %v1108 = vsel %vm852, %v868, %v1092
          %v1109 = vsel %vm853, %v869, %v1093
          %v1110 = vsel %vm854, %v870, %v1094
          %v1111 = vsel %vm855, %v871, %v1095
          %v1112 = vsel %vm856, %v872, %v1096
          %v1113 = vsel %vm857, %v873, %v1097
          %v1114 = vsel %vm858, %v874, %v1098
          %v1115 = vsel %vm859, %v875, %v1099
          %v1116 = vsub.f32 %v1100, 0.6931472
          %v1117 = vsub.f32 %v1101, 0.6931472
          %v1118 = vsub.f32 %v1102, 0.6931472
          %v1119 = vsub.f32 %v1103, 0.6931472
          %v1120 = vsub.f32 %v1104, 0.6931472
          %v1121 = vsub.f32 %v1105, 0.6931472
          %v1122 = vsub.f32 %v1106, 0.6931472
          %v1123 = vsub.f32 %v1107, 0.6931472
          %v1124 = vsub.f32 %v1108, 0.6931472
          %v1125 = vsub.f32 %v1109, 0.6931472
          %v1126 = vsub.f32 %v1110, 0.6931472
          %v1127 = vsub.f32 %v1111, 0.6931472
          %v1128 = vsub.f32 %v1112, 0.6931472
          %v1129 = vsub.f32 %v1113, 0.6931472
          %v1130 = vsub.f32 %v1114, 0.6931472
          %v1131 = vsub.f32 %v1115, 0.6931472
          %v1132 = vld [vmem:[%s11] sm:$0xff]
          %v1133 = vld [vmem:[%s11 + $0x8] sm:$0xff]
          %v1134 = vld [vmem:[%s11 + $0x10] sm:$0xff]
          %v1135 = vld [vmem:[%s11 + $0x18] sm:$0xff]
          %v1136 = vld [vmem:[%s11 + $0x20] sm:$0xff]
          %v1137 = vld [vmem:[%s11 + $0x28] sm:$0xff]
          %v1138 = vld [vmem:[%s11 + $0x30] sm:$0xff]
          %v1139 = vld [vmem:[%s11 + $0x38] sm:$0xff]
          %v1140 = vld [vmem:[%s11 + $0x40] sm:$0xff]
          %v1141 = vld [vmem:[%s11 + $0x48] sm:$0xff]
          %v1142 = vld [vmem:[%s11 + $0x50] sm:$0xff]
          %v1143 = vld [vmem:[%s11 + $0x58] sm:$0xff]
          %v1144 = vld [vmem:[%s11 + $0x60] sm:$0xff]
          %v1145 = vld [vmem:[%s11 + $0x68] sm:$0xff]
          %v1146 = vld [vmem:[%s11 + $0x70] sm:$0xff]
          %v1147 = vld [vmem:[%s11 + $0x78] sm:$0xff]
          %v1148 = vld [vmem:[%s12] sm:$0x1]
          %v1150 = vlaneseq
          %v1151 = vshrl.u32 %v1150, 7
          %v1152 = vsub.s32 0, %v1151
          %v1153 = vrot.slane %v1148, %v1152
          %1155 = vmatprep.subr.mxu0 0.0
          %1156 = vmatpush1.msra.mxu0 %v1132
          %1157 = vmatprep.subr.mxu0 0.0
          %1158 = vmatpush1.msra.mxu0 %v1133
          %1159 = vmatprep.subr.mxu0 0.0
          %1160 = vmatpush1.msra.mxu0 %v1134
          %1161 = vmatprep.subr.mxu0 0.0
          %1162 = vmatpush1.msra.mxu0 %v1135
          %1163 = vmatprep.subr.mxu0 0.0
          %1164 = vmatpush1.msra.mxu0 %v1136
          %1165 = vmatprep.subr.mxu0 0.0
          %1166 = vmatpush1.msra.mxu0 %v1137
          %1167 = vmatprep.subr.mxu0 0.0
          %1168 = vmatpush1.msra.mxu0 %v1138
          %1169 = vmatprep.subr.mxu0 0.0
          %1170 = vmatpush1.msra.mxu0 %v1139
          %1171 = vmatprep.subr.mxu0 0.0
          %1172 = vmatpush1.msra.mxu0 %v1140
          %1173 = vmatprep.subr.mxu0 0.0
          %1174 = vmatpush1.msra.mxu0 %v1141
          %1175 = vmatprep.subr.mxu0 0.0
          %1176 = vmatpush1.msra.mxu0 %v1142
          %1177 = vmatprep.subr.mxu0 0.0
          %1178 = vmatpush1.msra.mxu0 %v1143
          %1179 = vmatprep.subr.mxu0 0.0
          %1180 = vmatpush1.msra.mxu0 %v1144
          %1181 = vmatprep.subr.mxu0 0.0
          %1182 = vmatpush1.msra.mxu0 %v1145
          %1183 = vmatprep.subr.mxu0 0.0
          %1184 = vmatpush1.msra.mxu0 %v1146
          %1185 = vmatprep.subr.mxu0 0.0
          %1186 = vmatpush1.msra.mxu0 %v1147
          %1187 = vmatprep.subr.mxu0 0.0
          %1188 = vmatpush1.msra.mxu0 0.0
          %1189 = vmatprep.subr.mxu0 0.0
          %1190 = vmatpush1.msra.mxu0 0.0
          %1191 = vmatprep.subr.mxu0 0.0
          %1192 = vmatpush1.msra.mxu0 0.0
          %1193 = vmatprep.subr.mxu0 0.0
          %1194 = vmatpush1.msra.mxu0 0.0
          %1195 = vmatprep.subr.mxu0 0.0
          %1196 = vmatpush1.msra.mxu0 0.0
          %1197 = vmatprep.subr.mxu0 0.0
          %1198 = vmatpush1.msra.mxu0 0.0
          %1199 = vmatprep.subr.mxu0 0.0
          %1200 = vmatpush1.msra.mxu0 0.0
          %1201 = vmatprep.subr.mxu0 0.0
          %1202 = vmatpush1.msra.mxu0 0.0
          %1203 = vmatprep.subr.mxu0 0.0
          %1204 = vmatpush1.msra.mxu0 0.0
          %1205 = vmatprep.subr.mxu0 0.0
          %1206 = vmatpush1.msra.mxu0 0.0
          %1207 = vmatprep.subr.mxu0 0.0
          %1208 = vmatpush1.msra.mxu0 0.0
          %1209 = vmatprep.subr.mxu0 0.0
          %1210 = vmatpush1.msra.mxu0 0.0
          %1211 = vmatprep.subr.mxu0 0.0
          %1212 = vmatpush1.msra.mxu0 0.0
          %1213 = vmatprep.subr.mxu0 0.0
          %1214 = vmatpush1.msra.mxu0 0.0
          %1215 = vmatprep.subr.mxu0 0.0
          %1216 = vmatpush1.msra.mxu0 0.0
          %1217 = vmatprep.subr.mxu0 0.0
          %1218 = vmatpush1.msra.mxu0 0.0
          %1219 = vmatprep.mubr.f32.mxu0 0.0
          %1220 = vmatmul.mubr.f32.gmra.mrb[0].mxu0 %v1116
          %v1221 = vpop.f32.mrb[0].mxu0
          %v1222 = vadd.f32 %v1153, %v1221
          %v1223 = vpop.f32.mrb[0].mxu0
          %1224 = vmatprep.mubr.f32.mxu0 0.0
          %1225 = vmatmul.mubr.f32.gmra.mrb[0].mxu0 %v1117
          %v1226 = vpop.f32.mrb[0].mxu0
          %v1227 = vadd.f32 %v1153, %v1226
          %v1228 = vpop.f32.mrb[0].mxu0
          %1229 = vmatprep.mubr.f32.mxu0 0.0
          %1230 = vmatmul.mubr.f32.gmra.mrb[0].mxu0 %v1118
          %v1231 = vpop.f32.mrb[0].mxu0
          %v1232 = vadd.f32 %v1153, %v1231
          %v1233 = vpop.f32.mrb[0].mxu0
          %1234 = vmatprep.mubr.f32.mxu0 0.0
          %1235 = vmatmul.mubr.f32.gmra.mrb[0].mxu0 %v1119
          %v1236 = vpop.f32.mrb[0].mxu0
          %v1237 = vadd.f32 %v1153, %v1236
          %v1238 = vpop.f32.mrb[0].mxu0
          %1239 = vmatprep.mubr.f32.mxu0 0.0
          %1240 = vmatmul.mubr.f32.gmra.mrb[0].mxu0 %v1120
          %v1241 = vpop.f32.mrb[0].mxu0
          %v1242 = vadd.f32 %v1153, %v1241
          %v1243 = vpop.f32.mrb[0].mxu0
          %1244 = vmatprep.mubr.f32.mxu0 0.0
          %1245 = vmatmul.mubr.f32.gmra.mrb[0].mxu0 %v1121
          %v1246 = vpop.f32.mrb[0].mxu0
          %v1247 = vadd.f32 %v1153, %v1246
          %v1248 = vpop.f32.mrb[0].mxu0
          %1249 = vmatprep.mubr.f32.mxu0 0.0
          %1250 = vmatmul.mubr.f32.gmra.mrb[0].mxu0 %v1122
          %v1251 = vpop.f32.mrb[0].mxu0
          %v1252 = vadd.f32 %v1153, %v1251
          %v1253 = vpop.f32.mrb[0].mxu0
          %1254 = vmatprep.mubr.f32.mxu0 0.0
          %1255 = vmatmul.mubr.f32.gmra.mrb[0].mxu0 %v1123
          %v1256 = vpop.f32.mrb[0].mxu0
          %v1257 = vadd.f32 %v1153, %v1256
          %v1258 = vpop.f32.mrb[0].mxu0
          %1259 = vmatprep.mubr.f32.mxu0 0.0
          %1260 = vmatmul.mubr.f32.gmra.mrb[0].mxu0 %v1124
          %v1261 = vpop.f32.mrb[0].mxu0
          %v1262 = vadd.f32 %v1153, %v1261
          %v1263 = vpop.f32.mrb[0].mxu0
          %1264 = vmatprep.mubr.f32.mxu0 0.0
          %1265 = vmatmul.mubr.f32.gmra.mrb[0].mxu0 %v1125
          %v1266 = vpop.f32.mrb[0].mxu0
          %v1267 = vadd.f32 %v1153, %v1266
          %v1268 = vpop.f32.mrb[0].mxu0
          %1269 = vmatprep.mubr.f32.mxu0 0.0
          %1270 = vmatmul.mubr.f32.gmra.mrb[0].mxu0 %v1126
          %v1271 = vpop.f32.mrb[0].mxu0
          %v1272 = vadd.f32 %v1153, %v1271
          %v1273 = vpop.f32.mrb[0].mxu0
          %1274 = vmatprep.mubr.f32.mxu0 0.0
          %1275 = vmatmul.mubr.f32.gmra.mrb[0].mxu0 %v1127
          %v1276 = vpop.f32.mrb[0].mxu0
          %v1277 = vadd.f32 %v1153, %v1276
          %v1278 = vpop.f32.mrb[0].mxu0
          %1279 = vmatprep.mubr.f32.mxu0 0.0
          %1280 = vmatmul.mubr.f32.gmra.mrb[0].mxu0 %v1128
          %v1281 = vpop.f32.mrb[0].mxu0
          %v1282 = vadd.f32 %v1153, %v1281
          %v1283 = vpop.f32.mrb[0].mxu0
          %1284 = vmatprep.mubr.f32.mxu0 0.0
          %1285 = vmatmul.mubr.f32.gmra.mrb[0].mxu0 %v1129
          %v1286 = vpop.f32.mrb[0].mxu0
          %v1287 = vadd.f32 %v1153, %v1286
          %v1288 = vpop.f32.mrb[0].mxu0
          %1289 = vmatprep.mubr.f32.mxu0 0.0
          %1290 = vmatmul.mubr.f32.gmra.mrb[0].mxu0 %v1130
          %v1291 = vpop.f32.mrb[0].mxu0
          %v1292 = vadd.f32 %v1153, %v1291
          %v1293 = vpop.f32.mrb[0].mxu0
          %1294 = vmatprep.mubr.f32.mxu0 0.0
          %1295 = vmatmul.mubr.f32.gmra.mrb[0].mxu0 %v1131
          %v1296 = vpop.f32.mrb[0].mxu0
          %v1297 = vadd.f32 %v1153, %v1296
          %v1298 = vpop.f32.mrb[0].mxu0
          %1299 = vdwg.mxu0
          %v1300 = vmax.f32 %v1222, 0.0
          %v1301 = vmax.f32 %v1227, 0.0
          %v1302 = vmax.f32 %v1232, 0.0
          %v1303 = vmax.f32 %v1237, 0.0
          %v1304 = vmax.f32 %v1242, 0.0
          %v1305 = vmax.f32 %v1247, 0.0
          %v1306 = vmax.f32 %v1252, 0.0
          %v1307 = vmax.f32 %v1257, 0.0
          %v1308 = vmax.f32 %v1262, 0.0
          %v1309 = vmax.f32 %v1267, 0.0
          %v1310 = vmax.f32 %v1272, 0.0
          %v1311 = vmax.f32 %v1277, 0.0
          %v1312 = vmax.f32 %v1282, 0.0
          %v1313 = vmax.f32 %v1287, 0.0
          %v1314 = vmax.f32 %v1292, 0.0
          %v1315 = vmax.f32 %v1297, 0.0
          %vm1316 = vcmp.ne.f32.partialorder %v1222, %v1222
          %vm1317 = vcmp.ne.f32.partialorder %v1227, %v1227
          %vm1318 = vcmp.ne.f32.partialorder %v1232, %v1232
          %vm1319 = vcmp.ne.f32.partialorder %v1237, %v1237
          %vm1320 = vcmp.ne.f32.partialorder %v1242, %v1242
          %vm1321 = vcmp.ne.f32.partialorder %v1247, %v1247
          %vm1322 = vcmp.ne.f32.partialorder %v1252, %v1252
          %vm1323 = vcmp.ne.f32.partialorder %v1257, %v1257
          %vm1324 = vcmp.ne.f32.partialorder %v1262, %v1262
          %vm1325 = vcmp.ne.f32.partialorder %v1267, %v1267
          %vm1326 = vcmp.ne.f32.partialorder %v1272, %v1272
          %vm1327 = vcmp.ne.f32.partialorder %v1277, %v1277
          %vm1328 = vcmp.ne.f32.partialorder %v1282, %v1282
          %vm1329 = vcmp.ne.f32.partialorder %v1287, %v1287
          %vm1330 = vcmp.ne.f32.partialorder %v1292, %v1292
          %vm1331 = vcmp.ne.f32.partialorder %v1297, %v1297
          %v1332 = vadd.f32 %v1222, 0.0
          %v1333 = vadd.f32 %v1227, 0.0
          %v1334 = vadd.f32 %v1232, 0.0
          %v1335 = vadd.f32 %v1237, 0.0
          %v1336 = vadd.f32 %v1242, 0.0
          %v1337 = vadd.f32 %v1247, 0.0
          %v1338 = vadd.f32 %v1252, 0.0
          %v1339 = vadd.f32 %v1257, 0.0
          %v1340 = vadd.f32 %v1262, 0.0
          %v1341 = vadd.f32 %v1267, 0.0
          %v1342 = vadd.f32 %v1272, 0.0
          %v1343 = vadd.f32 %v1277, 0.0
          %v1344 = vadd.f32 %v1282, 0.0
          %v1345 = vadd.f32 %v1287, 0.0
          %v1346 = vadd.f32 %v1292, 0.0
          %v1347 = vadd.f32 %v1297, 0.0
          %v1348 = vand.u32 2147483647, %v1222
          %v1349 = vand.u32 2147483647, %v1227
          %v1350 = vand.u32 2147483647, %v1232
          %v1351 = vand.u32 2147483647, %v1237
          %v1352 = vand.u32 2147483647, %v1242
          %v1353 = vand.u32 2147483647, %v1247
          %v1354 = vand.u32 2147483647, %v1252
          %v1355 = vand.u32 2147483647, %v1257
          %v1356 = vand.u32 2147483647, %v1262
          %v1357 = vand.u32 2147483647, %v1267
          %v1358 = vand.u32 2147483647, %v1272
          %v1359 = vand.u32 2147483647, %v1277
          %v1360 = vand.u32 2147483647, %v1282
          %v1361 = vand.u32 2147483647, %v1287
          %v1362 = vand.u32 2147483647, %v1292
          %v1363 = vand.u32 2147483647, %v1297
          %v1364 = vsub.f32 0.0, %v1348
          %v1365 = vsub.f32 0.0, %v1349
          %v1366 = vsub.f32 0.0, %v1350
          %v1367 = vsub.f32 0.0, %v1351
          %v1368 = vsub.f32 0.0, %v1352
          %v1369 = vsub.f32 0.0, %v1353
          %v1370 = vsub.f32 0.0, %v1354
          %v1371 = vsub.f32 0.0, %v1355
          %v1372 = vsub.f32 0.0, %v1356
          %v1373 = vsub.f32 0.0, %v1357
          %v1374 = vsub.f32 0.0, %v1358
          %v1375 = vsub.f32 0.0, %v1359
          %v1376 = vsub.f32 0.0, %v1360
          %v1377 = vsub.f32 0.0, %v1361
          %v1378 = vsub.f32 0.0, %v1362
          %v1379 = vsub.f32 0.0, %v1363
          %v1380 = vmul.f32 %v1364, 1.442695
          %v1381 = vpow.pop %v1380
          %v1382 = vmul.f32 %v1365, 1.442695
          %v1383 = vpow.pop %v1382
          %v1384 = vmul.f32 %v1366, 1.442695
          %v1385 = vpow.pop %v1384
          %v1386 = vmul.f32 %v1367, 1.442695
          %v1387 = vpow.pop %v1386
          %v1388 = vmul.f32 %v1368, 1.442695
          %v1389 = vpow.pop %v1388
          %v1390 = vmul.f32 %v1369, 1.442695
          %v1391 = vpow.pop %v1390
          %v1392 = vmul.f32 %v1370, 1.442695
          %v1393 = vpow.pop %v1392
          %v1394 = vmul.f32 %v1371, 1.442695
          %v1395 = vpow.pop %v1394
          %v1396 = vmul.f32 %v1372, 1.442695
          %v1397 = vpow.pop %v1396
          %v1398 = vmul.f32 %v1373, 1.442695
          %v1399 = vpow.pop %v1398
          %v1400 = vmul.f32 %v1374, 1.442695
          %v1401 = vpow.pop %v1400
          %v1402 = vmul.f32 %v1375, 1.442695
          %v1403 = vpow.pop %v1402
          %v1404 = vmul.f32 %v1376, 1.442695
          %v1405 = vpow.pop %v1404
          %v1406 = vmul.f32 %v1377, 1.442695
          %v1407 = vpow.pop %v1406
          %v1408 = vmul.f32 %v1378, 1.442695
          %v1409 = vpow.pop %v1408
          %v1410 = vmul.f32 %v1379, 1.442695
          %v1411 = vpow.pop %v1410
          %v1412 = vadd.f32 %v1381, 1.0
          %v1413 = vlog2.pop %v1412
          %v1414 = vmul.f32 %v1413, 0.6931472
          %v1415 = vmul.f32 -0.5, %v1381
          %v1416 = vadd.f32 %v1415, 1.0
          %v1417 = vmul.f32 %v1416, %v1381
          %v1418 = vand.u32 2147483647, %v1381
          %vm1419 = vcmp.lt.f32.partialorder %v1418, 0.0004427343
          %v1420 = vsel %vm1419, %v1417, %v1414
          %v1421 = vadd.f32 %v1383, 1.0
          %v1422 = vlog2.pop %v1421
          %v1423 = vmul.f32 %v1422, 0.6931472
          %v1424 = vmul.f32 -0.5, %v1383
          %v1425 = vadd.f32 %v1424, 1.0
          %v1426 = vmul.f32 %v1425, %v1383
          %v1427 = vand.u32 2147483647, %v1383
          %vm1428 = vcmp.lt.f32.partialorder %v1427, 0.0004427343
          %v1429 = vsel %vm1428, %v1426, %v1423
          %v1430 = vadd.f32 %v1385, 1.0
          %v1431 = vlog2.pop %v1430
          %v1432 = vmul.f32 %v1431, 0.6931472
          %v1433 = vmul.f32 -0.5, %v1385
          %v1434 = vadd.f32 %v1433, 1.0
          %v1435 = vmul.f32 %v1434, %v1385
          %v1436 = vand.u32 2147483647, %v1385
          %vm1437 = vcmp.lt.f32.partialorder %v1436, 0.0004427343
          %v1438 = vsel %vm1437, %v1435, %v1432
          %v1439 = vadd.f32 %v1387, 1.0
          %v1440 = vlog2.pop %v1439
          %v1441 = vmul.f32 %v1440, 0.6931472
          %v1442 = vmul.f32 -0.5, %v1387
          %v1443 = vadd.f32 %v1442, 1.0
          %v1444 = vmul.f32 %v1443, %v1387
          %v1445 = vand.u32 2147483647, %v1387
          %vm1446 = vcmp.lt.f32.partialorder %v1445, 0.0004427343
          %v1447 = vsel %vm1446, %v1444, %v1441
          %v1448 = vadd.f32 %v1389, 1.0
          %v1449 = vlog2.pop %v1448
          %v1450 = vmul.f32 %v1449, 0.6931472
          %v1451 = vmul.f32 -0.5, %v1389
          %v1452 = vadd.f32 %v1451, 1.0
          %v1453 = vmul.f32 %v1452, %v1389
          %v1454 = vand.u32 2147483647, %v1389
          %vm1455 = vcmp.lt.f32.partialorder %v1454, 0.0004427343
          %v1456 = vsel %vm1455, %v1453, %v1450
          %v1457 = vadd.f32 %v1391, 1.0
          %v1458 = vlog2.pop %v1457
          %v1459 = vmul.f32 %v1458, 0.6931472
          %v1460 = vmul.f32 -0.5, %v1391
          %v1461 = vadd.f32 %v1460, 1.0
          %v1462 = vmul.f32 %v1461, %v1391
          %v1463 = vand.u32 2147483647, %v1391
          %vm1464 = vcmp.lt.f32.partialorder %v1463, 0.0004427343
          %v1465 = vsel %vm1464, %v1462, %v1459
          %v1466 = vadd.f32 %v1393, 1.0
          %v1467 = vlog2.pop %v1466
          %v1468 = vmul.f32 %v1467, 0.6931472
          %v1469 = vmul.f32 -0.5, %v1393
          %v1470 = vadd.f32 %v1469, 1.0
          %v1471 = vmul.f32 %v1470, %v1393
          %v1472 = vand.u32 2147483647, %v1393
          %vm1473 = vcmp.lt.f32.partialorder %v1472, 0.0004427343
          %v1474 = vsel %vm1473, %v1471, %v1468
          %v1475 = vadd.f32 %v1395, 1.0
          %v1476 = vlog2.pop %v1475
          %v1477 = vmul.f32 %v1476, 0.6931472
          %v1478 = vmul.f32 -0.5, %v1395
          %v1479 = vadd.f32 %v1478, 1.0
          %v1480 = vmul.f32 %v1479, %v1395
          %v1481 = vand.u32 2147483647, %v1395
          %vm1482 = vcmp.lt.f32.partialorder %v1481, 0.0004427343
          %v1483 = vsel %vm1482, %v1480, %v1477
          %v1484 = vadd.f32 %v1397, 1.0
          %v1485 = vlog2.pop %v1484
          %v1486 = vmul.f32 %v1485, 0.6931472
          %v1487 = vmul.f32 -0.5, %v1397
          %v1488 = vadd.f32 %v1487, 1.0
          %v1489 = vmul.f32 %v1488, %v1397
          %v1490 = vand.u32 2147483647, %v1397
          %vm1491 = vcmp.lt.f32.partialorder %v1490, 0.0004427343
          %v1492 = vsel %vm1491, %v1489, %v1486
          %v1493 = vadd.f32 %v1399, 1.0
          %v1494 = vlog2.pop %v1493
          %v1495 = vmul.f32 %v1494, 0.6931472
          %v1496 = vmul.f32 -0.5, %v1399
          %v1497 = vadd.f32 %v1496, 1.0
          %v1498 = vmul.f32 %v1497, %v1399
          %v1499 = vand.u32 2147483647, %v1399
          %vm1500 = vcmp.lt.f32.partialorder %v1499, 0.0004427343
          %v1501 = vsel %vm1500, %v1498, %v1495
          %v1502 = vadd.f32 %v1401, 1.0
          %v1503 = vlog2.pop %v1502
          %v1504 = vmul.f32 %v1503, 0.6931472
          %v1505 = vmul.f32 -0.5, %v1401
          %v1506 = vadd.f32 %v1505, 1.0
          %v1507 = vmul.f32 %v1506, %v1401
          %v1508 = vand.u32 2147483647, %v1401
          %vm1509 = vcmp.lt.f32.partialorder %v1508, 0.0004427343
          %v1510 = vsel %vm1509, %v1507, %v1504
          %v1511 = vadd.f32 %v1403, 1.0
          %v1512 = vlog2.pop %v1511
          %v1513 = vmul.f32 %v1512, 0.6931472
          %v1514 = vmul.f32 -0.5, %v1403
          %v1515 = vadd.f32 %v1514, 1.0
          %v1516 = vmul.f32 %v1515, %v1403
          %v1517 = vand.u32 2147483647, %v1403
          %vm1518 = vcmp.lt.f32.partialorder %v1517, 0.0004427343
          %v1519 = vsel %vm1518, %v1516, %v1513
          %v1520 = vadd.f32 %v1405, 1.0
          %v1521 = vlog2.pop %v1520
          %v1522 = vmul.f32 %v1521, 0.6931472
          %v1523 = vmul.f32 -0.5, %v1405
          %v1524 = vadd.f32 %v1523, 1.0
          %v1525 = vmul.f32 %v1524, %v1405
          %v1526 = vand.u32 2147483647, %v1405
          %vm1527 = vcmp.lt.f32.partialorder %v1526, 0.0004427343
          %v1528 = vsel %vm1527, %v1525, %v1522
          %v1529 = vadd.f32 %v1407, 1.0
          %v1530 = vlog2.pop %v1529
          %v1531 = vmul.f32 %v1530, 0.6931472
          %v1532 = vmul.f32 -0.5, %v1407
          %v1533 = vadd.f32 %v1532, 1.0
          %v1534 = vmul.f32 %v1533, %v1407
          %v1535 = vand.u32 2147483647, %v1407
          %vm1536 = vcmp.lt.f32.partialorder %v1535, 0.0004427343
          %v1537 = vsel %vm1536, %v1534, %v1531
          %v1538 = vadd.f32 %v1409, 1.0
          %v1539 = vlog2.pop %v1538
          %v1540 = vmul.f32 %v1539, 0.6931472
          %v1541 = vmul.f32 -0.5, %v1409
          %v1542 = vadd.f32 %v1541, 1.0
          %v1543 = vmul.f32 %v1542, %v1409
          %v1544 = vand.u32 2147483647, %v1409
          %vm1545 = vcmp.lt.f32.partialorder %v1544, 0.0004427343
          %v1546 = vsel %vm1545, %v1543, %v1540
          %v1547 = vadd.f32 %v1411, 1.0
          %v1548 = vlog2.pop %v1547
          %v1549 = vmul.f32 %v1548, 0.6931472
          %v1550 = vmul.f32 -0.5, %v1411
          %v1551 = vadd.f32 %v1550, 1.0
          %v1552 = vmul.f32 %v1551, %v1411
          %v1553 = vand.u32 2147483647, %v1411
          %vm1554 = vcmp.lt.f32.partialorder %v1553, 0.0004427343
          %v1555 = vsel %vm1554, %v1552, %v1549
          %v1556 = vadd.f32 %v1300, %v1420
          %v1557 = vadd.f32 %v1301, %v1429
          %v1558 = vadd.f32 %v1302, %v1438
          %v1559 = vadd.f32 %v1303, %v1447
          %v1560 = vadd.f32 %v1304, %v1456
          %v1561 = vadd.f32 %v1305, %v1465
          %v1562 = vadd.f32 %v1306, %v1474
          %v1563 = vadd.f32 %v1307, %v1483
          %v1564 = vadd.f32 %v1308, %v1492
          %v1565 = vadd.f32 %v1309, %v1501
          %v1566 = vadd.f32 %v1310, %v1510
          %v1567 = vadd.f32 %v1311, %v1519
          %v1568 = vadd.f32 %v1312, %v1528
          %v1569 = vadd.f32 %v1313, %v1537
          %v1570 = vadd.f32 %v1314, %v1546
          %v1571 = vadd.f32 %v1315, %v1555
          %v1572 = vsel %vm1316, %v1332, %v1556
          %v1573 = vsel %vm1317, %v1333, %v1557
          %v1574 = vsel %vm1318, %v1334, %v1558
          %v1575 = vsel %vm1319, %v1335, %v1559
          %v1576 = vsel %vm1320, %v1336, %v1560
          %v1577 = vsel %vm1321, %v1337, %v1561
          %v1578 = vsel %vm1322, %v1338, %v1562
          %v1579 = vsel %vm1323, %v1339, %v1563
          %v1580 = vsel %vm1324, %v1340, %v1564
          %v1581 = vsel %vm1325, %v1341, %v1565
          %v1582 = vsel %vm1326, %v1342, %v1566
          %v1583 = vsel %vm1327, %v1343, %v1567
          %v1584 = vsel %vm1328, %v1344, %v1568
          %v1585 = vsel %vm1329, %v1345, %v1569
          %v1586 = vsel %vm1330, %v1346, %v1570
          %v1587 = vsel %vm1331, %v1347, %v1571
          %v1588 = vsub.f32 %v1572, 0.6931472
          %v1589 = vsub.f32 %v1573, 0.6931472
          %v1590 = vsub.f32 %v1574, 0.6931472
          %v1591 = vsub.f32 %v1575, 0.6931472
          %v1592 = vsub.f32 %v1576, 0.6931472
          %v1593 = vsub.f32 %v1577, 0.6931472
          %v1594 = vsub.f32 %v1578, 0.6931472
          %v1595 = vsub.f32 %v1579, 0.6931472
          %v1596 = vsub.f32 %v1580, 0.6931472
          %v1597 = vsub.f32 %v1581, 0.6931472
          %v1598 = vsub.f32 %v1582, 0.6931472
          %v1599 = vsub.f32 %v1583, 0.6931472
          %v1600 = vsub.f32 %v1584, 0.6931472
          %v1601 = vsub.f32 %v1585, 0.6931472
          %v1602 = vsub.f32 %v1586, 0.6931472
          %v1603 = vsub.f32 %v1587, 0.6931472
          %v1604 = vld [vmem:[%s623] sm:$0xff]
          %v1605 = vld [vmem:[%s623 + $0x8] sm:$0xff]
          %v1606 = vld [vmem:[%s623 + $0x10] sm:$0xff]
          %v1607 = vld [vmem:[%s623 + $0x18] sm:$0xff]
          %v1608 = vld [vmem:[%s623 + $0x20] sm:$0xff]
          %v1609 = vld [vmem:[%s623 + $0x28] sm:$0xff]
          %v1610 = vld [vmem:[%s623 + $0x30] sm:$0xff]
          %v1611 = vld [vmem:[%s623 + $0x38] sm:$0xff]
          %v1612 = vld [vmem:[%s623 + $0x40] sm:$0xff]
          %v1613 = vld [vmem:[%s623 + $0x48] sm:$0xff]
          %v1614 = vld [vmem:[%s623 + $0x50] sm:$0xff]
          %v1615 = vld [vmem:[%s623 + $0x58] sm:$0xff]
          %v1616 = vld [vmem:[%s623 + $0x60] sm:$0xff]
          %v1617 = vld [vmem:[%s623 + $0x68] sm:$0xff]
          %v1618 = vld [vmem:[%s623 + $0x70] sm:$0xff]
          %v1619 = vld [vmem:[%s623 + $0x78] sm:$0xff]
          %v1620 = vmul.f32 %v1604, %v1588
          %v1621 = vmul.f32 %v1605, %v1589
          %v1622 = vmul.f32 %v1606, %v1590
          %v1623 = vmul.f32 %v1607, %v1591
          %v1624 = vmul.f32 %v1608, %v1592
          %v1625 = vmul.f32 %v1609, %v1593
          %v1626 = vmul.f32 %v1610, %v1594
          %v1627 = vmul.f32 %v1611, %v1595
          %v1628 = vmul.f32 %v1612, %v1596
          %v1629 = vmul.f32 %v1613, %v1597
          %v1630 = vmul.f32 %v1614, %v1598
          %v1631 = vmul.f32 %v1615, %v1599
          %v1632 = vmul.f32 %v1616, %v1600
          %v1633 = vmul.f32 %v1617, %v1601
          %v1634 = vmul.f32 %v1618, %v1602
          %v1635 = vmul.f32 %v1619, %v1603
          %s1636 = sld [smem:[#allocation4 + %s57]]
          %s1637 = smul.u32 %s1636, 8
          %v1638 = vld [vmem:[%s608] sm:$0x1]
          %v1639 = vstv %s1637
          %v1640 = vsub.s32 %v1638, %v1639
          %v1641 = vlaneseq
          %v1642 = vshrl.u32 %v1641, 7
          %v1643 = vlaneseq
          %v1644 = vshrl.u32 %v1643, 7
          %v1645 = vsub.s32 0, %v1644
          %v1646 = vrot.slane %v1640, %v1645
          %vm1647 = vcmp.eq.s32.totalorder %v1642, %v1646
          %v1648 = vsel %vm1647, 1, 0
          %v1649 = vcvt.s32.f32 %v1648
          %v1650 = vld [vmem:[#allocation2] sm:$0xff]
          %1651 = vmatprep.subr.mxu0 0.0
          %1652 = vmatpush1.msra.mxu0 %v1620
          %1653 = vmatprep.subr.mxu0 0.0
          %1654 = vmatpush1.msra.mxu0 %v1621
          %1655 = vmatprep.subr.mxu0 0.0
          %1656 = vmatpush1.msra.mxu0 %v1622
          %1657 = vmatprep.subr.mxu0 0.0
          %1658 = vmatpush1.msra.mxu0 %v1623
          %1659 = vmatprep.subr.mxu0 0.0
          %1660 = vmatpush1.msra.mxu0 %v1624
          %1661 = vmatprep.subr.mxu0 0.0
          %1662 = vmatpush1.msra.mxu0 %v1625
          %1663 = vmatprep.subr.mxu0 0.0
          %1664 = vmatpush1.msra.mxu0 %v1626
          %1665 = vmatprep.subr.mxu0 0.0
          %1666 = vmatpush1.msra.mxu0 %v1627
          %1667 = vmatprep.subr.mxu0 0.0
          %1668 = vmatpush1.msra.mxu0 %v1628
          %1669 = vmatprep.subr.mxu0 0.0
          %1670 = vmatpush1.msra.mxu0 %v1629
          %1671 = vmatprep.subr.mxu0 0.0
          %1672 = vmatpush1.msra.mxu0 %v1630
          %1673 = vmatprep.subr.mxu0 0.0
          %1674 = vmatpush1.msra.mxu0 %v1631
          %1675 = vmatprep.subr.mxu0 0.0
          %1676 = vmatpush1.msra.mxu0 %v1632
          %1677 = vmatprep.subr.mxu0 0.0
          %1678 = vmatpush1.msra.mxu0 %v1633
          %1679 = vmatprep.subr.mxu0 0.0
          %1680 = vmatpush1.msra.mxu0 %v1634
          %1681 = vmatprep.subr.mxu0 0.0
          %1682 = vmatpush1.msra.mxu0 %v1635
          %1683 = vmatprep.subr.mxu0 0.0
          %1684 = vmatpush1.msra.mxu0 0.0
          %1685 = vmatprep.subr.mxu0 0.0
          %1686 = vmatpush1.msra.mxu0 0.0
          %1687 = vmatprep.subr.mxu0 0.0
          %1688 = vmatpush1.msra.mxu0 0.0
          %1689 = vmatprep.subr.mxu0 0.0
          %1690 = vmatpush1.msra.mxu0 0.0
          %1691 = vmatprep.subr.mxu0 0.0
          %1692 = vmatpush1.msra.mxu0 0.0
          %1693 = vmatprep.subr.mxu0 0.0
          %1694 = vmatpush1.msra.mxu0 0.0
          %1695 = vmatprep.subr.mxu0 0.0
          %1696 = vmatpush1.msra.mxu0 0.0
          %1697 = vmatprep.subr.mxu0 0.0
          %1698 = vmatpush1.msra.mxu0 0.0
          %1699 = vmatprep.subr.mxu0 0.0
          %1700 = vmatpush1.msra.mxu0 0.0
          %1701 = vmatprep.subr.mxu0 0.0
          %1702 = vmatpush1.msra.mxu0 0.0
          %1703 = vmatprep.subr.mxu0 0.0
          %1704 = vmatpush1.msra.mxu0 0.0
          %1705 = vmatprep.subr.mxu0 0.0
          %1706 = vmatpush1.msra.mxu0 0.0
          %1707 = vmatprep.subr.mxu0 0.0
          %1708 = vmatpush1.msra.mxu0 0.0
          %1709 = vmatprep.subr.mxu0 0.0
          %1710 = vmatpush1.msra.mxu0 0.0
          %1711 = vmatprep.subr.mxu0 0.0
          %1712 = vmatpush1.msra.mxu0 0.0
          %1713 = vmatprep.subr.mxu0 0.0
          %1714 = vmatpush1.msra.mxu0 0.0
          %1715 = vmatprep.mubr.f32.mxu0 0.0
          %1716 = vmatmul.mubr.f32.gmra.mrb[0].mxu0 %v1649
          %v1717 = vpop.f32.mrb[0].mxu0
          %v1718 = vadd.f32 0.0, %v1717
          %v1719 = vpop.f32.mrb[0].mxu0
          %1720 = vdwg.mxu0
          %v1721 = vadd.f32 %v1650, %v1718
          %1722 = vst [vmem:[#allocation2] sm:$0xff] %v1721
        $region92: #{schnet_interaction.3} parent=83 // pred_fallthru
          _
        %s1723 = sld [smem:[#allocation7 + %s57]]
        %p1724 = scmp.eq.s32.totalorder %s1723, 1
        // Predicated region
        $region93: #{schnet_interaction.3} parent=83 // pred_check
          %p1725 = pneg %p1724
        $region94: #{schnet_interaction.3} parent=83 // pred_check_branch
          %1727 = sbr.rel (%p1725) target = $region96
        $region95: #{schnet_interaction.3} parent=83 // pred_region
          %v1728 = vld [vmem:[#allocation2] sm:$0xff]
          %v1729 = vld [vmem:[%s13] sm:$0xff]
          %v1730 = vld [vmem:[%s13 + $0x8] sm:$0xff]
          %v1731 = vld [vmem:[%s13 + $0x10] sm:$0xff]
          %v1732 = vld [vmem:[%s13 + $0x18] sm:$0xff]
          %v1733 = vld [vmem:[%s13 + $0x20] sm:$0xff]
          %v1734 = vld [vmem:[%s13 + $0x28] sm:$0xff]
          %v1735 = vld [vmem:[%s13 + $0x30] sm:$0xff]
          %v1736 = vld [vmem:[%s13 + $0x38] sm:$0xff]
          %v1737 = vld [vmem:[%s13 + $0x40] sm:$0xff]
          %v1738 = vld [vmem:[%s13 + $0x48] sm:$0xff]
          %v1739 = vld [vmem:[%s13 + $0x50] sm:$0xff]
          %v1740 = vld [vmem:[%s13 + $0x58] sm:$0xff]
          %v1741 = vld [vmem:[%s13 + $0x60] sm:$0xff]
          %v1742 = vld [vmem:[%s13 + $0x68] sm:$0xff]
          %v1743 = vld [vmem:[%s13 + $0x70] sm:$0xff]
          %v1744 = vld [vmem:[%s13 + $0x78] sm:$0xff]
          %v1745 = vld [vmem:[%s14] sm:$0x1]
          %v1747 = vlaneseq
          %v1748 = vshrl.u32 %v1747, 7
          %v1749 = vsub.s32 0, %v1748
          %v1750 = vrot.slane %v1745, %v1749
          %1752 = vmatprep.subr.mxu0 0.0
          %1753 = vmatpush1.msra.mxu0 %v1729
          %1754 = vmatprep.subr.mxu0 0.0
          %1755 = vmatpush1.msra.mxu0 %v1730
          %1756 = vmatprep.subr.mxu0 0.0
          %1757 = vmatpush1.msra.mxu0 %v1731
          %1758 = vmatprep.subr.mxu0 0.0
          %1759 = vmatpush1.msra.mxu0 %v1732
          %1760 = vmatprep.subr.mxu0 0.0
          %1761 = vmatpush1.msra.mxu0 %v1733
          %1762 = vmatprep.subr.mxu0 0.0
          %1763 = vmatpush1.msra.mxu0 %v1734
          %1764 = vmatprep.subr.mxu0 0.0
          %1765 = vmatpush1.msra.mxu0 %v1735
          %1766 = vmatprep.subr.mxu0 0.0
          %1767 = vmatpush1.msra.mxu0 %v1736
          %1768 = vmatprep.subr.mxu0 0.0
          %1769 = vmatpush1.msra.mxu0 %v1737
          %1770 = vmatprep.subr.mxu0 0.0
          %1771 = vmatpush1.msra.mxu0 %v1738
          %1772 = vmatprep.subr.mxu0 0.0
          %1773 = vmatpush1.msra.mxu0 %v1739
          %1774 = vmatprep.subr.mxu0 0.0
          %1775 = vmatpush1.msra.mxu0 %v1740
          %1776 = vmatprep.subr.mxu0 0.0
          %1777 = vmatpush1.msra.mxu0 %v1741
          %1778 = vmatprep.subr.mxu0 0.0
          %1779 = vmatpush1.msra.mxu0 %v1742
          %1780 = vmatprep.subr.mxu0 0.0
          %1781 = vmatpush1.msra.mxu0 %v1743
          %1782 = vmatprep.subr.mxu0 0.0
          %1783 = vmatpush1.msra.mxu0 %v1744
          %1784 = vmatprep.subr.mxu0 0.0
          %1785 = vmatpush1.msra.mxu0 0.0
          %1786 = vmatprep.subr.mxu0 0.0
          %1787 = vmatpush1.msra.mxu0 0.0
          %1788 = vmatprep.subr.mxu0 0.0
          %1789 = vmatpush1.msra.mxu0 0.0
          %1790 = vmatprep.subr.mxu0 0.0
          %1791 = vmatpush1.msra.mxu0 0.0
          %1792 = vmatprep.subr.mxu0 0.0
          %1793 = vmatpush1.msra.mxu0 0.0
          %1794 = vmatprep.subr.mxu0 0.0
          %1795 = vmatpush1.msra.mxu0 0.0
          %1796 = vmatprep.subr.mxu0 0.0
          %1797 = vmatpush1.msra.mxu0 0.0
          %1798 = vmatprep.subr.mxu0 0.0
          %1799 = vmatpush1.msra.mxu0 0.0
          %1800 = vmatprep.subr.mxu0 0.0
          %1801 = vmatpush1.msra.mxu0 0.0
          %1802 = vmatprep.subr.mxu0 0.0
          %1803 = vmatpush1.msra.mxu0 0.0
          %1804 = vmatprep.subr.mxu0 0.0
          %1805 = vmatpush1.msra.mxu0 0.0
          %1806 = vmatprep.subr.mxu0 0.0
          %1807 = vmatpush1.msra.mxu0 0.0
          %1808 = vmatprep.subr.mxu0 0.0
          %1809 = vmatpush1.msra.mxu0 0.0
          %1810 = vmatprep.subr.mxu0 0.0
          %1811 = vmatpush1.msra.mxu0 0.0
          %1812 = vmatprep.subr.mxu0 0.0
          %1813 = vmatpush1.msra.mxu0 0.0
          %1814 = vmatprep.subr.mxu0 0.0
          %1815 = vmatpush1.msra.mxu0 0.0
          %1816 = vmatprep.mubr.f32.mxu0 0.0
          %1817 = vmatmul.mubr.f32.gmra.mrb[0].mxu0 %v1728
          %v1818 = vpop.f32.mrb[0].mxu0
          %v1819 = vadd.f32 %v1750, %v1818
          %v1820 = vpop.f32.mrb[0].mxu0
          %1821 = vdwg.mxu0
          %v1822 = vld [vmem:[%s15] sm:$0xff]
          %v1823 = vld [vmem:[%s15 + $0x8] sm:$0xff]
          %v1824 = vld [vmem:[%s15 + $0x10] sm:$0xff]
          %v1825 = vld [vmem:[%s15 + $0x18] sm:$0xff]
          %v1826 = vld [vmem:[%s15 + $0x20] sm:$0xff]
          %v1827 = vld [vmem:[%s15 + $0x28] sm:$0xff]
          %v1828 = vld [vmem:[%s15 + $0x30] sm:$0xff]
          %v1829 = vld [vmem:[%s15 + $0x38] sm:$0xff]
          %v1830 = vld [vmem:[%s15 + $0x40] sm:$0xff]
          %v1831 = vld [vmem:[%s15 + $0x48] sm:$0xff]
          %v1832 = vld [vmem:[%s15 + $0x50] sm:$0xff]
          %v1833 = vld [vmem:[%s15 + $0x58] sm:$0xff]
          %v1834 = vld [vmem:[%s15 + $0x60] sm:$0xff]
          %v1835 = vld [vmem:[%s15 + $0x68] sm:$0xff]
          %v1836 = vld [vmem:[%s15 + $0x70] sm:$0xff]
          %v1837 = vld [vmem:[%s15 + $0x78] sm:$0xff]
          %v1838 = vld [vmem:[%s16] sm:$0x1]
          %v1840 = vlaneseq
          %v1841 = vshrl.u32 %v1840, 7
          %v1842 = vsub.s32 0, %v1841
          %v1843 = vrot.slane %v1838, %v1842
          %1845 = vmatprep.subr.mxu0 0.0
          %1846 = vmatpush1.msra.mxu0 %v1822
          %1847 = vmatprep.subr.mxu0 0.0
          %1848 = vmatpush1.msra.mxu0 %v1823
          %1849 = vmatprep.subr.mxu0 0.0
          %1850 = vmatpush1.msra.mxu0 %v1824
          %1851 = vmatprep.subr.mxu0 0.0
          %1852 = vmatpush1.msra.mxu0 %v1825
          %1853 = vmatprep.subr.mxu0 0.0
          %1854 = vmatpush1.msra.mxu0 %v1826
          %1855 = vmatprep.subr.mxu0 0.0
          %1856 = vmatpush1.msra.mxu0 %v1827
          %1857 = vmatprep.subr.mxu0 0.0
          %1858 = vmatpush1.msra.mxu0 %v1828
          %1859 = vmatprep.subr.mxu0 0.0
          %1860 = vmatpush1.msra.mxu0 %v1829
          %1861 = vmatprep.subr.mxu0 0.0
          %1862 = vmatpush1.msra.mxu0 %v1830
          %1863 = vmatprep.subr.mxu0 0.0
          %1864 = vmatpush1.msra.mxu0 %v1831
          %1865 = vmatprep.subr.mxu0 0.0
          %1866 = vmatpush1.msra.mxu0 %v1832
          %1867 = vmatprep.subr.mxu0 0.0
          %1868 = vmatpush1.msra.mxu0 %v1833
          %1869 = vmatprep.subr.mxu0 0.0
          %1870 = vmatpush1.msra.mxu0 %v1834
          %1871 = vmatprep.subr.mxu0 0.0
          %1872 = vmatpush1.msra.mxu0 %v1835
          %1873 = vmatprep.subr.mxu0 0.0
          %1874 = vmatpush1.msra.mxu0 %v1836
          %1875 = vmatprep.subr.mxu0 0.0
          %1876 = vmatpush1.msra.mxu0 %v1837
          %1877 = vmatprep.subr.mxu0 0.0
          %1878 = vmatpush1.msra.mxu0 0.0
          %1879 = vmatprep.subr.mxu0 0.0
          %1880 = vmatpush1.msra.mxu0 0.0
          %1881 = vmatprep.subr.mxu0 0.0
          %1882 = vmatpush1.msra.mxu0 0.0
          %1883 = vmatprep.subr.mxu0 0.0
          %1884 = vmatpush1.msra.mxu0 0.0
          %1885 = vmatprep.subr.mxu0 0.0
          %1886 = vmatpush1.msra.mxu0 0.0
          %1887 = vmatprep.subr.mxu0 0.0
          %1888 = vmatpush1.msra.mxu0 0.0
          %1889 = vmatprep.subr.mxu0 0.0
          %1890 = vmatpush1.msra.mxu0 0.0
          %1891 = vmatprep.subr.mxu0 0.0
          %1892 = vmatpush1.msra.mxu0 0.0
          %1893 = vmatprep.subr.mxu0 0.0
          %1894 = vmatpush1.msra.mxu0 0.0
          %1895 = vmatprep.subr.mxu0 0.0
          %1896 = vmatpush1.msra.mxu0 0.0
          %1897 = vmatprep.subr.mxu0 0.0
          %1898 = vmatpush1.msra.mxu0 0.0
          %1899 = vmatprep.subr.mxu0 0.0
          %1900 = vmatpush1.msra.mxu0 0.0
          %1901 = vmatprep.subr.mxu0 0.0
          %1902 = vmatpush1.msra.mxu0 0.0
          %1903 = vmatprep.subr.mxu0 0.0
          %1904 = vmatpush1.msra.mxu0 0.0
          %1905 = vmatprep.subr.mxu0 0.0
          %1906 = vmatpush1.msra.mxu0 0.0
          %1907 = vmatprep.subr.mxu0 0.0
          %1908 = vmatpush1.msra.mxu0 0.0
          %1909 = vmatprep.mubr.f32.mxu0 0.0
          %1910 = vmatmul.mubr.f32.gmra.mrb[0].mxu0 %v1819
          %v1911 = vpop.f32.mrb[0].mxu0
          %v1912 = vadd.f32 %v1843, %v1911
          %v1913 = vpop.f32.mrb[0].mxu0
          %1914 = vdwg.mxu0
          %v1915 = vmax.f32 %v1912, 0.0
          %vm1916 = vcmp.ne.f32.partialorder %v1912, %v1912
          %v1917 = vadd.f32 %v1912, 0.0
          %v1918 = vand.u32 2147483647, %v1912
          %v1919 = vsub.f32 0.0, %v1918
          %v1920 = vmul.f32 %v1919, 1.442695
          %v1921 = vpow.pop %v1920
          %v1922 = vadd.f32 %v1921, 1.0
          %v1923 = vlog2.pop %v1922
          %v1924 = vmul.f32 %v1923, 0.6931472
          %v1925 = vmul.f32 -0.5, %v1921
          %v1926 = vadd.f32 %v1925, 1.0
          %v1927 = vmul.f32 %v1926, %v1921
          %v1928 = vand.u32 2147483647, %v1921
          %vm1929 = vcmp.lt.f32.partialorder %v1928, 0.0004427343
          %v1930 = vsel %vm1929, %v1927, %v1924
          %v1931 = vadd.f32 %v1915, %v1930
          %v1932 = vsel %vm1916, %v1917, %v1931
          %v1933 = vsub.f32 %v1932, 0.6931472
          %v1934 = vld [vmem:[%s17] sm:$0xff]
          %v1935 = vld [vmem:[%s17 + $0x8] sm:$0xff]
          %v1936 = vld [vmem:[%s17 + $0x10] sm:$0xff]
          %v1937 = vld [vmem:[%s17 + $0x18] sm:$0xff]
          %v1938 = vld [vmem:[%s17 + $0x20] sm:$0xff]
          %v1939 = vld [vmem:[%s17 + $0x28] sm:$0xff]
          %v1940 = vld [vmem:[%s17 + $0x30] sm:$0xff]
          %v1941 = vld [vmem:[%s17 + $0x38] sm:$0xff]
          %v1942 = vld [vmem:[%s17 + $0x40] sm:$0xff]
          %v1943 = vld [vmem:[%s17 + $0x48] sm:$0xff]
          %v1944 = vld [vmem:[%s17 + $0x50] sm:$0xff]
          %v1945 = vld [vmem:[%s17 + $0x58] sm:$0xff]
          %v1946 = vld [vmem:[%s17 + $0x60] sm:$0xff]
          %v1947 = vld [vmem:[%s17 + $0x68] sm:$0xff]
          %v1948 = vld [vmem:[%s17 + $0x70] sm:$0xff]
          %v1949 = vld [vmem:[%s17 + $0x78] sm:$0xff]
          %v1950 = vld [vmem:[%s18] sm:$0x1]
          %v1952 = vlaneseq
          %v1953 = vshrl.u32 %v1952, 7
          %v1954 = vsub.s32 0, %v1953
          %v1955 = vrot.slane %v1950, %v1954
          %1957 = vmatprep.subr.mxu0 0.0
          %1958 = vmatpush1.msra.mxu0 %v1934
          %1959 = vmatprep.subr.mxu0 0.0
          %1960 = vmatpush1.msra.mxu0 %v1935
          %1961 = vmatprep.subr.mxu0 0.0
          %1962 = vmatpush1.msra.mxu0 %v1936
          %1963 = vmatprep.subr.mxu0 0.0
          %1964 = vmatpush1.msra.mxu0 %v1937
          %1965 = vmatprep.subr.mxu0 0.0
          %1966 = vmatpush1.msra.mxu0 %v1938
          %1967 = vmatprep.subr.mxu0 0.0
          %1968 = vmatpush1.msra.mxu0 %v1939
          %1969 = vmatprep.subr.mxu0 0.0
          %1970 = vmatpush1.msra.mxu0 %v1940
          %1971 = vmatprep.subr.mxu0 0.0
          %1972 = vmatpush1.msra.mxu0 %v1941
          %1973 = vmatprep.subr.mxu0 0.0
          %1974 = vmatpush1.msra.mxu0 %v1942
          %1975 = vmatprep.subr.mxu0 0.0
          %1976 = vmatpush1.msra.mxu0 %v1943
          %1977 = vmatprep.subr.mxu0 0.0
          %1978 = vmatpush1.msra.mxu0 %v1944
          %1979 = vmatprep.subr.mxu0 0.0
          %1980 = vmatpush1.msra.mxu0 %v1945
          %1981 = vmatprep.subr.mxu0 0.0
          %1982 = vmatpush1.msra.mxu0 %v1946
          %1983 = vmatprep.subr.mxu0 0.0
          %1984 = vmatpush1.msra.mxu0 %v1947
          %1985 = vmatprep.subr.mxu0 0.0
          %1986 = vmatpush1.msra.mxu0 %v1948
          %1987 = vmatprep.subr.mxu0 0.0
          %1988 = vmatpush1.msra.mxu0 %v1949
          %1989 = vmatprep.subr.mxu0 0.0
          %1990 = vmatpush1.msra.mxu0 0.0
          %1991 = vmatprep.subr.mxu0 0.0
          %1992 = vmatpush1.msra.mxu0 0.0
          %1993 = vmatprep.subr.mxu0 0.0
          %1994 = vmatpush1.msra.mxu0 0.0
          %1995 = vmatprep.subr.mxu0 0.0
          %1996 = vmatpush1.msra.mxu0 0.0
          %1997 = vmatprep.subr.mxu0 0.0
          %1998 = vmatpush1.msra.mxu0 0.0
          %1999 = vmatprep.subr.mxu0 0.0
          %2000 = vmatpush1.msra.mxu0 0.0
          %2001 = vmatprep.subr.mxu0 0.0
          %2002 = vmatpush1.msra.mxu0 0.0
          %2003 = vmatprep.subr.mxu0 0.0
          %2004 = vmatpush1.msra.mxu0 0.0
          %2005 = vmatprep.subr.mxu0 0.0
          %2006 = vmatpush1.msra.mxu0 0.0
          %2007 = vmatprep.subr.mxu0 0.0
          %2008 = vmatpush1.msra.mxu0 0.0
          %2009 = vmatprep.subr.mxu0 0.0
          %2010 = vmatpush1.msra.mxu0 0.0
          %2011 = vmatprep.subr.mxu0 0.0
          %2012 = vmatpush1.msra.mxu0 0.0
          %2013 = vmatprep.subr.mxu0 0.0
          %2014 = vmatpush1.msra.mxu0 0.0
          %2015 = vmatprep.subr.mxu0 0.0
          %2016 = vmatpush1.msra.mxu0 0.0
          %2017 = vmatprep.subr.mxu0 0.0
          %2018 = vmatpush1.msra.mxu0 0.0
          %2019 = vmatprep.subr.mxu0 0.0
          %2020 = vmatpush1.msra.mxu0 0.0
          %2021 = vmatprep.mubr.f32.mxu0 0.0
          %2022 = vmatmul.mubr.f32.gmra.mrb[0].mxu0 %v1933
          %v2023 = vpop.f32.mrb[0].mxu0
          %v2024 = vadd.f32 %v1955, %v2023
          %v2025 = vpop.f32.mrb[0].mxu0
          %2026 = vdwg.mxu0
          %v2027 = vmax.f32 %v2024, 0.0
          %vm2028 = vcmp.ne.f32.partialorder %v2024, %v2024
          %v2029 = vadd.f32 %v2024, 0.0
          %v2030 = vand.u32 2147483647, %v2024
          %v2031 = vsub.f32 0.0, %v2030
          %v2032 = vmul.f32 %v2031, 1.442695
          %v2033 = vpow.pop %v2032
          %v2034 = vadd.f32 %v2033, 1.0
          %v2035 = vlog2.pop %v2034
          %v2036 = vmul.f32 %v2035, 0.6931472
          %v2037 = vmul.f32 -0.5, %v2033
          %v2038 = vadd.f32 %v2037, 1.0
          %v2039 = vmul.f32 %v2038, %v2033
          %v2040 = vand.u32 2147483647, %v2033
          %vm2041 = vcmp.lt.f32.partialorder %v2040, 0.0004427343
          %v2042 = vsel %vm2041, %v2039, %v2036
          %v2043 = vadd.f32 %v2027, %v2042
          %v2044 = vsel %vm2028, %v2029, %v2043
          %v2045 = vsub.f32 %v2044, 0.6931472
          %v2046 = vld [vmem:[%s19] sm:$0xff]
          %v2047 = vld [vmem:[%s19 + $0x8] sm:$0xff]
          %v2048 = vld [vmem:[%s19 + $0x10] sm:$0xff]
          %v2049 = vld [vmem:[%s19 + $0x18] sm:$0xff]
          %v2050 = vld [vmem:[%s19 + $0x20] sm:$0xff]
          %v2051 = vld [vmem:[%s19 + $0x28] sm:$0xff]
          %v2052 = vld [vmem:[%s19 + $0x30] sm:$0xff]
          %v2053 = vld [vmem:[%s19 + $0x38] sm:$0xff]
          %v2054 = vld [vmem:[%s19 + $0x40] sm:$0xff]
          %v2055 = vld [vmem:[%s19 + $0x48] sm:$0xff]
          %v2056 = vld [vmem:[%s19 + $0x50] sm:$0xff]
          %v2057 = vld [vmem:[%s19 + $0x58] sm:$0xff]
          %v2058 = vld [vmem:[%s19 + $0x60] sm:$0xff]
          %v2059 = vld [vmem:[%s19 + $0x68] sm:$0xff]
          %v2060 = vld [vmem:[%s19 + $0x70] sm:$0xff]
          %v2061 = vld [vmem:[%s19 + $0x78] sm:$0xff]
          %v2062 = vld [vmem:[%s20] sm:$0x1]
          %v2064 = vlaneseq
          %v2065 = vshrl.u32 %v2064, 7
          %v2066 = vsub.s32 0, %v2065
          %v2067 = vrot.slane %v2062, %v2066
          %2069 = vmatprep.subr.mxu0 0.0
          %2070 = vmatpush1.msra.mxu0 %v2046
          %2071 = vmatprep.subr.mxu0 0.0
          %2072 = vmatpush1.msra.mxu0 %v2047
          %2073 = vmatprep.subr.mxu0 0.0
          %2074 = vmatpush1.msra.mxu0 %v2048
          %2075 = vmatprep.subr.mxu0 0.0
          %2076 = vmatpush1.msra.mxu0 %v2049
          %2077 = vmatprep.subr.mxu0 0.0
          %2078 = vmatpush1.msra.mxu0 %v2050
          %2079 = vmatprep.subr.mxu0 0.0
          %2080 = vmatpush1.msra.mxu0 %v2051
          %2081 = vmatprep.subr.mxu0 0.0
          %2082 = vmatpush1.msra.mxu0 %v2052
          %2083 = vmatprep.subr.mxu0 0.0
          %2084 = vmatpush1.msra.mxu0 %v2053
          %2085 = vmatprep.subr.mxu0 0.0
          %2086 = vmatpush1.msra.mxu0 %v2054
          %2087 = vmatprep.subr.mxu0 0.0
          %2088 = vmatpush1.msra.mxu0 %v2055
          %2089 = vmatprep.subr.mxu0 0.0
          %2090 = vmatpush1.msra.mxu0 %v2056
          %2091 = vmatprep.subr.mxu0 0.0
          %2092 = vmatpush1.msra.mxu0 %v2057
          %2093 = vmatprep.subr.mxu0 0.0
          %2094 = vmatpush1.msra.mxu0 %v2058
          %2095 = vmatprep.subr.mxu0 0.0
          %2096 = vmatpush1.msra.mxu0 %v2059
          %2097 = vmatprep.subr.mxu0 0.0
          %2098 = vmatpush1.msra.mxu0 %v2060
          %2099 = vmatprep.subr.mxu0 0.0
          %2100 = vmatpush1.msra.mxu0 %v2061
          %2101 = vmatprep.subr.mxu0 0.0
          %2102 = vmatpush1.msra.mxu0 0.0
          %2103 = vmatprep.subr.mxu0 0.0
          %2104 = vmatpush1.msra.mxu0 0.0
          %2105 = vmatprep.subr.mxu0 0.0
          %2106 = vmatpush1.msra.mxu0 0.0
          %2107 = vmatprep.subr.mxu0 0.0
          %2108 = vmatpush1.msra.mxu0 0.0
          %2109 = vmatprep.subr.mxu0 0.0
          %2110 = vmatpush1.msra.mxu0 0.0
          %2111 = vmatprep.subr.mxu0 0.0
          %2112 = vmatpush1.msra.mxu0 0.0
          %2113 = vmatprep.subr.mxu0 0.0
          %2114 = vmatpush1.msra.mxu0 0.0
          %2115 = vmatprep.subr.mxu0 0.0
          %2116 = vmatpush1.msra.mxu0 0.0
          %2117 = vmatprep.subr.mxu0 0.0
          %2118 = vmatpush1.msra.mxu0 0.0
          %2119 = vmatprep.subr.mxu0 0.0
          %2120 = vmatpush1.msra.mxu0 0.0
          %2121 = vmatprep.subr.mxu0 0.0
          %2122 = vmatpush1.msra.mxu0 0.0
          %2123 = vmatprep.subr.mxu0 0.0
          %2124 = vmatpush1.msra.mxu0 0.0
          %2125 = vmatprep.subr.mxu0 0.0
          %2126 = vmatpush1.msra.mxu0 0.0
          %2127 = vmatprep.subr.mxu0 0.0
          %2128 = vmatpush1.msra.mxu0 0.0
          %2129 = vmatprep.subr.mxu0 0.0
          %2130 = vmatpush1.msra.mxu0 0.0
          %2131 = vmatprep.subr.mxu0 0.0
          %2132 = vmatpush1.msra.mxu0 0.0
          %2133 = vmatprep.mubr.f32.mxu0 0.0
          %2134 = vmatmul.mubr.f32.gmra.mrb[0].mxu0 %v2045
          %v2135 = vpop.f32.mrb[0].mxu0
          %v2136 = vadd.f32 %v2067, %v2135
          %v2137 = vpop.f32.mrb[0].mxu0
          %2138 = vdwg.mxu0
          %v2139 = vld [vmem:[%s630] sm:$0xff]
          %v2140 = vadd.f32 %v2139, %v2136
          %2141 = vst [vmem:[%s604] sm:$0xff] %v2140
        $region96: #{schnet_interaction.3} parent=83 // pred_fallthru
          _
        %s2142 = sand.u32 %s431, 1
        %s2143 = scalar_lea.sflag [#allocation10], %s2142
        %s2144 = sand.u32 %s431, 1
        %s2145 = smul.addr %s2144, 8
        %s2146 = scalar_lea.vmem [#allocation9], %s2145
        // Predicated region
        $region97: #{schnet_interaction.3} parent=83 // pred_check
          %p2147 = pneg %p441
        $region98: #{schnet_interaction.3} parent=83 // pred_check_branch
          %2149 = sbr.rel (%p2147) target = $region100
        $region99: #{schnet_interaction.3} parent=83 // pred_region
          %s2150 = sld [smem:[#allocation4 + %s57]]
          %s2152 = ssub.s32 128, 128
          %2153 = vsyncadd %s2143, %s2152
          %s2154 = smul.addr %s2150, 128
          %s2155 = scalar_lea.hbm %s21, %s2154
          %s2157 = sshll.u32 %s2146, 4
          %s2158 = int_to_ptr.vmem [resolvable:$true] %s2157
          %2160 = dma.vmem_to_hbm [thread:$0]  %s2158, 128, %s2155, %s2143
        $region100: #{schnet_interaction.3} parent=83 // pred_fallthru
          _
      $region84: #{schnet_interaction.3} parent=5 // pred_fallthru
        _
      %p2161 = scmp.le.s32.totalorder 2, %s52
      // Predicated region
      $region101: #{schnet_interaction.3} parent=5 // pred_check
        %p2162 = pneg %p2161
      $region102: #{schnet_interaction.3} parent=5 // pred_check_branch
        %2164 = sbr.rel (%p2162) target = $region104
      $region103: #{schnet_interaction.3} parent=5 // pred_region
        %s2165 = ssub.s32 %s52, 2
        // Predicated region
        $region105: #{schnet_interaction.3} parent=103 // pred_check
          %p2166 = pneg %p447
        $region106: #{schnet_interaction.3} parent=103 // pred_check_branch
          %2168 = sbr.rel (%p2166) target = $region108
        $region107: #{schnet_interaction.3} parent=103 // pred_region
          %s2169 = sand.u32 %s432, 1
          %s2170 = scalar_lea.sflag [#allocation10], %s2169
          %s2171 = sand.u32 %s432, 1
          %s2172 = smul.addr %s2171, 8
          %s2173 = scalar_lea.vmem [#allocation9], %s2172
          %2174 = dma.done %s2170, 128
        $region108: #{schnet_interaction.3} parent=103 // pred_fallthru
          _
      $region104: #{schnet_interaction.3} parent=5 // pred_fallthru
        _
    $region6: #{schnet_interaction.3} parent=1 // loop_footer
      %s56 = sadd.s32 1, %s52
    $region7: #{schnet_interaction.3} parent=1 // loop_footer_branch
      %51 = sbr.rel target = $region3
    $region8: #{schnet_interaction.3} parent=1 // loop_exit
      _
    %2175 = vsyncpa [#allocation10], 1
    %s2176 = scalar_lea.sflag [#allocation10], 1
    %2177 = vsyncpa %s2176, 1

</llo_original>
